<compile_context>
chip_gen: v7x
topology: tpu7x:2x2x1
jax: 0.10.0
libtpu: 0.0.40
codegen_flags: <defaults>
</compile_context>

<pallas_src>
import jax
import jax.numpy as jnp
from jax.experimental import pallas as pl
from jax.experimental.pallas import tpu as pltpu


# ----------------------------- fused Pallas kernel --------------------------

def _fused_extractor_kernel(x_ref, w1_ref, b1_ref, w2_ref, b2_ref,
                            relu1_ref, pool2_ref,
                            pad1_ref, pad2_ref, pool1_ref):
    """conv1+bias+relu -> pool1 -> conv2+bias+relu -> pool2, all VMEM-resident.

    Inputs : x (N,H,W,C0) NHWC, w*_mat (9*Cin, Cout), b* (1, Cout).
    Outputs: relu1 (N,H,W,C1), pool2 (N,H/4,W/4,C2).
    Scratch: padded images for conv1/conv2 and the pool1 result.
    """

    def conv3x3_bias_relu(x, w_mat, b_row, pad_ref):
        # x: (n, h, w, cin) value; w_mat: (9*cin, cout); b_row: (1, cout).
        n, h, w, cin = x.shape
        cout = w_mat.shape[1]
        # In-kernel zero-padding of H and W by 1 into a VMEM scratch.
        pad_ref[...] = jnp.zeros(pad_ref.shape, pad_ref.dtype)
        pad_ref[:, 1:h + 1, 1:w + 1, :] = x
        xp = pad_ref[...]
        # In-kernel im2col: 9 shifted windows concatenated along the lane dim.
        patches = [xp[:, i:i + h, j:j + w, :]
                   for i in range(3) for j in range(3)]
        pm = jnp.concatenate(patches, axis=-1)            # (n, h, w, 9*cin)
        pm = pm.reshape(n * h * w, 9 * cin)               # rows = (n, h, w)
        # One MXU matmul with fused bias + ReLU epilogue (f32 accumulate).
        acc = jnp.dot(pm, w_mat, preferred_element_type=jnp.float32)
        acc = jnp.maximum(acc + b_row, 0.0)
        return acc.reshape(n, h, w, cout)

    def maxpool2x2_into(x, out_ref):
        # 2x2 / stride-2 max-pool of (n, h, w, c), written into out_ref.
        n, h, w, c = x.shape
        wo = w // 2
        xr = x.reshape(n, h // 2, 2, w, c)                # leading-dim split
        xh = jnp.maximum(xr[:, :, 0], xr[:, :, 1])        # pool along H
        for k in range(wo):                               # pool along W
            out_ref[:, :, k:k + 1, :] = jnp.maximum(
                xh[:, :, 2 * k:2 * k + 1, :], xh[:, :, 2 * k + 1:2 * k + 2, :])

    # conv1 -> relu1 (extracted) -> pool1 -> conv2 -> relu2 -> pool2 (extracted)
    r1 = conv3x3_bias_relu(x_ref[...], w1_ref[...], b1_ref[...], pad1_ref)
    relu1_ref[...] = r1.astype(relu1_ref.dtype)
    maxpool2x2_into(r1, pool1_ref)
    r2 = conv3x3_bias_relu(pool1_ref[...], w2_ref[...], b2_ref[...], pad2_ref)
    maxpool2x2_into(r2, pool2_ref)


def fused_feature_extract(x_nhwc, w1m, b1r, w2m, b2r):
    """Single pallas_call running the whole layer chain; returns (relu1, pool2).

    All tensors are tiny (<2 MiB total), so one full-array block is optimal.
    NOTE: if this is ever scaled to non-toy N*H*W, tile the row dimension with
    a grid and dimension_semantics=("parallel", ...) so v7x's two TensorCores
    are used and blocks stay under its 64 MiB VMEM.
    """
    N, H, W, C0 = x_nhwc.shape
    C1 = w1m.shape[1]
    C2 = w2m.shape[1]
    H1, W1 = H // 2, W // 2
    H2, W2 = H // 4, W // 4
    relu1_shape = (N, H, W, C1)
    pool2_shape = (N, H2, W2, C2)
    return pl.pallas_call(
        _fused_extractor_kernel,
        out_shape=(jax.ShapeDtypeStruct(relu1_shape, jnp.float32),
                   jax.ShapeDtypeStruct(pool2_shape, jnp.float32)),
        grid=(1,),
        in_specs=[
            pl.BlockSpec((N, H, W, C0), lambda i: (0, 0, 0, 0)),
            pl.BlockSpec(w1m.shape, lambda i: (0, 0)),
            pl.BlockSpec(b1r.shape, lambda i: (0, 0)),
            pl.BlockSpec(w2m.shape, lambda i: (0, 0)),
            pl.BlockSpec(b2r.shape, lambda i: (0, 0)),
        ],
        out_specs=(
            pl.BlockSpec(relu1_shape, lambda i: (0, 0, 0, 0)),
            pl.BlockSpec(pool2_shape, lambda i: (0, 0, 0, 0)),
        ),
        scratch_shapes=[
            pltpu.VMEM((N, H + 2, W + 2, C0), jnp.float32),    # padded conv1 in
            pltpu.VMEM((N, H1 + 2, W1 + 2, C1), jnp.float32),  # padded conv2 in
            pltpu.VMEM((N, H1, W1, C1), jnp.float32),          # pool1 result
        ],
        compiler_params=pltpu.CompilerParams(
            dimension_semantics=("arbitrary",)),
    )(x_nhwc, w1m, b1r, w2m, b2r)


# --------------------------- FeatureExtractor port --------------------------

class SubModel:
    """Parameter container for the concrete VGG-style submodel
    (stands in for the torch module exposing `.features`)."""

    def __init__(self, w1, b1, w2, b2):
        self.w1, self.b1, self.w2, self.b2 = w1, b1, w2, b2


class FeatureExtractor:
    """Pallas port of FeatureExtractor(submodel, extract_layers).

    The original walks submodel.features and collects intermediates by name;
    for this concrete submodel and extract_layers == ('relu1', 'pool2') the
    whole chain is fused into one Pallas kernel that produces exactly the
    extracted tensors.  The nested 'module' group consumes pool1's output and,
    being the last entry, the non-propagating-x detail of the original
    recursion is preserved trivially.
    """
    # TODO(synk): the generic getfeature() recursion over arbitrary
    # (name, layer) lists is Python control flow with no Pallas equivalent;
    # only this concrete instantiation is fused.

    def __init__(self, submodel, extract_layers=('relu1', 'pool2')):
        assert tuple(extract_layers) == ('relu1', 'pool2')
        self.submodel = submodel
        self.extract_layers = tuple(extract_layers)
        self._forward = jax.jit(self._forward_impl)

    def _forward_impl(self, x_nchw):
        sm = self.submodel
        x_nhwc = jnp.transpose(x_nchw, (0, 2, 3, 1))
        # OIHW -> (KH*KW*Cin, Cout), matching the in-kernel (i, j, ci) ordering.
        w1m = jnp.transpose(sm.w1, (2, 3, 1, 0)).reshape(-1, sm.w1.shape[0])
        w2m = jnp.transpose(sm.w2, (2, 3, 1, 0)).reshape(-1, sm.w2.shape[0])
        relu1, pool2 = fused_feature_extract(
            x_nhwc, w1m, sm.b1.reshape(1, -1), w2m, sm.b2.reshape(1, -1))
        # Back to PyTorch NCHW.
        return (jnp.transpose(relu1, (0, 3, 1, 2)),
                jnp.transpose(pool2, (0, 3, 1, 2)))

    def forward(self, x_nchw):
        return list(self._forward(x_nchw))


# ----------------------------- pure-JAX reference ----------------------------

def _reference_forward(x_nhwc, w1, b1, w2, b2):
    def conv(x, w, b):
        y = jax.lax.conv_general_dilated(
            x, jnp.transpose(w, (2, 3, 1, 0)),  # OIHW -> HWIO
            window_strides=(1, 1), padding="SAME",
            dimension_numbers=("NHWC", "HWIO", "NHWC"))
        return y + b

    def pool(x):
        return jax.lax.reduce_window(x, -jnp.inf, jax.lax.max,
                                     (1, 2, 2, 1), (1, 2, 2, 1), "VALID")

    r1 = jax.nn.relu(conv(x_nhwc, w1, b1))
    p1 = pool(r1)
    r2 = jax.nn.relu(conv(p1, w2, b2))
    p2 = pool(r2)
    return r1, p2


# ----------------------------------- main ------------------------------------

if __name__ == "__main__":
    key = jax.random.PRNGKey(0)
    k_x, k_w1, k_b1, k_w2, k_b2 = jax.random.split(key, 5)

    w1 = 0.1 * jax.random.normal(k_w1, (8, 4, 3, 3), dtype=jnp.float32)
    b1 = 0.1 * jax.random.normal(k_b1, (8,), dtype=jnp.float32)
    w2 = 0.1 * jax.random.normal(k_w2, (16, 8, 3, 3), dtype=jnp.float32)
    b2 = 0.1 * jax.random.normal(k_b2, (16,), dtype=jnp.float32)

    # PyTorch-convention NCHW input.
    x_nchw = jax.random.normal(k_x, (2, 4, 16, 16), dtype=jnp.float32)

    extractor = FeatureExtractor(SubModel(w1, b1, w2, b2),
                                 extract_layers=('relu1', 'pool2'))
    feats = extractor.forward(x_nchw)
    for f in feats:
        jax.block_until_ready(f)

    # Expected shapes: relu1 -> (2, 8, 16, 16), pool2 -> (2, 16, 4, 4)
    assert feats[0].shape == (2, 8, 16, 16)
    assert feats[1].shape == (2, 16, 4, 4)

    # Numerical check against a pure-JAX/XLA reference (loose tolerance: MXU
    # f32 matmuls at default precision vs. XLA's conv accumulation order).
    x_nhwc = jnp.transpose(x_nchw, (0, 2, 3, 1))
    r1_ref, p2_ref = _reference_forward(x_nhwc, w1, b1, w2, b2)
    r1_ref = jnp.transpose(r1_ref, (0, 3, 1, 2))
    p2_ref = jnp.transpose(p2_ref, (0, 3, 1, 2))
    assert float(jnp.max(jnp.abs(feats[0] - r1_ref))) < 5e-2
    assert float(jnp.max(jnp.abs(feats[1] - p2_ref))) < 5e-2

    print("KERNEL_OK")
</pallas_src>

<mosaic_0001>
module attributes {stable_mosaic.version = 11 : i64} {
  func.func @_fused_extractor_kernel(%arg0: i32, %arg1: memref<2x16x16x4xf32, #tpu.memory_space<vmem>>, %arg2: memref<36x8xf32, #tpu.memory_space<vmem>>, %arg3: memref<1x8xf32, #tpu.memory_space<vmem>>, %arg4: memref<72x16xf32, #tpu.memory_space<vmem>>, %arg5: memref<1x16xf32, #tpu.memory_space<vmem>>, %arg6: memref<2x16x16x8xf32, #tpu.memory_space<vmem>>, %arg7: memref<2x4x4x16xf32, #tpu.memory_space<vmem>>, %arg8: memref<2x18x18x4xf32, #tpu.memory_space<vmem>>, %arg9: memref<2x10x10x8xf32, #tpu.memory_space<vmem>>, %arg10: memref<2x8x8x8xf32, #tpu.memory_space<vmem>>) attributes {dimension_semantics = [#tpu.dimension_semantics<arbitrary>], iteration_bounds = array<i64: 1>, scalar_prefetch = 0 : i64, scratch_operands = 3 : i64, tpu.core_type = #tpu.core_type<tc>, window_params = [{pipeline_mode = #tpu.pipeline_mode<synchronous>, transform_indices = @transform_0, window_bounds = array<i64: 2, 16, 16, 4>}, {pipeline_mode = #tpu.pipeline_mode<synchronous>, transform_indices = @transform_1, window_bounds = array<i64: 36, 8>}, {pipeline_mode = #tpu.pipeline_mode<synchronous>, transform_indices = @transform_2, window_bounds = array<i64: 1, 8>}, {pipeline_mode = #tpu.pipeline_mode<synchronous>, transform_indices = @transform_3, window_bounds = array<i64: 72, 16>}, {pipeline_mode = #tpu.pipeline_mode<synchronous>, transform_indices = @transform_4, window_bounds = array<i64: 1, 16>}, {pipeline_mode = #tpu.pipeline_mode<synchronous>, transform_indices = @transform_5, window_bounds = array<i64: 2, 16, 16, 8>}, {pipeline_mode = #tpu.pipeline_mode<synchronous>, transform_indices = @transform_6, window_bounds = array<i64: 2, 4, 4, 16>}]} {
    %c0 = arith.constant 0 : index
    %c0_0 = arith.constant 0 : index
    %c0_1 = arith.constant 0 : index
    %c0_2 = arith.constant 0 : index
    %0 = vector.load %arg1[%c0, %c0_0, %c0_1, %c0_2] : memref<2x16x16x4xf32, #tpu.memory_space<vmem>>, vector<2x16x16x4xf32>
    %c0_3 = arith.constant 0 : index
    %c0_4 = arith.constant 0 : index
    %1 = vector.load %arg2[%c0_3, %c0_4] : memref<36x8xf32, #tpu.memory_space<vmem>>, vector<36x8xf32>
    %c0_5 = arith.constant 0 : index
    %c0_6 = arith.constant 0 : index
    %2 = vector.load %arg3[%c0_5, %c0_6] : memref<1x8xf32, #tpu.memory_space<vmem>>, vector<1x8xf32>
    %cst = arith.constant 0.000000e+00 : f32
    %3 = vector.broadcast %cst : f32 to vector<2x18x18x4xf32>
    %c0_7 = arith.constant 0 : index
    %c0_8 = arith.constant 0 : index
    %c0_9 = arith.constant 0 : index
    %c0_10 = arith.constant 0 : index
    %4 = vector.load %arg8[%c0_7, %c0_8, %c0_9, %c0_10] : memref<2x18x18x4xf32, #tpu.memory_space<vmem>>, vector<2x18x18x4xf32>
    tpu.vector_store %arg8[%c0_7, %c0_8, %c0_9, %c0_10], %3 {strides = array<i32>} : memref<2x18x18x4xf32, #tpu.memory_space<vmem>>, vector<2x18x18x4xf32>,
    %c0_11 = arith.constant 0 : index
    %c1 = arith.constant 1 : index
    %c1_12 = arith.constant 1 : index
    %c0_13 = arith.constant 0 : index
    %5 = vector.load %arg8[%c0_11, %c1, %c1_12, %c0_13] : memref<2x18x18x4xf32, #tpu.memory_space<vmem>>, vector<2x16x16x4xf32>
    tpu.vector_store %arg8[%c0_11, %c1, %c1_12, %c0_13], %0 {strides = array<i32>} : memref<2x18x18x4xf32, #tpu.memory_space<vmem>>, vector<2x16x16x4xf32>,
    %c0_14 = arith.constant 0 : index
    %c0_15 = arith.constant 0 : index
    %c0_16 = arith.constant 0 : index
    %c0_17 = arith.constant 0 : index
    %6 = vector.load %arg8[%c0_14, %c0_15, %c0_16, %c0_17] : memref<2x18x18x4xf32, #tpu.memory_space<vmem>>, vector<2x18x18x4xf32>
    %7 = vector.extract_strided_slice %6 {offsets = [0, 0, 0, 0], sizes = [2, 16, 16, 4], strides = [1, 1, 1, 1]} : vector<2x18x18x4xf32> to vector<2x16x16x4xf32>
    %8 = vector.extract_strided_slice %6 {offsets = [0, 0, 1, 0], sizes = [2, 16, 16, 4], strides = [1, 1, 1, 1]} : vector<2x18x18x4xf32> to vector<2x16x16x4xf32>
    %9 = vector.extract_strided_slice %6 {offsets = [0, 0, 2, 0], sizes = [2, 16, 16, 4], strides = [1, 1, 1, 1]} : vector<2x18x18x4xf32> to vector<2x16x16x4xf32>
    %10 = vector.extract_strided_slice %6 {offsets = [0, 1, 0, 0], sizes = [2, 16, 16, 4], strides = [1, 1, 1, 1]} : vector<2x18x18x4xf32> to vector<2x16x16x4xf32>
    %11 = vector.extract_strided_slice %6 {offsets = [0, 1, 1, 0], sizes = [2, 16, 16, 4], strides = [1, 1, 1, 1]} : vector<2x18x18x4xf32> to vector<2x16x16x4xf32>
    %12 = vector.extract_strided_slice %6 {offsets = [0, 1, 2, 0], sizes = [2, 16, 16, 4], strides = [1, 1, 1, 1]} : vector<2x18x18x4xf32> to vector<2x16x16x4xf32>
    %13 = vector.extract_strided_slice %6 {offsets = [0, 2, 0, 0], sizes = [2, 16, 16, 4], strides = [1, 1, 1, 1]} : vector<2x18x18x4xf32> to vector<2x16x16x4xf32>
    %14 = vector.extract_strided_slice %6 {offsets = [0, 2, 1, 0], sizes = [2, 16, 16, 4], strides = [1, 1, 1, 1]} : vector<2x18x18x4xf32> to vector<2x16x16x4xf32>
    %15 = vector.extract_strided_slice %6 {offsets = [0, 2, 2, 0], sizes = [2, 16, 16, 4], strides = [1, 1, 1, 1]} : vector<2x18x18x4xf32> to vector<2x16x16x4xf32>
    %16 = tpu.concatenate %7, %8, %9, %10, %11, %12, %13, %14, %15 in 3 : vector<2x16x16x4xf32>, vector<2x16x16x4xf32>, vector<2x16x16x4xf32>, vector<2x16x16x4xf32>, vector<2x16x16x4xf32>, vector<2x16x16x4xf32>, vector<2x16x16x4xf32>, vector<2x16x16x4xf32>, vector<2x16x16x4xf32> -> vector<2x16x16x36xf32>
    %17 = vector.shape_cast %16 : vector<2x16x16x36xf32> to vector<512x36xf32>
    %cst_18 = arith.constant dense<0.000000e+00> : vector<512x8xf32>
    %18 = tpu.matmul %17, %1, %cst_18 {dimension_numbers = #tpu.dot_dimension_numbers<[1], [0], [0], [1], [0, 0, 1, 1], [], []>} : vector<512x36xf32>, vector<36x8xf32>, vector<512x8xf32> -> vector<512x8xf32>
    %19 = vector.broadcast %2 : vector<1x8xf32> to vector<512x8xf32>
    %20 = arith.addf %18, %19 : vector<512x8xf32>
    %cst_19 = arith.constant 0.000000e+00 : f32
    %21 = vector.broadcast %cst_19 : f32 to vector<512x8xf32>
    %22 = arith.maximumf %20, %21 : vector<512x8xf32>
    %23 = vector.shape_cast %22 : vector<512x8xf32> to vector<2x16x16x8xf32>
    %c0_20 = arith.constant 0 : index
    %c0_21 = arith.constant 0 : index
    %c0_22 = arith.constant 0 : index
    %c0_23 = arith.constant 0 : index
    %24 = vector.load %arg6[%c0_20, %c0_21, %c0_22, %c0_23] : memref<2x16x16x8xf32, #tpu.memory_space<vmem>>, vector<2x16x16x8xf32>
    tpu.vector_store %arg6[%c0_20, %c0_21, %c0_22, %c0_23], %23 {strides = array<i32>} : memref<2x16x16x8xf32, #tpu.memory_space<vmem>>, vector<2x16x16x8xf32>,
    %25 = vector.shape_cast %23 : vector<2x16x16x8xf32> to vector<2x8x2x16x8xf32>
    %26 = vector.extract_strided_slice %25 {offsets = [0, 0, 0, 0, 0], sizes = [2, 8, 1, 16, 8], strides = [1, 1, 1, 1, 1]} : vector<2x8x2x16x8xf32> to vector<2x8x1x16x8xf32>
    %27 = vector.shape_cast %26 : vector<2x8x1x16x8xf32> to vector<2x8x16x8xf32>
    %28 = vector.extract_strided_slice %25 {offsets = [0, 0, 1, 0, 0], sizes = [2, 8, 1, 16, 8], strides = [1, 1, 1, 1, 1]} : vector<2x8x2x16x8xf32> to vector<2x8x1x16x8xf32>
    %29 = vector.shape_cast %28 : vector<2x8x1x16x8xf32> to vector<2x8x16x8xf32>
    %30 = arith.maximumf %27, %29 : vector<2x8x16x8xf32>
    %31 = vector.extract_strided_slice %30 {offsets = [0, 0, 0, 0], sizes = [2, 8, 1, 8], strides = [1, 1, 1, 1]} : vector<2x8x16x8xf32> to vector<2x8x1x8xf32>
    %32 = vector.extract_strided_slice %30 {offsets = [0, 0, 1, 0], sizes = [2, 8, 1, 8], strides = [1, 1, 1, 1]} : vector<2x8x16x8xf32> to vector<2x8x1x8xf32>
    %33 = arith.maximumf %31, %32 : vector<2x8x1x8xf32>
    %c0_24 = arith.constant 0 : index
    %c0_25 = arith.constant 0 : index
    %c0_26 = arith.constant 0 : index
    %c0_27 = arith.constant 0 : index
    %34 = vector.load %arg10[%c0_24, %c0_25, %c0_26, %c0_27] : memref<2x8x8x8xf32, #tpu.memory_space<vmem>>, vector<2x8x1x8xf32>
    tpu.vector_store %arg10[%c0_24, %c0_25, %c0_26, %c0_27], %33 {strides = array<i32>} : memref<2x8x8x8xf32, #tpu.memory_space<vmem>>, vector<2x8x1x8xf32>,
    %35 = vector.extract_strided_slice %30 {offsets = [0, 0, 2, 0], sizes = [2, 8, 1, 8], strides = [1, 1, 1, 1]} : vector<2x8x16x8xf32> to vector<2x8x1x8xf32>
    %36 = vector.extract_strided_slice %30 {offsets = [0, 0, 3, 0], sizes = [2, 8, 1, 8], strides = [1, 1, 1, 1]} : vector<2x8x16x8xf32> to vector<2x8x1x8xf32>
    %37 = arith.maximumf %35, %36 : vector<2x8x1x8xf32>
    %c0_28 = arith.constant 0 : index
    %c0_29 = arith.constant 0 : index
    %c1_30 = arith.constant 1 : index
    %c0_31 = arith.constant 0 : index
    %38 = vector.load %arg10[%c0_28, %c0_29, %c1_30, %c0_31] : memref<2x8x8x8xf32, #tpu.memory_space<vmem>>, vector<2x8x1x8xf32>
    tpu.vector_store %arg10[%c0_28, %c0_29, %c1_30, %c0_31], %37 {strides = array<i32>} : memref<2x8x8x8xf32, #tpu.memory_space<vmem>>, vector<2x8x1x8xf32>,
    %39 = vector.extract_strided_slice %30 {offsets = [0, 0, 4, 0], sizes = [2, 8, 1, 8], strides = [1, 1, 1, 1]} : vector<2x8x16x8xf32> to vector<2x8x1x8xf32>
    %40 = vector.extract_strided_slice %30 {offsets = [0, 0, 5, 0], sizes = [2, 8, 1, 8], strides = [1, 1, 1, 1]} : vector<2x8x16x8xf32> to vector<2x8x1x8xf32>
    %41 = arith.maximumf %39, %40 : vector<2x8x1x8xf32>
    %c0_32 = arith.constant 0 : index
    %c0_33 = arith.constant 0 : index
    %c2 = arith.constant 2 : index
    %c0_34 = arith.constant 0 : index
    %42 = vector.load %arg10[%c0_32, %c0_33, %c2, %c0_34] : memref<2x8x8x8xf32, #tpu.memory_space<vmem>>, vector<2x8x1x8xf32>
    tpu.vector_store %arg10[%c0_32, %c0_33, %c2, %c0_34], %41 {strides = array<i32>} : memref<2x8x8x8xf32, #tpu.memory_space<vmem>>, vector<2x8x1x8xf32>,
    %43 = vector.extract_strided_slice %30 {offsets = [0, 0, 6, 0], sizes = [2, 8, 1, 8], strides = [1, 1, 1, 1]} : vector<2x8x16x8xf32> to vector<2x8x1x8xf32>
    %44 = vector.extract_strided_slice %30 {offsets = [0, 0, 7, 0], sizes = [2, 8, 1, 8], strides = [1, 1, 1, 1]} : vector<2x8x16x8xf32> to vector<2x8x1x8xf32>
    %45 = arith.maximumf %43, %44 : vector<2x8x1x8xf32>
    %c0_35 = arith.constant 0 : index
    %c0_36 = arith.constant 0 : index
    %c3 = arith.constant 3 : index
    %c0_37 = arith.constant 0 : index
    %46 = vector.load %arg10[%c0_35, %c0_36, %c3, %c0_37] : memref<2x8x8x8xf32, #tpu.memory_space<vmem>>, vector<2x8x1x8xf32>
    tpu.vector_store %arg10[%c0_35, %c0_36, %c3, %c0_37], %45 {strides = array<i32>} : memref<2x8x8x8xf32, #tpu.memory_space<vmem>>, vector<2x8x1x8xf32>,
    %47 = vector.extract_strided_slice %30 {offsets = [0, 0, 8, 0], sizes = [2, 8, 1, 8], strides = [1, 1, 1, 1]} : vector<2x8x16x8xf32> to vector<2x8x1x8xf32>
    %48 = vector.extract_strided_slice %30 {offsets = [0, 0, 9, 0], sizes = [2, 8, 1, 8], strides = [1, 1, 1, 1]} : vector<2x8x16x8xf32> to vector<2x8x1x8xf32>
    %49 = arith.maximumf %47, %48 : vector<2x8x1x8xf32>
    %c0_38 = arith.constant 0 : index
    %c0_39 = arith.constant 0 : index
    %c4 = arith.constant 4 : index
    %c0_40 = arith.constant 0 : index
    %50 = vector.load %arg10[%c0_38, %c0_39, %c4, %c0_40] : memref<2x8x8x8xf32, #tpu.memory_space<vmem>>, vector<2x8x1x8xf32>
    tpu.vector_store %arg10[%c0_38, %c0_39, %c4, %c0_40], %49 {strides = array<i32>} : memref<2x8x8x8xf32, #tpu.memory_space<vmem>>, vector<2x8x1x8xf32>,
    %51 = vector.extract_strided_slice %30 {offsets = [0, 0, 10, 0], sizes = [2, 8, 1, 8], strides = [1, 1, 1, 1]} : vector<2x8x16x8xf32> to vector<2x8x1x8xf32>
    %52 = vector.extract_strided_slice %30 {offsets = [0, 0, 11, 0], sizes = [2, 8, 1, 8], strides = [1, 1, 1, 1]} : vector<2x8x16x8xf32> to vector<2x8x1x8xf32>
    %53 = arith.maximumf %51, %52 : vector<2x8x1x8xf32>
    %c0_41 = arith.constant 0 : index
    %c0_42 = arith.constant 0 : index
    %c5 = arith.constant 5 : index
    %c0_43 = arith.constant 0 : index
    %54 = vector.load %arg10[%c0_41, %c0_42, %c5, %c0_43] : memref<2x8x8x8xf32, #tpu.memory_space<vmem>>, vector<2x8x1x8xf32>
    tpu.vector_store %arg10[%c0_41, %c0_42, %c5, %c0_43], %53 {strides = array<i32>} : memref<2x8x8x8xf32, #tpu.memory_space<vmem>>, vector<2x8x1x8xf32>,
    %55 = vector.extract_strided_slice %30 {offsets = [0, 0, 12, 0], sizes = [2, 8, 1, 8], strides = [1, 1, 1, 1]} : vector<2x8x16x8xf32> to vector<2x8x1x8xf32>
    %56 = vector.extract_strided_slice %30 {offsets = [0, 0, 13, 0], sizes = [2, 8, 1, 8], strides = [1, 1, 1, 1]} : vector<2x8x16x8xf32> to vector<2x8x1x8xf32>
    %57 = arith.maximumf %55, %56 : vector<2x8x1x8xf32>
    %c0_44 = arith.constant 0 : index
    %c0_45 = arith.constant 0 : index
    %c6 = arith.constant 6 : index
    %c0_46 = arith.constant 0 : index
    %58 = vector.load %arg10[%c0_44, %c0_45, %c6, %c0_46] : memref<2x8x8x8xf32, #tpu.memory_space<vmem>>, vector<2x8x1x8xf32>
    tpu.vector_store %arg10[%c0_44, %c0_45, %c6, %c0_46], %57 {strides = array<i32>} : memref<2x8x8x8xf32, #tpu.memory_space<vmem>>, vector<2x8x1x8xf32>,
    %59 = vector.extract_strided_slice %30 {offsets = [0, 0, 14, 0], sizes = [2, 8, 1, 8], strides = [1, 1, 1, 1]} : vector<2x8x16x8xf32> to vector<2x8x1x8xf32>
    %60 = vector.extract_strided_slice %30 {offsets = [0, 0, 15, 0], sizes = [2, 8, 1, 8], strides = [1, 1, 1, 1]} : vector<2x8x16x8xf32> to vector<2x8x1x8xf32>
    %61 = arith.maximumf %59, %60 : vector<2x8x1x8xf32>
    %c0_47 = arith.constant 0 : index
    %c0_48 = arith.constant 0 : index
    %c7 = arith.constant 7 : index
    %c0_49 = arith.constant 0 : index
    %62 = vector.load %arg10[%c0_47, %c0_48, %c7, %c0_49] : memref<2x8x8x8xf32, #tpu.memory_space<vmem>>, vector<2x8x1x8xf32>
    tpu.vector_store %arg10[%c0_47, %c0_48, %c7, %c0_49], %61 {strides = array<i32>} : memref<2x8x8x8xf32, #tpu.memory_space<vmem>>, vector<2x8x1x8xf32>,
    %c0_50 = arith.constant 0 : index
    %c0_51 = arith.constant 0 : index
    %c0_52 = arith.constant 0 : index
    %c0_53 = arith.constant 0 : index
    %63 = vector.load %arg10[%c0_50, %c0_51, %c0_52, %c0_53] : memref<2x8x8x8xf32, #tpu.memory_space<vmem>>, vector<2x8x8x8xf32>
    %c0_54 = arith.constant 0 : index
    %c0_55 = arith.constant 0 : index
    %64 = vector.load %arg4[%c0_54, %c0_55] : memref<72x16xf32, #tpu.memory_space<vmem>>, vector<72x16xf32>
    %c0_56 = arith.constant 0 : index
    %c0_57 = arith.constant 0 : index
    %65 = vector.load %arg5[%c0_56, %c0_57] : memref<1x16xf32, #tpu.memory_space<vmem>>, vector<1x16xf32>
    %cst_58 = arith.constant 0.000000e+00 : f32
    %66 = vector.broadcast %cst_58 : f32 to vector<2x10x10x8xf32>
    %c0_59 = arith.constant 0 : index
    %c0_60 = arith.constant 0 : index
    %c0_61 = arith.constant 0 : index
    %c0_62 = arith.constant 0 : index
    %67 = vector.load %arg9[%c0_59, %c0_60, %c0_61, %c0_62] : memref<2x10x10x8xf32, #tpu.memory_space<vmem>>, vector<2x10x10x8xf32>
    tpu.vector_store %arg9[%c0_59, %c0_60, %c0_61, %c0_62], %66 {strides = array<i32>} : memref<2x10x10x8xf32, #tpu.memory_space<vmem>>, vector<2x10x10x8xf32>,
    %c0_63 = arith.constant 0 : index
    %c1_64 = arith.constant 1 : index
    %c1_65 = arith.constant 1 : index
    %c0_66 = arith.constant 0 : index
    %68 = vector.load %arg9[%c0_63, %c1_64, %c1_65, %c0_66] : memref<2x10x10x8xf32, #tpu.memory_space<vmem>>, vector<2x8x8x8xf32>
    tpu.vector_store %arg9[%c0_63, %c1_64, %c1_65, %c0_66], %63 {strides = array<i32>} : memref<2x10x10x8xf32, #tpu.memory_space<vmem>>, vector<2x8x8x8xf32>,
    %c0_67 = arith.constant 0 : index
    %c0_68 = arith.constant 0 : index
    %c0_69 = arith.constant 0 : index
    %c0_70 = arith.constant 0 : index
    %69 = vector.load %arg9[%c0_67, %c0_68, %c0_69, %c0_70] : memref<2x10x10x8xf32, #tpu.memory_space<vmem>>, vector<2x10x10x8xf32>
    %70 = vector.extract_strided_slice %69 {offsets = [0, 0, 0, 0], sizes = [2, 8, 8, 8], strides = [1, 1, 1, 1]} : vector<2x10x10x8xf32> to vector<2x8x8x8xf32>
    %71 = vector.extract_strided_slice %69 {offsets = [0, 0, 1, 0], sizes = [2, 8, 8, 8], strides = [1, 1, 1, 1]} : vector<2x10x10x8xf32> to vector<2x8x8x8xf32>
    %72 = vector.extract_strided_slice %69 {offsets = [0, 0, 2, 0], sizes = [2, 8, 8, 8], strides = [1, 1, 1, 1]} : vector<2x10x10x8xf32> to vector<2x8x8x8xf32>
    %73 = vector.extract_strided_slice %69 {offsets = [0, 1, 0, 0], sizes = [2, 8, 8, 8], strides = [1, 1, 1, 1]} : vector<2x10x10x8xf32> to vector<2x8x8x8xf32>
    %74 = vector.extract_strided_slice %69 {offsets = [0, 1, 1, 0], sizes = [2, 8, 8, 8], strides = [1, 1, 1, 1]} : vector<2x10x10x8xf32> to vector<2x8x8x8xf32>
    %75 = vector.extract_strided_slice %69 {offsets = [0, 1, 2, 0], sizes = [2, 8, 8, 8], strides = [1, 1, 1, 1]} : vector<2x10x10x8xf32> to vector<2x8x8x8xf32>
    %76 = vector.extract_strided_slice %69 {offsets = [0, 2, 0, 0], sizes = [2, 8, 8, 8], strides = [1, 1, 1, 1]} : vector<2x10x10x8xf32> to vector<2x8x8x8xf32>
    %77 = vector.extract_strided_slice %69 {offsets = [0, 2, 1, 0], sizes = [2, 8, 8, 8], strides = [1, 1, 1, 1]} : vector<2x10x10x8xf32> to vector<2x8x8x8xf32>
    %78 = vector.extract_strided_slice %69 {offsets = [0, 2, 2, 0], sizes = [2, 8, 8, 8], strides = [1, 1, 1, 1]} : vector<2x10x10x8xf32> to vector<2x8x8x8xf32>
    %79 = tpu.concatenate %70, %71, %72, %73, %74, %75, %76, %77, %78 in 3 : vector<2x8x8x8xf32>, vector<2x8x8x8xf32>, vector<2x8x8x8xf32>, vector<2x8x8x8xf32>, vector<2x8x8x8xf32>, vector<2x8x8x8xf32>, vector<2x8x8x8xf32>, vector<2x8x8x8xf32>, vector<2x8x8x8xf32> -> vector<2x8x8x72xf32>
    %80 = vector.shape_cast %79 : vector<2x8x8x72xf32> to vector<128x72xf32>
    %cst_71 = arith.constant dense<0.000000e+00> : vector<128x16xf32>
    %81 = tpu.matmul %80, %64, %cst_71 {dimension_numbers = #tpu.dot_dimension_numbers<[1], [0], [0], [1], [0, 0, 1, 1], [], []>} : vector<128x72xf32>, vector<72x16xf32>, vector<128x16xf32> -> vector<128x16xf32>
    %82 = vector.broadcast %65 : vector<1x16xf32> to vector<128x16xf32>
    %83 = arith.addf %81, %82 : vector<128x16xf32>
    %cst_72 = arith.constant 0.000000e+00 : f32
    %84 = vector.broadcast %cst_72 : f32 to vector<128x16xf32>
    %85 = arith.maximumf %83, %84 : vector<128x16xf32>
    %86 = vector.shape_cast %85 : vector<128x16xf32> to vector<2x8x8x16xf32>
    %87 = vector.shape_cast %86 : vector<2x8x8x16xf32> to vector<2x4x2x8x16xf32>
    %88 = vector.extract_strided_slice %87 {offsets = [0, 0, 0, 0, 0], sizes = [2, 4, 1, 8, 16], strides = [1, 1, 1, 1, 1]} : vector<2x4x2x8x16xf32> to vector<2x4x1x8x16xf32>
    %89 = vector.shape_cast %88 : vector<2x4x1x8x16xf32> to vector<2x4x8x16xf32>
    %90 = vector.extract_strided_slice %87 {offsets = [0, 0, 1, 0, 0], sizes = [2, 4, 1, 8, 16], strides = [1, 1, 1, 1, 1]} : vector<2x4x2x8x16xf32> to vector<2x4x1x8x16xf32>
    %91 = vector.shape_cast %90 : vector<2x4x1x8x16xf32> to vector<2x4x8x16xf32>
    %92 = arith.maximumf %89, %91 : vector<2x4x8x16xf32>
    %93 = vector.extract_strided_slice %92 {offsets = [0, 0, 0, 0], sizes = [2, 4, 1, 16], strides = [1, 1, 1, 1]} : vector<2x4x8x16xf32> to vector<2x4x1x16xf32>
    %94 = vector.extract_strided_slice %92 {offsets = [0, 0, 1, 0], sizes = [2, 4, 1, 16], strides = [1, 1, 1, 1]} : vector<2x4x8x16xf32> to vector<2x4x1x16xf32>
    %95 = arith.maximumf %93, %94 : vector<2x4x1x16xf32>
    %c0_73 = arith.constant 0 : index
    %c0_74 = arith.constant 0 : index
    %c0_75 = arith.constant 0 : index
    %c0_76 = arith.constant 0 : index
    %96 = vector.load %arg7[%c0_73, %c0_74, %c0_75, %c0_76] : memref<2x4x4x16xf32, #tpu.memory_space<vmem>>, vector<2x4x1x16xf32>
    tpu.vector_store %arg7[%c0_73, %c0_74, %c0_75, %c0_76], %95 {strides = array<i32>} : memref<2x4x4x16xf32, #tpu.memory_space<vmem>>, vector<2x4x1x16xf32>,
    %97 = vector.extract_strided_slice %92 {offsets = [0, 0, 2, 0], sizes = [2, 4, 1, 16], strides = [1, 1, 1, 1]} : vector<2x4x8x16xf32> to vector<2x4x1x16xf32>
    %98 = vector.extract_strided_slice %92 {offsets = [0, 0, 3, 0], sizes = [2, 4, 1, 16], strides = [1, 1, 1, 1]} : vector<2x4x8x16xf32> to vector<2x4x1x16xf32>
    %99 = arith.maximumf %97, %98 : vector<2x4x1x16xf32>
    %c0_77 = arith.constant 0 : index
    %c0_78 = arith.constant 0 : index
    %c1_79 = arith.constant 1 : index
    %c0_80 = arith.constant 0 : index
    %100 = vector.load %arg7[%c0_77, %c0_78, %c1_79, %c0_80] : memref<2x4x4x16xf32, #tpu.memory_space<vmem>>, vector<2x4x1x16xf32>
    tpu.vector_store %arg7[%c0_77, %c0_78, %c1_79, %c0_80], %99 {strides = array<i32>} : memref<2x4x4x16xf32, #tpu.memory_space<vmem>>, vector<2x4x1x16xf32>,
    %101 = vector.extract_strided_slice %92 {offsets = [0, 0, 4, 0], sizes = [2, 4, 1, 16], strides = [1, 1, 1, 1]} : vector<2x4x8x16xf32> to vector<2x4x1x16xf32>
    %102 = vector.extract_strided_slice %92 {offsets = [0, 0, 5, 0], sizes = [2, 4, 1, 16], strides = [1, 1, 1, 1]} : vector<2x4x8x16xf32> to vector<2x4x1x16xf32>
    %103 = arith.maximumf %101, %102 : vector<2x4x1x16xf32>
    %c0_81 = arith.constant 0 : index
    %c0_82 = arith.constant 0 : index
    %c2_83 = arith.constant 2 : index
    %c0_84 = arith.constant 0 : index
    %104 = vector.load %arg7[%c0_81, %c0_82, %c2_83, %c0_84] : memref<2x4x4x16xf32, #tpu.memory_space<vmem>>, vector<2x4x1x16xf32>
    tpu.vector_store %arg7[%c0_81, %c0_82, %c2_83, %c0_84], %103 {strides = array<i32>} : memref<2x4x4x16xf32, #tpu.memory_space<vmem>>, vector<2x4x1x16xf32>,
    %105 = vector.extract_strided_slice %92 {offsets = [0, 0, 6, 0], sizes = [2, 4, 1, 16], strides = [1, 1, 1, 1]} : vector<2x4x8x16xf32> to vector<2x4x1x16xf32>
    %106 = vector.extract_strided_slice %92 {offsets = [0, 0, 7, 0], sizes = [2, 4, 1, 16], strides = [1, 1, 1, 1]} : vector<2x4x8x16xf32> to vector<2x4x1x16xf32>
    %107 = arith.maximumf %105, %106 : vector<2x4x1x16xf32>
    %c0_85 = arith.constant 0 : index
    %c0_86 = arith.constant 0 : index
    %c3_87 = arith.constant 3 : index
    %c0_88 = arith.constant 0 : index
    %108 = vector.load %arg7[%c0_85, %c0_86, %c3_87, %c0_88] : memref<2x4x4x16xf32, #tpu.memory_space<vmem>>, vector<2x4x1x16xf32>
    tpu.vector_store %arg7[%c0_85, %c0_86, %c3_87, %c0_88], %107 {strides = array<i32>} : memref<2x4x4x16xf32, #tpu.memory_space<vmem>>, vector<2x4x1x16xf32>,
    return
  }
  func.func @transform_0(%arg0: i32) -> (i32, i32, i32, i32) {
    %c0_i32 = arith.constant 0 : i32
    %c0_i32_0 = arith.constant 0 : i32
    %c0_i32_1 = arith.constant 0 : i32
    %c0_i32_2 = arith.constant 0 : i32
    %c0_i32_3 = arith.constant 0 : i32
    return %c0_i32, %c0_i32_0, %c0_i32_1, %c0_i32_2 : i32, i32, i32, i32
  }
  func.func @transform_1(%arg0: i32) -> (i32, i32) {
    %c0_i32 = arith.constant 0 : i32
    %c0_i32_0 = arith.constant 0 : i32
    %c0_i32_1 = arith.constant 0 : i32
    return %c0_i32, %c0_i32_0 : i32, i32
  }
  func.func @transform_2(%arg0: i32) -> (i32, i32) {
    %c0_i32 = arith.constant 0 : i32
    %c0_i32_0 = arith.constant 0 : i32
    %c0_i32_1 = arith.constant 0 : i32
    return %c0_i32, %c0_i32_0 : i32, i32
  }
  func.func @transform_3(%arg0: i32) -> (i32, i32) {
    %c0_i32 = arith.constant 0 : i32
    %c0_i32_0 = arith.constant 0 : i32
    %c0_i32_1 = arith.constant 0 : i32
    return %c0_i32, %c0_i32_0 : i32, i32
  }
  func.func @transform_4(%arg0: i32) -> (i32, i32) {
    %c0_i32 = arith.constant 0 : i32
    %c0_i32_0 = arith.constant 0 : i32
    %c0_i32_1 = arith.constant 0 : i32
    return %c0_i32, %c0_i32_0 : i32, i32
  }
  func.func @transform_5(%arg0: i32) -> (i32, i32, i32, i32) {
    %c0_i32 = arith.constant 0 : i32
    %c0_i32_0 = arith.constant 0 : i32
    %c0_i32_1 = arith.constant 0 : i32
    %c0_i32_2 = arith.constant 0 : i32
    %c0_i32_3 = arith.constant 0 : i32
    return %c0_i32, %c0_i32_0, %c0_i32_1, %c0_i32_2 : i32, i32, i32, i32
  }
  func.func @transform_6(%arg0: i32) -> (i32, i32, i32, i32) {
    %c0_i32 = arith.constant 0 : i32
    %c0_i32_0 = arith.constant 0 : i32
    %c0_i32_1 = arith.constant 0 : i32
    %c0_i32_2 = arith.constant 0 : i32
    %c0_i32_3 = arith.constant 0 : i32
    return %c0_i32, %c0_i32_0, %c0_i32_1, %c0_i32_2 : i32, i32, i32, i32
  }
}

</mosaic_0001>

<llo_original>
// kernel: _forward_impl.1
$region0: #{_forward_impl.1}
  #allocation0 [shape = 'u32[]', space=smem, size = 0x4, offset = 0x4, fixed_abs, tag = 'smem constant byte address 0x4 - core index']
  #allocation1 [shape = 'u32[144,128]{1,0:T(1,128)}', space=vmem, size = 0x12000, scoped, tag = 'internal scratch']
  #allocation2 [shape = 'f32[2,18,18,4]{3,2,1,0:T(8,128)}', space=vmem, size = 0x6c000, scoped, tag = 'scratch operand']
  #allocation3 [shape = 'f32[2,10,10,8]{3,2,1,0:T(8,128)}', space=vmem, size = 0x28000, scoped, tag = 'scratch operand']
  #allocation4 [shape = 'f32[2,8,8,8]{3,2,1,0:T(8,128)}', space=vmem, size = 0x10000, scoped, tag = 'scratch operand']
  %s0 = inlined_call_operand.vmem [shape: f32[2,16,16,4], index: 0, kind: input, shape index: {}]
  %s1 = inlined_call_operand.vmem [shape: f32[36,8], index: 1, kind: input, shape index: {}]
  %s2 = inlined_call_operand.vmem [shape: f32[1,8], index: 2, kind: input, shape index: {}]
  %s3 = inlined_call_operand.vmem [shape: f32[72,16], index: 3, kind: input, shape index: {}]
  %s4 = inlined_call_operand.vmem [shape: f32[1,16], index: 4, kind: input, shape index: {}]
  %s5 = inlined_call_operand.vmem [shape: f32[2,16,16,8], index: 5, kind: output, shape index: {0}]
  %s6 = inlined_call_operand.hbm [shape: f32[2,4,4,16], index: 6, kind: output, shape index: {1}]
  %7 = xla_tuple %s5, %s6
  %s8 = sld [smem:[#allocation0]]
  $region38: #{_forward_impl.1} parent=0
    _
  %s10 = ssub.s32 1, %s8
  %s11 = scalar_select 0, %s10, %s8
  $region1: #{_forward_impl.1} parent=0
    #allocation5 [shape = 'u8[16384]{0}', space=vmem, size = 0x4000, scoped, tag = 'output window, operand 1, single buffered']
    #allocation6 [shape = 's32[1]{0}', space=sflag, size = 0x4, scoped, tag = 'scoped memory for _forward_impl.1']
    %12 = vsyncpa [#allocation6], 0
    // Predicated region
    $region2: #{_forward_impl.1} parent=1 // pred_check
      _
    $region3: #{_forward_impl.1} parent=1 // pred_check_branch
      %14 = sbr.rel (0) target = $region5
    $region4: #{_forward_impl.1} parent=1 // pred_region
      _
    $region5: #{_forward_impl.1} parent=1 // pred_fallthru
      _
    // Predicated region
    $region6: #{_forward_impl.1} parent=1 // pred_check
      _
    $region7: #{_forward_impl.1} parent=1 // pred_check_branch
      %16 = sbr.rel (0) target = $region9
    $region8: #{_forward_impl.1} parent=1 // pred_region
      _
    $region9: #{_forward_impl.1} parent=1 // pred_fallthru
      _
    // Predicated region
    $region10: #{_forward_impl.1} parent=1 // pred_check
      _
    $region11: #{_forward_impl.1} parent=1 // pred_check_branch
      %18 = sbr.rel (0) target = $region13
    $region12: #{_forward_impl.1} parent=1 // pred_region
      _
    $region13: #{_forward_impl.1} parent=1 // pred_fallthru
      _
    // Predicated region
    $region14: #{_forward_impl.1} parent=1 // pred_check
      _
    $region15: #{_forward_impl.1} parent=1 // pred_check_branch
      %20 = sbr.rel (0) target = $region17
    $region16: #{_forward_impl.1} parent=1 // pred_region
      _
    $region17: #{_forward_impl.1} parent=1 // pred_fallthru
      _
    // Predicated region
    $region18: #{_forward_impl.1} parent=1 // pred_check
      _
    $region19: #{_forward_impl.1} parent=1 // pred_check_branch
      %22 = sbr.rel (0) target = $region21
    $region20: #{_forward_impl.1} parent=1 // pred_region
      _
    $region21: #{_forward_impl.1} parent=1 // pred_fallthru
      _
    %v23 = vld [vmem:[%s0] sm:$0xff]
    %v24 = vld [vmem:[%s0 + $0x8] sm:$0xff]
    %v25 = vld [vmem:[%s0 + $0x10] sm:$0xff]
    %v26 = vld [vmem:[%s0 + $0x18] sm:$0xff]
    %v27 = vld [vmem:[%s0 + $0x20] sm:$0xff]
    %v28 = vld [vmem:[%s0 + $0x28] sm:$0xff]
    %v29 = vld [vmem:[%s0 + $0x30] sm:$0xff]
    %v30 = vld [vmem:[%s0 + $0x38] sm:$0xff]
    %v31 = vld [vmem:[%s0 + $0x40] sm:$0xff]
    %v32 = vld [vmem:[%s0 + $0x48] sm:$0xff]
    %v33 = vld [vmem:[%s0 + $0x50] sm:$0xff]
    %v34 = vld [vmem:[%s0 + $0x58] sm:$0xff]
    %v35 = vld [vmem:[%s0 + $0x60] sm:$0xff]
    %v36 = vld [vmem:[%s0 + $0x68] sm:$0xff]
    %v37 = vld [vmem:[%s0 + $0x70] sm:$0xff]
    %v38 = vld [vmem:[%s0 + $0x78] sm:$0xff]
    %v39 = vld [vmem:[%s0 + $0x80] sm:$0xff]
    %v40 = vld [vmem:[%s0 + $0x88] sm:$0xff]
    %v41 = vld [vmem:[%s0 + $0x90] sm:$0xff]
    %v42 = vld [vmem:[%s0 + $0x98] sm:$0xff]
    %v43 = vld [vmem:[%s0 + $0xa0] sm:$0xff]
    %v44 = vld [vmem:[%s0 + $0xa8] sm:$0xff]
    %v45 = vld [vmem:[%s0 + $0xb0] sm:$0xff]
    %v46 = vld [vmem:[%s0 + $0xb8] sm:$0xff]
    %v47 = vld [vmem:[%s0 + $0xc0] sm:$0xff]
    %v48 = vld [vmem:[%s0 + $0xc8] sm:$0xff]
    %v49 = vld [vmem:[%s0 + $0xd0] sm:$0xff]
    %v50 = vld [vmem:[%s0 + $0xd8] sm:$0xff]
    %v51 = vld [vmem:[%s0 + $0xe0] sm:$0xff]
    %v52 = vld [vmem:[%s0 + $0xe8] sm:$0xff]
    %v53 = vld [vmem:[%s0 + $0xf0] sm:$0xff]
    %v54 = vld [vmem:[%s0 + $0xf8] sm:$0xff]
    %v55 = vld [vmem:[%s0 + $0x100] sm:$0xff]
    %v56 = vld [vmem:[%s0 + $0x108] sm:$0xff]
    %v57 = vld [vmem:[%s0 + $0x110] sm:$0xff]
    %v58 = vld [vmem:[%s0 + $0x118] sm:$0xff]
    %v59 = vld [vmem:[%s0 + $0x120] sm:$0xff]
    %v60 = vld [vmem:[%s0 + $0x128] sm:$0xff]
    %v61 = vld [vmem:[%s0 + $0x130] sm:$0xff]
    %v62 = vld [vmem:[%s0 + $0x138] sm:$0xff]
    %v63 = vld [vmem:[%s0 + $0x140] sm:$0xff]
    %v64 = vld [vmem:[%s0 + $0x148] sm:$0xff]
    %v65 = vld [vmem:[%s0 + $0x150] sm:$0xff]
    %v66 = vld [vmem:[%s0 + $0x158] sm:$0xff]
    %v67 = vld [vmem:[%s0 + $0x160] sm:$0xff]
    %v68 = vld [vmem:[%s0 + $0x168] sm:$0xff]
    %v69 = vld [vmem:[%s0 + $0x170] sm:$0xff]
    %v70 = vld [vmem:[%s0 + $0x178] sm:$0xff]
    %v71 = vld [vmem:[%s0 + $0x180] sm:$0xff]
    %v72 = vld [vmem:[%s0 + $0x188] sm:$0xff]
    %v73 = vld [vmem:[%s0 + $0x190] sm:$0xff]
    %v74 = vld [vmem:[%s0 + $0x198] sm:$0xff]
    %v75 = vld [vmem:[%s0 + $0x1a0] sm:$0xff]
    %v76 = vld [vmem:[%s0 + $0x1a8] sm:$0xff]
    %v77 = vld [vmem:[%s0 + $0x1b0] sm:$0xff]
    %v78 = vld [vmem:[%s0 + $0x1b8] sm:$0xff]
    %v79 = vld [vmem:[%s0 + $0x1c0] sm:$0xff]
    %v80 = vld [vmem:[%s0 + $0x1c8] sm:$0xff]
    %v81 = vld [vmem:[%s0 + $0x1d0] sm:$0xff]
    %v82 = vld [vmem:[%s0 + $0x1d8] sm:$0xff]
    %v83 = vld [vmem:[%s0 + $0x1e0] sm:$0xff]
    %v84 = vld [vmem:[%s0 + $0x1e8] sm:$0xff]
    %v85 = vld [vmem:[%s0 + $0x1f0] sm:$0xff]
    %v86 = vld [vmem:[%s0 + $0x1f8] sm:$0xff]
    %v87 = vld [vmem:[%s1] sm:$0xff]
    %v88 = vld [vmem:[%s1 + $0x8] sm:$0xff]
    %v89 = vld [vmem:[%s1 + $0x10] sm:$0xff]
    %v90 = vld [vmem:[%s1 + $0x18] sm:$0xff]
    %v91 = vld [vmem:[%s1 + $0x20] sm:$0xf]
    %v92 = vld [vmem:[%s2] sm:$0x1]
    %vm93 = vcmask 31744
    %94 = vst.msk [vmem:[#allocation2] sm:$0xff] %vm93, 0.0
    %95 = vst.msk [vmem:[#allocation2 + $0x8] sm:$0xff] %vm93, 0.0
    %vm96 = vcmask 25600
    %97 = vst.msk [vmem:[#allocation2 + $0x10] sm:$0x3] %vm96, 0.0
    %98 = vst.msk [vmem:[#allocation2 + $0x18] sm:$0xff] %vm93, 0.0
    %99 = vst.msk [vmem:[#allocation2 + $0x20] sm:$0xff] %vm93, 0.0
    %100 = vst.msk [vmem:[#allocation2 + $0x28] sm:$0x3] %vm96, 0.0
    %101 = vst.msk [vmem:[#allocation2 + $0x30] sm:$0xff] %vm93, 0.0
    %102 = vst.msk [vmem:[#allocation2 + $0x38] sm:$0xff] %vm93, 0.0
    %103 = vst.msk [vmem:[#allocation2 + $0x40] sm:$0x3] %vm96, 0.0
    %104 = vst.msk [vmem:[#allocation2 + $0x48] sm:$0xff] %vm93, 0.0
    %105 = vst.msk [vmem:[#allocation2 + $0x50] sm:$0xff] %vm93, 0.0
    %106 = vst.msk [vmem:[#allocation2 + $0x58] sm:$0x3] %vm96, 0.0
    %107 = vst.msk [vmem:[#allocation2 + $0x60] sm:$0xff] %vm93, 0.0
    %108 = vst.msk [vmem:[#allocation2 + $0x68] sm:$0xff] %vm93, 0.0
    %109 = vst.msk [vmem:[#allocation2 + $0x70] sm:$0x3] %vm96, 0.0
    %110 = vst.msk [vmem:[#allocation2 + $0x78] sm:$0xff] %vm93, 0.0
    %111 = vst.msk [vmem:[#allocation2 + $0x80] sm:$0xff] %vm93, 0.0
    %112 = vst.msk [vmem:[#allocation2 + $0x88] sm:$0x3] %vm96, 0.0
    %113 = vst.msk [vmem:[#allocation2 + $0x90] sm:$0xff] %vm93, 0.0
    %114 = vst.msk [vmem:[#allocation2 + $0x98] sm:$0xff] %vm93, 0.0
    %115 = vst.msk [vmem:[#allocation2 + $0xa0] sm:$0x3] %vm96, 0.0
    %116 = vst.msk [vmem:[#allocation2 + $0xa8] sm:$0xff] %vm93, 0.0
    %117 = vst.msk [vmem:[#allocation2 + $0xb0] sm:$0xff] %vm93, 0.0
    %118 = vst.msk [vmem:[#allocation2 + $0xb8] sm:$0x3] %vm96, 0.0
    %119 = vst.msk [vmem:[#allocation2 + $0xc0] sm:$0xff] %vm93, 0.0
    %120 = vst.msk [vmem:[#allocation2 + $0xc8] sm:$0xff] %vm93, 0.0
    %121 = vst.msk [vmem:[#allocation2 + $0xd0] sm:$0x3] %vm96, 0.0
    %122 = vst.msk [vmem:[#allocation2 + $0xd8] sm:$0xff] %vm93, 0.0
    %123 = vst.msk [vmem:[#allocation2 + $0xe0] sm:$0xff] %vm93, 0.0
    %124 = vst.msk [vmem:[#allocation2 + $0xe8] sm:$0x3] %vm96, 0.0
    %125 = vst.msk [vmem:[#allocation2 + $0xf0] sm:$0xff] %vm93, 0.0
    %126 = vst.msk [vmem:[#allocation2 + $0xf8] sm:$0xff] %vm93, 0.0
    %127 = vst.msk [vmem:[#allocation2 + $0x100] sm:$0x3] %vm96, 0.0
    %128 = vst.msk [vmem:[#allocation2 + $0x108] sm:$0xff] %vm93, 0.0
    %129 = vst.msk [vmem:[#allocation2 + $0x110] sm:$0xff] %vm93, 0.0
    %130 = vst.msk [vmem:[#allocation2 + $0x118] sm:$0x3] %vm96, 0.0
    %131 = vst.msk [vmem:[#allocation2 + $0x120] sm:$0xff] %vm93, 0.0
    %132 = vst.msk [vmem:[#allocation2 + $0x128] sm:$0xff] %vm93, 0.0
    %133 = vst.msk [vmem:[#allocation2 + $0x130] sm:$0x3] %vm96, 0.0
    %134 = vst.msk [vmem:[#allocation2 + $0x138] sm:$0xff] %vm93, 0.0
    %135 = vst.msk [vmem:[#allocation2 + $0x140] sm:$0xff] %vm93, 0.0
    %136 = vst.msk [vmem:[#allocation2 + $0x148] sm:$0x3] %vm96, 0.0
    %137 = vst.msk [vmem:[#allocation2 + $0x150] sm:$0xff] %vm93, 0.0
    %138 = vst.msk [vmem:[#allocation2 + $0x158] sm:$0xff] %vm93, 0.0
    %139 = vst.msk [vmem:[#allocation2 + $0x160] sm:$0x3] %vm96, 0.0
    %140 = vst.msk [vmem:[#allocation2 + $0x168] sm:$0xff] %vm93, 0.0
    %141 = vst.msk [vmem:[#allocation2 + $0x170] sm:$0xff] %vm93, 0.0
    %142 = vst.msk [vmem:[#allocation2 + $0x178] sm:$0x3] %vm96, 0.0
    %143 = vst.msk [vmem:[#allocation2 + $0x180] sm:$0xff] %vm93, 0.0
    %144 = vst.msk [vmem:[#allocation2 + $0x188] sm:$0xff] %vm93, 0.0
    %145 = vst.msk [vmem:[#allocation2 + $0x190] sm:$0x3] %vm96, 0.0
    %146 = vst.msk [vmem:[#allocation2 + $0x198] sm:$0xff] %vm93, 0.0
    %147 = vst.msk [vmem:[#allocation2 + $0x1a0] sm:$0xff] %vm93, 0.0
    %148 = vst.msk [vmem:[#allocation2 + $0x1a8] sm:$0x3] %vm96, 0.0
    %149 = vst.msk [vmem:[#allocation2 + $0x1b0] sm:$0xff] %vm93, 0.0
    %150 = vst.msk [vmem:[#allocation2 + $0x1b8] sm:$0xff] %vm93, 0.0
    %151 = vst.msk [vmem:[#allocation2 + $0x1c0] sm:$0x3] %vm96, 0.0
    %152 = vst.msk [vmem:[#allocation2 + $0x1c8] sm:$0xff] %vm93, 0.0
    %153 = vst.msk [vmem:[#allocation2 + $0x1d0] sm:$0xff] %vm93, 0.0
    %154 = vst.msk [vmem:[#allocation2 + $0x1d8] sm:$0x3] %vm96, 0.0
    %155 = vst.msk [vmem:[#allocation2 + $0x1e0] sm:$0xff] %vm93, 0.0
    %156 = vst.msk [vmem:[#allocation2 + $0x1e8] sm:$0xff] %vm93, 0.0
    %157 = vst.msk [vmem:[#allocation2 + $0x1f0] sm:$0x3] %vm96, 0.0
    %158 = vst.msk [vmem:[#allocation2 + $0x1f8] sm:$0xff] %vm93, 0.0
    %159 = vst.msk [vmem:[#allocation2 + $0x200] sm:$0xff] %vm93, 0.0
    %160 = vst.msk [vmem:[#allocation2 + $0x208] sm:$0x3] %vm96, 0.0
    %161 = vst.msk [vmem:[#allocation2 + $0x210] sm:$0xff] %vm93, 0.0
    %162 = vst.msk [vmem:[#allocation2 + $0x218] sm:$0xff] %vm93, 0.0
    %163 = vst.msk [vmem:[#allocation2 + $0x220] sm:$0x3] %vm96, 0.0
    %164 = vst.msk [vmem:[#allocation2 + $0x228] sm:$0xff] %vm93, 0.0
    %165 = vst.msk [vmem:[#allocation2 + $0x230] sm:$0xff] %vm93, 0.0
    %166 = vst.msk [vmem:[#allocation2 + $0x238] sm:$0x3] %vm96, 0.0
    %167 = vst.msk [vmem:[#allocation2 + $0x240] sm:$0xff] %vm93, 0.0
    %168 = vst.msk [vmem:[#allocation2 + $0x248] sm:$0xff] %vm93, 0.0
    %169 = vst.msk [vmem:[#allocation2 + $0x250] sm:$0x3] %vm96, 0.0
    %170 = vst.msk [vmem:[#allocation2 + $0x258] sm:$0xff] %vm93, 0.0
    %171 = vst.msk [vmem:[#allocation2 + $0x260] sm:$0xff] %vm93, 0.0
    %172 = vst.msk [vmem:[#allocation2 + $0x268] sm:$0x3] %vm96, 0.0
    %173 = vst.msk [vmem:[#allocation2 + $0x270] sm:$0xff] %vm93, 0.0
    %174 = vst.msk [vmem:[#allocation2 + $0x278] sm:$0xff] %vm93, 0.0
    %175 = vst.msk [vmem:[#allocation2 + $0x280] sm:$0x3] %vm96, 0.0
    %176 = vst.msk [vmem:[#allocation2 + $0x288] sm:$0xff] %vm93, 0.0
    %177 = vst.msk [vmem:[#allocation2 + $0x290] sm:$0xff] %vm93, 0.0
    %178 = vst.msk [vmem:[#allocation2 + $0x298] sm:$0x3] %vm96, 0.0
    %179 = vst.msk [vmem:[#allocation2 + $0x2a0] sm:$0xff] %vm93, 0.0
    %180 = vst.msk [vmem:[#allocation2 + $0x2a8] sm:$0xff] %vm93, 0.0
    %181 = vst.msk [vmem:[#allocation2 + $0x2b0] sm:$0x3] %vm96, 0.0
    %182 = vst.msk [vmem:[#allocation2 + $0x2b8] sm:$0xff] %vm93, 0.0
    %183 = vst.msk [vmem:[#allocation2 + $0x2c0] sm:$0xff] %vm93, 0.0
    %184 = vst.msk [vmem:[#allocation2 + $0x2c8] sm:$0x3] %vm96, 0.0
    %185 = vst.msk [vmem:[#allocation2 + $0x2d0] sm:$0xff] %vm93, 0.0
    %186 = vst.msk [vmem:[#allocation2 + $0x2d8] sm:$0xff] %vm93, 0.0
    %187 = vst.msk [vmem:[#allocation2 + $0x2e0] sm:$0x3] %vm96, 0.0
    %188 = vst.msk [vmem:[#allocation2 + $0x2e8] sm:$0xff] %vm93, 0.0
    %189 = vst.msk [vmem:[#allocation2 + $0x2f0] sm:$0xff] %vm93, 0.0
    %190 = vst.msk [vmem:[#allocation2 + $0x2f8] sm:$0x3] %vm96, 0.0
    %191 = vst.msk [vmem:[#allocation2 + $0x300] sm:$0xff] %vm93, 0.0
    %192 = vst.msk [vmem:[#allocation2 + $0x308] sm:$0xff] %vm93, 0.0
    %193 = vst.msk [vmem:[#allocation2 + $0x310] sm:$0x3] %vm96, 0.0
    %194 = vst.msk [vmem:[#allocation2 + $0x318] sm:$0xff] %vm93, 0.0
    %195 = vst.msk [vmem:[#allocation2 + $0x320] sm:$0xff] %vm93, 0.0
    %196 = vst.msk [vmem:[#allocation2 + $0x328] sm:$0x3] %vm96, 0.0
    %197 = vst.msk [vmem:[#allocation2 + $0x330] sm:$0xff] %vm93, 0.0
    %198 = vst.msk [vmem:[#allocation2 + $0x338] sm:$0xff] %vm93, 0.0
    %199 = vst.msk [vmem:[#allocation2 + $0x340] sm:$0x3] %vm96, 0.0
    %200 = vst.msk [vmem:[#allocation2 + $0x348] sm:$0xff] %vm93, 0.0
    %201 = vst.msk [vmem:[#allocation2 + $0x350] sm:$0xff] %vm93, 0.0
    %202 = vst.msk [vmem:[#allocation2 + $0x358] sm:$0x3] %vm96, 0.0
    %s203 = scalar_lea.vmem [#allocation2], 24
    %204 = vst.msk [vmem:[%s203 + $0x1] sm:$0xff] %vm93, %v23
    %205 = vst.msk [vmem:[%s203 + $0x9] sm:$0xff] %vm93, %v24
    %206 = vst.msk [vmem:[%s203 + $0x19] sm:$0xff] %vm93, %v25
    %207 = vst.msk [vmem:[%s203 + $0x21] sm:$0xff] %vm93, %v26
    %208 = vst.msk [vmem:[%s203 + $0x31] sm:$0xff] %vm93, %v27
    %209 = vst.msk [vmem:[%s203 + $0x39] sm:$0xff] %vm93, %v28
    %210 = vst.msk [vmem:[%s203 + $0x49] sm:$0xff] %vm93, %v29
    %211 = vst.msk [vmem:[%s203 + $0x51] sm:$0xff] %vm93, %v30
    %212 = vst.msk [vmem:[%s203 + $0x61] sm:$0xff] %vm93, %v31
    %213 = vst.msk [vmem:[%s203 + $0x69] sm:$0xff] %vm93, %v32
    %214 = vst.msk [vmem:[%s203 + $0x79] sm:$0xff] %vm93, %v33
    %215 = vst.msk [vmem:[%s203 + $0x81] sm:$0xff] %vm93, %v34
    %216 = vst.msk [vmem:[%s203 + $0x91] sm:$0xff] %vm93, %v35
    %217 = vst.msk [vmem:[%s203 + $0x99] sm:$0xff] %vm93, %v36
    %218 = vst.msk [vmem:[%s203 + $0xa9] sm:$0xff] %vm93, %v37
    %219 = vst.msk [vmem:[%s203 + $0xb1] sm:$0xff] %vm93, %v38
    %220 = vst.msk [vmem:[%s203 + $0xc1] sm:$0xff] %vm93, %v39
    %221 = vst.msk [vmem:[%s203 + $0xc9] sm:$0xff] %vm93, %v40
    %222 = vst.msk [vmem:[%s203 + $0xd9] sm:$0xff] %vm93, %v41
    %223 = vst.msk [vmem:[%s203 + $0xe1] sm:$0xff] %vm93, %v42
    %224 = vst.msk [vmem:[%s203 + $0xf1] sm:$0xff] %vm93, %v43
    %225 = vst.msk [vmem:[%s203 + $0xf9] sm:$0xff] %vm93, %v44
    %226 = vst.msk [vmem:[%s203 + $0x109] sm:$0xff] %vm93, %v45
    %227 = vst.msk [vmem:[%s203 + $0x111] sm:$0xff] %vm93, %v46
    %228 = vst.msk [vmem:[%s203 + $0x121] sm:$0xff] %vm93, %v47
    %229 = vst.msk [vmem:[%s203 + $0x129] sm:$0xff] %vm93, %v48
    %230 = vst.msk [vmem:[%s203 + $0x139] sm:$0xff] %vm93, %v49
    %231 = vst.msk [vmem:[%s203 + $0x141] sm:$0xff] %vm93, %v50
    %232 = vst.msk [vmem:[%s203 + $0x151] sm:$0xff] %vm93, %v51
    %233 = vst.msk [vmem:[%s203 + $0x159] sm:$0xff] %vm93, %v52
    %234 = vst.msk [vmem:[%s203 + $0x169] sm:$0xff] %vm93, %v53
    %235 = vst.msk [vmem:[%s203 + $0x171] sm:$0xff] %vm93, %v54
    %236 = vst.msk [vmem:[%s203 + $0x1b1] sm:$0xff] %vm93, %v55
    %237 = vst.msk [vmem:[%s203 + $0x1b9] sm:$0xff] %vm93, %v56
    %238 = vst.msk [vmem:[%s203 + $0x1c9] sm:$0xff] %vm93, %v57
    %239 = vst.msk [vmem:[%s203 + $0x1d1] sm:$0xff] %vm93, %v58
    %240 = vst.msk [vmem:[%s203 + $0x1e1] sm:$0xff] %vm93, %v59
    %241 = vst.msk [vmem:[%s203 + $0x1e9] sm:$0xff] %vm93, %v60
    %242 = vst.msk [vmem:[%s203 + $0x1f9] sm:$0xff] %vm93, %v61
    %243 = vst.msk [vmem:[%s203 + $0x201] sm:$0xff] %vm93, %v62
    %244 = vst.msk [vmem:[%s203 + $0x211] sm:$0xff] %vm93, %v63
    %245 = vst.msk [vmem:[%s203 + $0x219] sm:$0xff] %vm93, %v64
    %246 = vst.msk [vmem:[%s203 + $0x229] sm:$0xff] %vm93, %v65
    %247 = vst.msk [vmem:[%s203 + $0x231] sm:$0xff] %vm93, %v66
    %248 = vst.msk [vmem:[%s203 + $0x241] sm:$0xff] %vm93, %v67
    %249 = vst.msk [vmem:[%s203 + $0x249] sm:$0xff] %vm93, %v68
    %250 = vst.msk [vmem:[%s203 + $0x259] sm:$0xff] %vm93, %v69
    %251 = vst.msk [vmem:[%s203 + $0x261] sm:$0xff] %vm93, %v70
    %252 = vst.msk [vmem:[%s203 + $0x271] sm:$0xff] %vm93, %v71
    %253 = vst.msk [vmem:[%s203 + $0x279] sm:$0xff] %vm93, %v72
    %254 = vst.msk [vmem:[%s203 + $0x289] sm:$0xff] %vm93, %v73
    %255 = vst.msk [vmem:[%s203 + $0x291] sm:$0xff] %vm93, %v74
    %256 = vst.msk [vmem:[%s203 + $0x2a1] sm:$0xff] %vm93, %v75
    %257 = vst.msk [vmem:[%s203 + $0x2a9] sm:$0xff] %vm93, %v76
    %258 = vst.msk [vmem:[%s203 + $0x2b9] sm:$0xff] %vm93, %v77
    %259 = vst.msk [vmem:[%s203 + $0x2c1] sm:$0xff] %vm93, %v78
    %260 = vst.msk [vmem:[%s203 + $0x2d1] sm:$0xff] %vm93, %v79
    %261 = vst.msk [vmem:[%s203 + $0x2d9] sm:$0xff] %vm93, %v80
    %262 = vst.msk [vmem:[%s203 + $0x2e9] sm:$0xff] %vm93, %v81
    %263 = vst.msk [vmem:[%s203 + $0x2f1] sm:$0xff] %vm93, %v82
    %264 = vst.msk [vmem:[%s203 + $0x301] sm:$0xff] %vm93, %v83
    %265 = vst.msk [vmem:[%s203 + $0x309] sm:$0xff] %vm93, %v84
    %266 = vst.msk [vmem:[%s203 + $0x319] sm:$0xff] %vm93, %v85
    %267 = vst.msk [vmem:[%s203 + $0x321] sm:$0xff] %vm93, %v86
    %v268 = vld [vmem:[#allocation2] sm:$0xff]
    %v269 = vld [vmem:[#allocation2 + $0x8] sm:$0xff]
    %v270 = vld [vmem:[#allocation2 + $0x10] sm:$0x3]
    %v271 = vld [vmem:[#allocation2 + $0x18] sm:$0xff]
    %v272 = vld [vmem:[#allocation2 + $0x20] sm:$0xff]
    %v273 = vld [vmem:[#allocation2 + $0x28] sm:$0x3]
    %v274 = vld [vmem:[#allocation2 + $0x30] sm:$0xff]
    %v275 = vld [vmem:[#allocation2 + $0x38] sm:$0xff]
    %v276 = vld [vmem:[#allocation2 + $0x40] sm:$0x3]
    %v277 = vld [vmem:[#allocation2 + $0x48] sm:$0xff]
    %v278 = vld [vmem:[#allocation2 + $0x50] sm:$0xff]
    %v279 = vld [vmem:[#allocation2 + $0x58] sm:$0x3]
    %v280 = vld [vmem:[#allocation2 + $0x60] sm:$0xff]
    %v281 = vld [vmem:[#allocation2 + $0x68] sm:$0xff]
    %v282 = vld [vmem:[#allocation2 + $0x70] sm:$0x3]
    %v283 = vld [vmem:[#allocation2 + $0x78] sm:$0xff]
    %v284 = vld [vmem:[#allocation2 + $0x80] sm:$0xff]
    %v285 = vld [vmem:[#allocation2 + $0x88] sm:$0x3]
    %v286 = vld [vmem:[#allocation2 + $0x90] sm:$0xff]
    %v287 = vld [vmem:[#allocation2 + $0x98] sm:$0xff]
    %v288 = vld [vmem:[#allocation2 + $0xa0] sm:$0x3]
    %v289 = vld [vmem:[#allocation2 + $0xa8] sm:$0xff]
    %v290 = vld [vmem:[#allocation2 + $0xb0] sm:$0xff]
    %v291 = vld [vmem:[#allocation2 + $0xb8] sm:$0x3]
    %v292 = vld [vmem:[#allocation2 + $0xc0] sm:$0xff]
    %v293 = vld [vmem:[#allocation2 + $0xc8] sm:$0xff]
    %v294 = vld [vmem:[#allocation2 + $0xd0] sm:$0x3]
    %v295 = vld [vmem:[#allocation2 + $0xd8] sm:$0xff]
    %v296 = vld [vmem:[#allocation2 + $0xe0] sm:$0xff]
    %v297 = vld [vmem:[#allocation2 + $0xe8] sm:$0x3]
    %v298 = vld [vmem:[#allocation2 + $0xf0] sm:$0xff]
    %v299 = vld [vmem:[#allocation2 + $0xf8] sm:$0xff]
    %v300 = vld [vmem:[#allocation2 + $0x100] sm:$0x3]
    %v301 = vld [vmem:[#allocation2 + $0x108] sm:$0xff]
    %v302 = vld [vmem:[#allocation2 + $0x110] sm:$0xff]
    %v303 = vld [vmem:[#allocation2 + $0x118] sm:$0x3]
    %v304 = vld [vmem:[#allocation2 + $0x120] sm:$0xff]
    %v305 = vld [vmem:[#allocation2 + $0x128] sm:$0xff]
    %v306 = vld [vmem:[#allocation2 + $0x130] sm:$0x3]
    %v307 = vld [vmem:[#allocation2 + $0x138] sm:$0xff]
    %v308 = vld [vmem:[#allocation2 + $0x140] sm:$0xff]
    %v309 = vld [vmem:[#allocation2 + $0x148] sm:$0x3]
    %v310 = vld [vmem:[#allocation2 + $0x150] sm:$0xff]
    %v311 = vld [vmem:[#allocation2 + $0x158] sm:$0xff]
    %v312 = vld [vmem:[#allocation2 + $0x160] sm:$0x3]
    %v313 = vld [vmem:[#allocation2 + $0x168] sm:$0xff]
    %v314 = vld [vmem:[#allocation2 + $0x170] sm:$0xff]
    %v315 = vld [vmem:[#allocation2 + $0x178] sm:$0x3]
    %v316 = vld [vmem:[#allocation2 + $0x180] sm:$0xff]
    %v317 = vld [vmem:[#allocation2 + $0x188] sm:$0xff]
    %v318 = vld [vmem:[#allocation2 + $0x190] sm:$0x3]
    %v319 = vld [vmem:[#allocation2 + $0x198] sm:$0xff]
    %v320 = vld [vmem:[#allocation2 + $0x1a0] sm:$0xff]
    %v321 = vld [vmem:[#allocation2 + $0x1a8] sm:$0x3]
    %v322 = vld [vmem:[#allocation2 + $0x1b0] sm:$0xff]
    %v323 = vld [vmem:[#allocation2 + $0x1b8] sm:$0xff]
    %v324 = vld [vmem:[#allocation2 + $0x1c0] sm:$0x3]
    %v325 = vld [vmem:[#allocation2 + $0x1c8] sm:$0xff]
    %v326 = vld [vmem:[#allocation2 + $0x1d0] sm:$0xff]
    %v327 = vld [vmem:[#allocation2 + $0x1d8] sm:$0x3]
    %v328 = vld [vmem:[#allocation2 + $0x1e0] sm:$0xff]
    %v329 = vld [vmem:[#allocation2 + $0x1e8] sm:$0xff]
    %v330 = vld [vmem:[#allocation2 + $0x1f0] sm:$0x3]
    %v331 = vld [vmem:[#allocation2 + $0x1f8] sm:$0xff]
    %v332 = vld [vmem:[#allocation2 + $0x200] sm:$0xff]
    %v333 = vld [vmem:[#allocation2 + $0x208] sm:$0x3]
    %v334 = vld [vmem:[#allocation2 + $0x210] sm:$0xff]
    %v335 = vld [vmem:[#allocation2 + $0x218] sm:$0xff]
    %v336 = vld [vmem:[#allocation2 + $0x220] sm:$0x3]
    %v337 = vld [vmem:[#allocation2 + $0x228] sm:$0xff]
    %v338 = vld [vmem:[#allocation2 + $0x230] sm:$0xff]
    %v339 = vld [vmem:[#allocation2 + $0x238] sm:$0x3]
    %v340 = vld [vmem:[#allocation2 + $0x240] sm:$0xff]
    %v341 = vld [vmem:[#allocation2 + $0x248] sm:$0xff]
    %v342 = vld [vmem:[#allocation2 + $0x250] sm:$0x3]
    %v343 = vld [vmem:[#allocation2 + $0x258] sm:$0xff]
    %v344 = vld [vmem:[#allocation2 + $0x260] sm:$0xff]
    %v345 = vld [vmem:[#allocation2 + $0x268] sm:$0x3]
    %v346 = vld [vmem:[#allocation2 + $0x270] sm:$0xff]
    %v347 = vld [vmem:[#allocation2 + $0x278] sm:$0xff]
    %v348 = vld [vmem:[#allocation2 + $0x280] sm:$0x3]
    %v349 = vld [vmem:[#allocation2 + $0x288] sm:$0xff]
    %v350 = vld [vmem:[#allocation2 + $0x290] sm:$0xff]
    %v351 = vld [vmem:[#allocation2 + $0x298] sm:$0x3]
    %v352 = vld [vmem:[#allocation2 + $0x2a0] sm:$0xff]
    %v353 = vld [vmem:[#allocation2 + $0x2a8] sm:$0xff]
    %v354 = vld [vmem:[#allocation2 + $0x2b0] sm:$0x3]
    %v355 = vld [vmem:[#allocation2 + $0x2b8] sm:$0xff]
    %v356 = vld [vmem:[#allocation2 + $0x2c0] sm:$0xff]
    %v357 = vld [vmem:[#allocation2 + $0x2c8] sm:$0x3]
    %v358 = vld [vmem:[#allocation2 + $0x2d0] sm:$0xff]
    %v359 = vld [vmem:[#allocation2 + $0x2d8] sm:$0xff]
    %v360 = vld [vmem:[#allocation2 + $0x2e0] sm:$0x3]
    %v361 = vld [vmem:[#allocation2 + $0x2e8] sm:$0xff]
    %v362 = vld [vmem:[#allocation2 + $0x2f0] sm:$0xff]
    %v363 = vld [vmem:[#allocation2 + $0x2f8] sm:$0x3]
    %v364 = vld [vmem:[#allocation2 + $0x300] sm:$0xff]
    %v365 = vld [vmem:[#allocation2 + $0x308] sm:$0xff]
    %v366 = vld [vmem:[#allocation2 + $0x310] sm:$0x3]
    %v367 = vld [vmem:[#allocation2 + $0x318] sm:$0xff]
    %v368 = vld [vmem:[#allocation2 + $0x320] sm:$0xff]
    %v369 = vld [vmem:[#allocation2 + $0x328] sm:$0x3]
    %v370 = vld [vmem:[#allocation2 + $0x330] sm:$0xff]
    %v371 = vld [vmem:[#allocation2 + $0x338] sm:$0xff]
    %v372 = vld [vmem:[#allocation2 + $0x340] sm:$0x3]
    %v373 = vld [vmem:[#allocation2 + $0x348] sm:$0xff]
    %v374 = vld [vmem:[#allocation2 + $0x350] sm:$0xff]
    %v375 = vld [vmem:[#allocation2 + $0x358] sm:$0x3]
    %vm472 = vcmask 1046528
    %v473 = vrot.slane %v268, 1
    %v474 = vrot.slane %v269, 1
    %v475 = vsel %vm472, %v473, %v474
    %v476 = vrot.slane %v270, 1
    %v477 = vsel %vm472, %v474, %v476
    %v478 = vrot.slane %v271, 1
    %v479 = vrot.slane %v272, 1
    %v480 = vsel %vm472, %v478, %v479
    %v481 = vrot.slane %v273, 1
    %v482 = vsel %vm472, %v479, %v481
    %v483 = vrot.slane %v274, 1
    %v484 = vrot.slane %v275, 1
    %v485 = vsel %vm472, %v483, %v484
    %v486 = vrot.slane %v276, 1
    %v487 = vsel %vm472, %v484, %v486
    %v488 = vrot.slane %v277, 1
    %v489 = vrot.slane %v278, 1
    %v490 = vsel %vm472, %v488, %v489
    %v491 = vrot.slane %v279, 1
    %v492 = vsel %vm472, %v489, %v491
    %v493 = vrot.slane %v280, 1
    %v494 = vrot.slane %v281, 1
    %v495 = vsel %vm472, %v493, %v494
    %v496 = vrot.slane %v282, 1
    %v497 = vsel %vm472, %v494, %v496
    %v498 = vrot.slane %v283, 1
    %v499 = vrot.slane %v284, 1
    %v500 = vsel %vm472, %v498, %v499
    %v501 = vrot.slane %v285, 1
    %v502 = vsel %vm472, %v499, %v501
    %v503 = vrot.slane %v286, 1
    %v504 = vrot.slane %v287, 1
    %v505 = vsel %vm472, %v503, %v504
    %v506 = vrot.slane %v288, 1
    %v507 = vsel %vm472, %v504, %v506
    %v508 = vrot.slane %v289, 1
    %v509 = vrot.slane %v290, 1
    %v510 = vsel %vm472, %v508, %v509
    %v511 = vrot.slane %v291, 1
    %v512 = vsel %vm472, %v509, %v511
    %v513 = vrot.slane %v292, 1
    %v514 = vrot.slane %v293, 1
    %v515 = vsel %vm472, %v513, %v514
    %v516 = vrot.slane %v294, 1
    %v517 = vsel %vm472, %v514, %v516
    %v518 = vrot.slane %v295, 1
    %v519 = vrot.slane %v296, 1
    %v520 = vsel %vm472, %v518, %v519
    %v521 = vrot.slane %v297, 1
    %v522 = vsel %vm472, %v519, %v521
    %v523 = vrot.slane %v298, 1
    %v524 = vrot.slane %v299, 1
    %v525 = vsel %vm472, %v523, %v524
    %v526 = vrot.slane %v300, 1
    %v527 = vsel %vm472, %v524, %v526
    %v528 = vrot.slane %v301, 1
    %v529 = vrot.slane %v302, 1
    %v530 = vsel %vm472, %v528, %v529
    %v531 = vrot.slane %v303, 1
    %v532 = vsel %vm472, %v529, %v531
    %v533 = vrot.slane %v304, 1
    %v534 = vrot.slane %v305, 1
    %v535 = vsel %vm472, %v533, %v534
    %v536 = vrot.slane %v306, 1
    %v537 = vsel %vm472, %v534, %v536
    %v538 = vrot.slane %v307, 1
    %v539 = vrot.slane %v308, 1
    %v540 = vsel %vm472, %v538, %v539
    %v541 = vrot.slane %v309, 1
    %v542 = vsel %vm472, %v539, %v541
    %v543 = vrot.slane %v310, 1
    %v544 = vrot.slane %v311, 1
    %v545 = vsel %vm472, %v543, %v544
    %v546 = vrot.slane %v312, 1
    %v547 = vsel %vm472, %v544, %v546
    %v548 = vrot.slane %v313, 1
    %v549 = vrot.slane %v314, 1
    %v550 = vsel %vm472, %v548, %v549
    %v551 = vrot.slane %v315, 1
    %v552 = vsel %vm472, %v549, %v551
    %v553 = vrot.slane %v322, 1
    %v554 = vrot.slane %v323, 1
    %v555 = vsel %vm472, %v553, %v554
    %v556 = vrot.slane %v324, 1
    %v557 = vsel %vm472, %v554, %v556
    %v558 = vrot.slane %v325, 1
    %v559 = vrot.slane %v326, 1
    %v560 = vsel %vm472, %v558, %v559
    %v561 = vrot.slane %v327, 1
    %v562 = vsel %vm472, %v559, %v561
    %v563 = vrot.slane %v328, 1
    %v564 = vrot.slane %v329, 1
    %v565 = vsel %vm472, %v563, %v564
    %v566 = vrot.slane %v330, 1
    %v567 = vsel %vm472, %v564, %v566
    %v568 = vrot.slane %v331, 1
    %v569 = vrot.slane %v332, 1
    %v570 = vsel %vm472, %v568, %v569
    %v571 = vrot.slane %v333, 1
    %v572 = vsel %vm472, %v569, %v571
    %v573 = vrot.slane %v334, 1
    %v574 = vrot.slane %v335, 1
    %v575 = vsel %vm472, %v573, %v574
    %v576 = vrot.slane %v336, 1
    %v577 = vsel %vm472, %v574, %v576
    %v578 = vrot.slane %v337, 1
    %v579 = vrot.slane %v338, 1
    %v580 = vsel %vm472, %v578, %v579
    %v581 = vrot.slane %v339, 1
    %v582 = vsel %vm472, %v579, %v581
    %v583 = vrot.slane %v340, 1
    %v584 = vrot.slane %v341, 1
    %v585 = vsel %vm472, %v583, %v584
    %v586 = vrot.slane %v342, 1
    %v587 = vsel %vm472, %v584, %v586
    %v588 = vrot.slane %v343, 1
    %v589 = vrot.slane %v344, 1
    %v590 = vsel %vm472, %v588, %v589
    %v591 = vrot.slane %v345, 1
    %v592 = vsel %vm472, %v589, %v591
    %v593 = vrot.slane %v346, 1
    %v594 = vrot.slane %v347, 1
    %v595 = vsel %vm472, %v593, %v594
    %v596 = vrot.slane %v348, 1
    %v597 = vsel %vm472, %v594, %v596
    %v598 = vrot.slane %v349, 1
    %v599 = vrot.slane %v350, 1
    %v600 = vsel %vm472, %v598, %v599
    %v601 = vrot.slane %v351, 1
    %v602 = vsel %vm472, %v599, %v601
    %v603 = vrot.slane %v352, 1
    %v604 = vrot.slane %v353, 1
    %v605 = vsel %vm472, %v603, %v604
    %v606 = vrot.slane %v354, 1
    %v607 = vsel %vm472, %v604, %v606
    %v608 = vrot.slane %v355, 1
    %v609 = vrot.slane %v356, 1
    %v610 = vsel %vm472, %v608, %v609
    %v611 = vrot.slane %v357, 1
    %v612 = vsel %vm472, %v609, %v611
    %v613 = vrot.slane %v358, 1
    %v614 = vrot.slane %v359, 1
    %v615 = vsel %vm472, %v613, %v614
    %v616 = vrot.slane %v360, 1
    %v617 = vsel %vm472, %v614, %v616
    %v618 = vrot.slane %v361, 1
    %v619 = vrot.slane %v362, 1
    %v620 = vsel %vm472, %v618, %v619
    %v621 = vrot.slane %v363, 1
    %v622 = vsel %vm472, %v619, %v621
    %v623 = vrot.slane %v364, 1
    %v624 = vrot.slane %v365, 1
    %v625 = vsel %vm472, %v623, %v624
    %v626 = vrot.slane %v366, 1
    %v627 = vsel %vm472, %v624, %v626
    %v628 = vrot.slane %v367, 1
    %v629 = vrot.slane %v368, 1
    %v630 = vsel %vm472, %v628, %v629
    %v631 = vrot.slane %v369, 1
    %v632 = vsel %vm472, %v629, %v631
    %633 = vrot.lane.b32.xlu0 %v475, 4
    %v634 = vpop.permute.xlu0 %633
    %635 = vrot.lane.b32.xlu0 %v477, 4
    %v636 = vpop.permute.xlu0 %635
    %637 = vrot.lane.b32.xlu0 %v480, 4
    %v638 = vpop.permute.xlu0 %637
    %639 = vrot.lane.b32.xlu0 %v482, 4
    %v640 = vpop.permute.xlu0 %639
    %641 = vrot.lane.b32.xlu0 %v485, 4
    %v642 = vpop.permute.xlu0 %641
    %643 = vrot.lane.b32.xlu0 %v487, 4
    %v644 = vpop.permute.xlu0 %643
    %645 = vrot.lane.b32.xlu0 %v490, 4
    %v646 = vpop.permute.xlu0 %645
    %647 = vrot.lane.b32.xlu0 %v492, 4
    %v648 = vpop.permute.xlu0 %647
    %649 = vrot.lane.b32.xlu0 %v495, 4
    %v650 = vpop.permute.xlu0 %649
    %651 = vrot.lane.b32.xlu0 %v497, 4
    %v652 = vpop.permute.xlu0 %651
    %653 = vrot.lane.b32.xlu0 %v500, 4
    %v654 = vpop.permute.xlu0 %653
    %655 = vrot.lane.b32.xlu0 %v502, 4
    %v656 = vpop.permute.xlu0 %655
    %657 = vrot.lane.b32.xlu0 %v505, 4
    %v658 = vpop.permute.xlu0 %657
    %659 = vrot.lane.b32.xlu0 %v507, 4
    %v660 = vpop.permute.xlu0 %659
    %661 = vrot.lane.b32.xlu0 %v510, 4
    %v662 = vpop.permute.xlu0 %661
    %663 = vrot.lane.b32.xlu0 %v512, 4
    %v664 = vpop.permute.xlu0 %663
    %665 = vrot.lane.b32.xlu0 %v515, 4
    %v666 = vpop.permute.xlu0 %665
    %667 = vrot.lane.b32.xlu0 %v517, 4
    %v668 = vpop.permute.xlu0 %667
    %669 = vrot.lane.b32.xlu0 %v520, 4
    %v670 = vpop.permute.xlu0 %669
    %671 = vrot.lane.b32.xlu0 %v522, 4
    %v672 = vpop.permute.xlu0 %671
    %673 = vrot.lane.b32.xlu0 %v525, 4
    %v674 = vpop.permute.xlu0 %673
    %675 = vrot.lane.b32.xlu0 %v527, 4
    %v676 = vpop.permute.xlu0 %675
    %677 = vrot.lane.b32.xlu0 %v530, 4
    %v678 = vpop.permute.xlu0 %677
    %679 = vrot.lane.b32.xlu0 %v532, 4
    %v680 = vpop.permute.xlu0 %679
    %681 = vrot.lane.b32.xlu0 %v535, 4
    %v682 = vpop.permute.xlu0 %681
    %683 = vrot.lane.b32.xlu0 %v537, 4
    %v684 = vpop.permute.xlu0 %683
    %685 = vrot.lane.b32.xlu0 %v540, 4
    %v686 = vpop.permute.xlu0 %685
    %687 = vrot.lane.b32.xlu0 %v542, 4
    %v688 = vpop.permute.xlu0 %687
    %689 = vrot.lane.b32.xlu0 %v545, 4
    %v690 = vpop.permute.xlu0 %689
    %691 = vrot.lane.b32.xlu0 %v547, 4
    %v692 = vpop.permute.xlu0 %691
    %693 = vrot.lane.b32.xlu0 %v550, 4
    %v694 = vpop.permute.xlu0 %693
    %695 = vrot.lane.b32.xlu0 %v552, 4
    %v696 = vpop.permute.xlu0 %695
    %697 = vrot.lane.b32.xlu0 %v555, 4
    %v698 = vpop.permute.xlu0 %697
    %699 = vrot.lane.b32.xlu0 %v557, 4
    %v700 = vpop.permute.xlu0 %699
    %701 = vrot.lane.b32.xlu0 %v560, 4
    %v702 = vpop.permute.xlu0 %701
    %703 = vrot.lane.b32.xlu0 %v562, 4
    %v704 = vpop.permute.xlu0 %703
    %705 = vrot.lane.b32.xlu0 %v565, 4
    %v706 = vpop.permute.xlu0 %705
    %707 = vrot.lane.b32.xlu0 %v567, 4
    %v708 = vpop.permute.xlu0 %707
    %709 = vrot.lane.b32.xlu0 %v570, 4
    %v710 = vpop.permute.xlu0 %709
    %711 = vrot.lane.b32.xlu0 %v572, 4
    %v712 = vpop.permute.xlu0 %711
    %713 = vrot.lane.b32.xlu0 %v575, 4
    %v714 = vpop.permute.xlu0 %713
    %715 = vrot.lane.b32.xlu0 %v577, 4
    %v716 = vpop.permute.xlu0 %715
    %717 = vrot.lane.b32.xlu0 %v580, 4
    %v718 = vpop.permute.xlu0 %717
    %719 = vrot.lane.b32.xlu0 %v582, 4
    %v720 = vpop.permute.xlu0 %719
    %721 = vrot.lane.b32.xlu0 %v585, 4
    %v722 = vpop.permute.xlu0 %721
    %723 = vrot.lane.b32.xlu0 %v587, 4
    %v724 = vpop.permute.xlu0 %723
    %725 = vrot.lane.b32.xlu0 %v590, 4
    %v726 = vpop.permute.xlu0 %725
    %727 = vrot.lane.b32.xlu0 %v592, 4
    %v728 = vpop.permute.xlu0 %727
    %729 = vrot.lane.b32.xlu0 %v595, 4
    %v730 = vpop.permute.xlu0 %729
    %731 = vrot.lane.b32.xlu0 %v597, 4
    %v732 = vpop.permute.xlu0 %731
    %733 = vrot.lane.b32.xlu0 %v600, 4
    %v734 = vpop.permute.xlu0 %733
    %735 = vrot.lane.b32.xlu0 %v602, 4
    %v736 = vpop.permute.xlu0 %735
    %737 = vrot.lane.b32.xlu0 %v605, 4
    %v738 = vpop.permute.xlu0 %737
    %739 = vrot.lane.b32.xlu0 %v607, 4
    %v740 = vpop.permute.xlu0 %739
    %741 = vrot.lane.b32.xlu0 %v610, 4
    %v742 = vpop.permute.xlu0 %741
    %743 = vrot.lane.b32.xlu0 %v612, 4
    %v744 = vpop.permute.xlu0 %743
    %745 = vrot.lane.b32.xlu0 %v615, 4
    %v746 = vpop.permute.xlu0 %745
    %747 = vrot.lane.b32.xlu0 %v617, 4
    %v748 = vpop.permute.xlu0 %747
    %749 = vrot.lane.b32.xlu0 %v620, 4
    %v750 = vpop.permute.xlu0 %749
    %751 = vrot.lane.b32.xlu0 %v622, 4
    %v752 = vpop.permute.xlu0 %751
    %753 = vrot.lane.b32.xlu0 %v625, 4
    %v754 = vpop.permute.xlu0 %753
    %755 = vrot.lane.b32.xlu0 %v627, 4
    %v756 = vpop.permute.xlu0 %755
    %757 = vrot.lane.b32.xlu0 %v630, 4
    %v758 = vpop.permute.xlu0 %757
    %759 = vrot.lane.b32.xlu0 %v632, 4
    %v760 = vpop.permute.xlu0 %759
    %vm825 = vcmask 1045504
    %v826 = vrot.slane %v268, 2
    %v827 = vrot.slane %v269, 2
    %v828 = vsel %vm825, %v826, %v827
    %v829 = vrot.slane %v270, 2
    %v830 = vsel %vm825, %v827, %v829
    %v831 = vrot.slane %v271, 2
    %v832 = vrot.slane %v272, 2
    %v833 = vsel %vm825, %v831, %v832
    %v834 = vrot.slane %v273, 2
    %v835 = vsel %vm825, %v832, %v834
    %v836 = vrot.slane %v274, 2
    %v837 = vrot.slane %v275, 2
    %v838 = vsel %vm825, %v836, %v837
    %v839 = vrot.slane %v276, 2
    %v840 = vsel %vm825, %v837, %v839
    %v841 = vrot.slane %v277, 2
    %v842 = vrot.slane %v278, 2
    %v843 = vsel %vm825, %v841, %v842
    %v844 = vrot.slane %v279, 2
    %v845 = vsel %vm825, %v842, %v844
    %v846 = vrot.slane %v280, 2
    %v847 = vrot.slane %v281, 2
    %v848 = vsel %vm825, %v846, %v847
    %v849 = vrot.slane %v282, 2
    %v850 = vsel %vm825, %v847, %v849
    %v851 = vrot.slane %v283, 2
    %v852 = vrot.slane %v284, 2
    %v853 = vsel %vm825, %v851, %v852
    %v854 = vrot.slane %v285, 2
    %v855 = vsel %vm825, %v852, %v854
    %v856 = vrot.slane %v286, 2
    %v857 = vrot.slane %v287, 2
    %v858 = vsel %vm825, %v856, %v857
    %v859 = vrot.slane %v288, 2
    %v860 = vsel %vm825, %v857, %v859
    %v861 = vrot.slane %v289, 2
    %v862 = vrot.slane %v290, 2
    %v863 = vsel %vm825, %v861, %v862
    %v864 = vrot.slane %v291, 2
    %v865 = vsel %vm825, %v862, %v864
    %v866 = vrot.slane %v292, 2
    %v867 = vrot.slane %v293, 2
    %v868 = vsel %vm825, %v866, %v867
    %v869 = vrot.slane %v294, 2
    %v870 = vsel %vm825, %v867, %v869
    %v871 = vrot.slane %v295, 2
    %v872 = vrot.slane %v296, 2
    %v873 = vsel %vm825, %v871, %v872
    %v874 = vrot.slane %v297, 2
    %v875 = vsel %vm825, %v872, %v874
    %v876 = vrot.slane %v298, 2
    %v877 = vrot.slane %v299, 2
    %v878 = vsel %vm825, %v876, %v877
    %v879 = vrot.slane %v300, 2
    %v880 = vsel %vm825, %v877, %v879
    %v881 = vrot.slane %v301, 2
    %v882 = vrot.slane %v302, 2
    %v883 = vsel %vm825, %v881, %v882
    %v884 = vrot.slane %v303, 2
    %v885 = vsel %vm825, %v882, %v884
    %v886 = vrot.slane %v304, 2
    %v887 = vrot.slane %v305, 2
    %v888 = vsel %vm825, %v886, %v887
    %v889 = vrot.slane %v306, 2
    %v890 = vsel %vm825, %v887, %v889
    %v891 = vrot.slane %v307, 2
    %v892 = vrot.slane %v308, 2
    %v893 = vsel %vm825, %v891, %v892
    %v894 = vrot.slane %v309, 2
    %v895 = vsel %vm825, %v892, %v894
    %v896 = vrot.slane %v310, 2
    %v897 = vrot.slane %v311, 2
    %v898 = vsel %vm825, %v896, %v897
    %v899 = vrot.slane %v312, 2
    %v900 = vsel %vm825, %v897, %v899
    %v901 = vrot.slane %v313, 2
    %v902 = vrot.slane %v314, 2
    %v903 = vsel %vm825, %v901, %v902
    %v904 = vrot.slane %v315, 2
    %v905 = vsel %vm825, %v902, %v904
    %v906 = vrot.slane %v322, 2
    %v907 = vrot.slane %v323, 2
    %v908 = vsel %vm825, %v906, %v907
    %v909 = vrot.slane %v324, 2
    %v910 = vsel %vm825, %v907, %v909
    %v911 = vrot.slane %v325, 2
    %v912 = vrot.slane %v326, 2
    %v913 = vsel %vm825, %v911, %v912
    %v914 = vrot.slane %v327, 2
    %v915 = vsel %vm825, %v912, %v914
    %v916 = vrot.slane %v328, 2
    %v917 = vrot.slane %v329, 2
    %v918 = vsel %vm825, %v916, %v917
    %v919 = vrot.slane %v330, 2
    %v920 = vsel %vm825, %v917, %v919
    %v921 = vrot.slane %v331, 2
    %v922 = vrot.slane %v332, 2
    %v923 = vsel %vm825, %v921, %v922
    %v924 = vrot.slane %v333, 2
    %v925 = vsel %vm825, %v922, %v924
    %v926 = vrot.slane %v334, 2
    %v927 = vrot.slane %v335, 2
    %v928 = vsel %vm825, %v926, %v927
    %v929 = vrot.slane %v336, 2
    %v930 = vsel %vm825, %v927, %v929
    %v931 = vrot.slane %v337, 2
    %v932 = vrot.slane %v338, 2
    %v933 = vsel %vm825, %v931, %v932
    %v934 = vrot.slane %v339, 2
    %v935 = vsel %vm825, %v932, %v934
    %v936 = vrot.slane %v340, 2
    %v937 = vrot.slane %v341, 2
    %v938 = vsel %vm825, %v936, %v937
    %v939 = vrot.slane %v342, 2
    %v940 = vsel %vm825, %v937, %v939
    %v941 = vrot.slane %v343, 2
    %v942 = vrot.slane %v344, 2
    %v943 = vsel %vm825, %v941, %v942
    %v944 = vrot.slane %v345, 2
    %v945 = vsel %vm825, %v942, %v944
    %v946 = vrot.slane %v346, 2
    %v947 = vrot.slane %v347, 2
    %v948 = vsel %vm825, %v946, %v947
    %v949 = vrot.slane %v348, 2
    %v950 = vsel %vm825, %v947, %v949
    %v951 = vrot.slane %v349, 2
    %v952 = vrot.slane %v350, 2
    %v953 = vsel %vm825, %v951, %v952
    %v954 = vrot.slane %v351, 2
    %v955 = vsel %vm825, %v952, %v954
    %v956 = vrot.slane %v352, 2
    %v957 = vrot.slane %v353, 2
    %v958 = vsel %vm825, %v956, %v957
    %v959 = vrot.slane %v354, 2
    %v960 = vsel %vm825, %v957, %v959
    %v961 = vrot.slane %v355, 2
    %v962 = vrot.slane %v356, 2
    %v963 = vsel %vm825, %v961, %v962
    %v964 = vrot.slane %v357, 2
    %v965 = vsel %vm825, %v962, %v964
    %v966 = vrot.slane %v358, 2
    %v967 = vrot.slane %v359, 2
    %v968 = vsel %vm825, %v966, %v967
    %v969 = vrot.slane %v360, 2
    %v970 = vsel %vm825, %v967, %v969
    %v971 = vrot.slane %v361, 2
    %v972 = vrot.slane %v362, 2
    %v973 = vsel %vm825, %v971, %v972
    %v974 = vrot.slane %v363, 2
    %v975 = vsel %vm825, %v972, %v974
    %v976 = vrot.slane %v364, 2
    %v977 = vrot.slane %v365, 2
    %v978 = vsel %vm825, %v976, %v977
    %v979 = vrot.slane %v366, 2
    %v980 = vsel %vm825, %v977, %v979
    %v981 = vrot.slane %v367, 2
    %v982 = vrot.slane %v368, 2
    %v983 = vsel %vm825, %v981, %v982
    %v984 = vrot.slane %v369, 2
    %v985 = vsel %vm825, %v982, %v984
    %986 = vrot.lane.b32.xlu0 %v828, 8
    %v987 = vpop.permute.xlu0 %986
    %988 = vrot.lane.b32.xlu0 %v830, 8
    %v989 = vpop.permute.xlu0 %988
    %990 = vrot.lane.b32.xlu0 %v833, 8
    %v991 = vpop.permute.xlu0 %990
    %992 = vrot.lane.b32.xlu0 %v835, 8
    %v993 = vpop.permute.xlu0 %992
    %994 = vrot.lane.b32.xlu0 %v838, 8
    %v995 = vpop.permute.xlu0 %994
    %996 = vrot.lane.b32.xlu0 %v840, 8
    %v997 = vpop.permute.xlu0 %996
    %998 = vrot.lane.b32.xlu0 %v843, 8
    %v999 = vpop.permute.xlu0 %998
    %1000 = vrot.lane.b32.xlu0 %v845, 8
    %v1001 = vpop.permute.xlu0 %1000
    %1002 = vrot.lane.b32.xlu0 %v848, 8
    %v1003 = vpop.permute.xlu0 %1002
    %1004 = vrot.lane.b32.xlu0 %v850, 8
    %v1005 = vpop.permute.xlu0 %1004
    %1006 = vrot.lane.b32.xlu0 %v853, 8
    %v1007 = vpop.permute.xlu0 %1006
    %1008 = vrot.lane.b32.xlu0 %v855, 8
    %v1009 = vpop.permute.xlu0 %1008
    %1010 = vrot.lane.b32.xlu0 %v858, 8
    %v1011 = vpop.permute.xlu0 %1010
    %1012 = vrot.lane.b32.xlu0 %v860, 8
    %v1013 = vpop.permute.xlu0 %1012
    %1014 = vrot.lane.b32.xlu0 %v863, 8
    %v1015 = vpop.permute.xlu0 %1014
    %1016 = vrot.lane.b32.xlu0 %v865, 8
    %v1017 = vpop.permute.xlu0 %1016
    %1018 = vrot.lane.b32.xlu0 %v868, 8
    %v1019 = vpop.permute.xlu0 %1018
    %1020 = vrot.lane.b32.xlu0 %v870, 8
    %v1021 = vpop.permute.xlu0 %1020
    %1022 = vrot.lane.b32.xlu0 %v873, 8
    %v1023 = vpop.permute.xlu0 %1022
    %1024 = vrot.lane.b32.xlu0 %v875, 8
    %v1025 = vpop.permute.xlu0 %1024
    %1026 = vrot.lane.b32.xlu0 %v878, 8
    %v1027 = vpop.permute.xlu0 %1026
    %1028 = vrot.lane.b32.xlu0 %v880, 8
    %v1029 = vpop.permute.xlu0 %1028
    %1030 = vrot.lane.b32.xlu0 %v883, 8
    %v1031 = vpop.permute.xlu0 %1030
    %1032 = vrot.lane.b32.xlu0 %v885, 8
    %v1033 = vpop.permute.xlu0 %1032
    %1034 = vrot.lane.b32.xlu0 %v888, 8
    %v1035 = vpop.permute.xlu0 %1034
    %1036 = vrot.lane.b32.xlu0 %v890, 8
    %v1037 = vpop.permute.xlu0 %1036
    %1038 = vrot.lane.b32.xlu0 %v893, 8
    %v1039 = vpop.permute.xlu0 %1038
    %1040 = vrot.lane.b32.xlu0 %v895, 8
    %v1041 = vpop.permute.xlu0 %1040
    %1042 = vrot.lane.b32.xlu0 %v898, 8
    %v1043 = vpop.permute.xlu0 %1042
    %1044 = vrot.lane.b32.xlu0 %v900, 8
    %v1045 = vpop.permute.xlu0 %1044
    %1046 = vrot.lane.b32.xlu0 %v903, 8
    %v1047 = vpop.permute.xlu0 %1046
    %1048 = vrot.lane.b32.xlu0 %v905, 8
    %v1049 = vpop.permute.xlu0 %1048
    %1050 = vrot.lane.b32.xlu0 %v908, 8
    %v1051 = vpop.permute.xlu0 %1050
    %1052 = vrot.lane.b32.xlu0 %v910, 8
    %v1053 = vpop.permute.xlu0 %1052
    %1054 = vrot.lane.b32.xlu0 %v913, 8
    %v1055 = vpop.permute.xlu0 %1054
    %1056 = vrot.lane.b32.xlu0 %v915, 8
    %v1057 = vpop.permute.xlu0 %1056
    %1058 = vrot.lane.b32.xlu0 %v918, 8
    %v1059 = vpop.permute.xlu0 %1058
    %1060 = vrot.lane.b32.xlu0 %v920, 8
    %v1061 = vpop.permute.xlu0 %1060
    %1062 = vrot.lane.b32.xlu0 %v923, 8
    %v1063 = vpop.permute.xlu0 %1062
    %1064 = vrot.lane.b32.xlu0 %v925, 8
    %v1065 = vpop.permute.xlu0 %1064
    %1066 = vrot.lane.b32.xlu0 %v928, 8
    %v1067 = vpop.permute.xlu0 %1066
    %1068 = vrot.lane.b32.xlu0 %v930, 8
    %v1069 = vpop.permute.xlu0 %1068
    %1070 = vrot.lane.b32.xlu0 %v933, 8
    %v1071 = vpop.permute.xlu0 %1070
    %1072 = vrot.lane.b32.xlu0 %v935, 8
    %v1073 = vpop.permute.xlu0 %1072
    %1074 = vrot.lane.b32.xlu0 %v938, 8
    %v1075 = vpop.permute.xlu0 %1074
    %1076 = vrot.lane.b32.xlu0 %v940, 8
    %v1077 = vpop.permute.xlu0 %1076
    %1078 = vrot.lane.b32.xlu0 %v943, 8
    %v1079 = vpop.permute.xlu0 %1078
    %1080 = vrot.lane.b32.xlu0 %v945, 8
    %v1081 = vpop.permute.xlu0 %1080
    %1082 = vrot.lane.b32.xlu0 %v948, 8
    %v1083 = vpop.permute.xlu0 %1082
    %1084 = vrot.lane.b32.xlu0 %v950, 8
    %v1085 = vpop.permute.xlu0 %1084
    %1086 = vrot.lane.b32.xlu0 %v953, 8
    %v1087 = vpop.permute.xlu0 %1086
    %1088 = vrot.lane.b32.xlu0 %v955, 8
    %v1089 = vpop.permute.xlu0 %1088
    %1090 = vrot.lane.b32.xlu0 %v958, 8
    %v1091 = vpop.permute.xlu0 %1090
    %1092 = vrot.lane.b32.xlu0 %v960, 8
    %v1093 = vpop.permute.xlu0 %1092
    %1094 = vrot.lane.b32.xlu0 %v963, 8
    %v1095 = vpop.permute.xlu0 %1094
    %1096 = vrot.lane.b32.xlu0 %v965, 8
    %v1097 = vpop.permute.xlu0 %1096
    %1098 = vrot.lane.b32.xlu0 %v968, 8
    %v1099 = vpop.permute.xlu0 %1098
    %1100 = vrot.lane.b32.xlu0 %v970, 8
    %v1101 = vpop.permute.xlu0 %1100
    %1102 = vrot.lane.b32.xlu0 %v973, 8
    %v1103 = vpop.permute.xlu0 %1102
    %1104 = vrot.lane.b32.xlu0 %v975, 8
    %v1105 = vpop.permute.xlu0 %1104
    %1106 = vrot.lane.b32.xlu0 %v978, 8
    %v1107 = vpop.permute.xlu0 %1106
    %1108 = vrot.lane.b32.xlu0 %v980, 8
    %v1109 = vpop.permute.xlu0 %1108
    %1110 = vrot.lane.b32.xlu0 %v983, 8
    %v1111 = vpop.permute.xlu0 %1110
    %1112 = vrot.lane.b32.xlu0 %v985, 8
    %v1113 = vpop.permute.xlu0 %1112
    %1182 = vrot.lane.b32.xlu0 %v271, 12
    %v1183 = vpop.permute.xlu0 %1182
    %1184 = vrot.lane.b32.xlu0 %v272, 12
    %v1185 = vpop.permute.xlu0 %1184
    %1186 = vrot.lane.b32.xlu0 %v274, 12
    %v1187 = vpop.permute.xlu0 %1186
    %1188 = vrot.lane.b32.xlu0 %v275, 12
    %v1189 = vpop.permute.xlu0 %1188
    %1190 = vrot.lane.b32.xlu0 %v277, 12
    %v1191 = vpop.permute.xlu0 %1190
    %1192 = vrot.lane.b32.xlu0 %v278, 12
    %v1193 = vpop.permute.xlu0 %1192
    %1194 = vrot.lane.b32.xlu0 %v280, 12
    %v1195 = vpop.permute.xlu0 %1194
    %1196 = vrot.lane.b32.xlu0 %v281, 12
    %v1197 = vpop.permute.xlu0 %1196
    %1198 = vrot.lane.b32.xlu0 %v283, 12
    %v1199 = vpop.permute.xlu0 %1198
    %1200 = vrot.lane.b32.xlu0 %v284, 12
    %v1201 = vpop.permute.xlu0 %1200
    %1202 = vrot.lane.b32.xlu0 %v286, 12
    %v1203 = vpop.permute.xlu0 %1202
    %1204 = vrot.lane.b32.xlu0 %v287, 12
    %v1205 = vpop.permute.xlu0 %1204
    %1206 = vrot.lane.b32.xlu0 %v289, 12
    %v1207 = vpop.permute.xlu0 %1206
    %1208 = vrot.lane.b32.xlu0 %v290, 12
    %v1209 = vpop.permute.xlu0 %1208
    %1210 = vrot.lane.b32.xlu0 %v292, 12
    %v1211 = vpop.permute.xlu0 %1210
    %1212 = vrot.lane.b32.xlu0 %v293, 12
    %v1213 = vpop.permute.xlu0 %1212
    %1214 = vrot.lane.b32.xlu0 %v295, 12
    %v1215 = vpop.permute.xlu0 %1214
    %1216 = vrot.lane.b32.xlu0 %v296, 12
    %v1217 = vpop.permute.xlu0 %1216
    %1218 = vrot.lane.b32.xlu0 %v298, 12
    %v1219 = vpop.permute.xlu0 %1218
    %1220 = vrot.lane.b32.xlu0 %v299, 12
    %v1221 = vpop.permute.xlu0 %1220
    %1222 = vrot.lane.b32.xlu0 %v301, 12
    %v1223 = vpop.permute.xlu0 %1222
    %1224 = vrot.lane.b32.xlu0 %v302, 12
    %v1225 = vpop.permute.xlu0 %1224
    %1226 = vrot.lane.b32.xlu0 %v304, 12
    %v1227 = vpop.permute.xlu0 %1226
    %1228 = vrot.lane.b32.xlu0 %v305, 12
    %v1229 = vpop.permute.xlu0 %1228
    %1230 = vrot.lane.b32.xlu0 %v307, 12
    %v1231 = vpop.permute.xlu0 %1230
    %1232 = vrot.lane.b32.xlu0 %v308, 12
    %v1233 = vpop.permute.xlu0 %1232
    %1234 = vrot.lane.b32.xlu0 %v310, 12
    %v1235 = vpop.permute.xlu0 %1234
    %1236 = vrot.lane.b32.xlu0 %v311, 12
    %v1237 = vpop.permute.xlu0 %1236
    %1238 = vrot.lane.b32.xlu0 %v313, 12
    %v1239 = vpop.permute.xlu0 %1238
    %1240 = vrot.lane.b32.xlu0 %v314, 12
    %v1241 = vpop.permute.xlu0 %1240
    %1242 = vrot.lane.b32.xlu0 %v316, 12
    %v1243 = vpop.permute.xlu0 %1242
    %1244 = vrot.lane.b32.xlu0 %v317, 12
    %v1245 = vpop.permute.xlu0 %1244
    %1246 = vrot.lane.b32.xlu0 %v325, 12
    %v1247 = vpop.permute.xlu0 %1246
    %1248 = vrot.lane.b32.xlu0 %v326, 12
    %v1249 = vpop.permute.xlu0 %1248
    %1250 = vrot.lane.b32.xlu0 %v328, 12
    %v1251 = vpop.permute.xlu0 %1250
    %1252 = vrot.lane.b32.xlu0 %v329, 12
    %v1253 = vpop.permute.xlu0 %1252
    %1254 = vrot.lane.b32.xlu0 %v331, 12
    %v1255 = vpop.permute.xlu0 %1254
    %1256 = vrot.lane.b32.xlu0 %v332, 12
    %v1257 = vpop.permute.xlu0 %1256
    %1258 = vrot.lane.b32.xlu0 %v334, 12
    %v1259 = vpop.permute.xlu0 %1258
    %1260 = vrot.lane.b32.xlu0 %v335, 12
    %v1261 = vpop.permute.xlu0 %1260
    %1262 = vrot.lane.b32.xlu0 %v337, 12
    %v1263 = vpop.permute.xlu0 %1262
    %1264 = vrot.lane.b32.xlu0 %v338, 12
    %v1265 = vpop.permute.xlu0 %1264
    %1266 = vrot.lane.b32.xlu0 %v340, 12
    %v1267 = vpop.permute.xlu0 %1266
    %1268 = vrot.lane.b32.xlu0 %v341, 12
    %v1269 = vpop.permute.xlu0 %1268
    %1270 = vrot.lane.b32.xlu0 %v343, 12
    %v1271 = vpop.permute.xlu0 %1270
    %1272 = vrot.lane.b32.xlu0 %v344, 12
    %v1273 = vpop.permute.xlu0 %1272
    %1274 = vrot.lane.b32.xlu0 %v346, 12
    %v1275 = vpop.permute.xlu0 %1274
    %1276 = vrot.lane.b32.xlu0 %v347, 12
    %v1277 = vpop.permute.xlu0 %1276
    %1278 = vrot.lane.b32.xlu0 %v349, 12
    %v1279 = vpop.permute.xlu0 %1278
    %1280 = vrot.lane.b32.xlu0 %v350, 12
    %v1281 = vpop.permute.xlu0 %1280
    %1282 = vrot.lane.b32.xlu0 %v352, 12
    %v1283 = vpop.permute.xlu0 %1282
    %1284 = vrot.lane.b32.xlu0 %v353, 12
    %v1285 = vpop.permute.xlu0 %1284
    %1286 = vrot.lane.b32.xlu0 %v355, 12
    %v1287 = vpop.permute.xlu0 %1286
    %1288 = vrot.lane.b32.xlu0 %v356, 12
    %v1289 = vpop.permute.xlu0 %1288
    %1290 = vrot.lane.b32.xlu0 %v358, 12
    %v1291 = vpop.permute.xlu0 %1290
    %1292 = vrot.lane.b32.xlu0 %v359, 12
    %v1293 = vpop.permute.xlu0 %1292
    %1294 = vrot.lane.b32.xlu0 %v361, 12
    %v1295 = vpop.permute.xlu0 %1294
    %1296 = vrot.lane.b32.xlu0 %v362, 12
    %v1297 = vpop.permute.xlu0 %1296
    %1298 = vrot.lane.b32.xlu0 %v364, 12
    %v1299 = vpop.permute.xlu0 %1298
    %1300 = vrot.lane.b32.xlu0 %v365, 12
    %v1301 = vpop.permute.xlu0 %1300
    %1302 = vrot.lane.b32.xlu0 %v367, 12
    %v1303 = vpop.permute.xlu0 %1302
    %1304 = vrot.lane.b32.xlu0 %v368, 12
    %v1305 = vpop.permute.xlu0 %1304
    %1306 = vrot.lane.b32.xlu0 %v370, 12
    %v1307 = vpop.permute.xlu0 %1306
    %1308 = vrot.lane.b32.xlu0 %v371, 12
    %v1309 = vpop.permute.xlu0 %1308
    %v1376 = vrot.slane %v316, 1
    %v1377 = vrot.slane %v317, 1
    %v1378 = vsel %vm472, %v1376, %v1377
    %v1379 = vrot.slane %v318, 1
    %v1380 = vsel %vm472, %v1377, %v1379
    %v1381 = vrot.slane %v370, 1
    %v1382 = vrot.slane %v371, 1
    %v1383 = vsel %vm472, %v1381, %v1382
    %v1384 = vrot.slane %v372, 1
    %v1385 = vsel %vm472, %v1382, %v1384
    %1386 = vrot.lane.b32.xlu0 %v480, 16
    %v1387 = vpop.permute.xlu0 %1386
    %1388 = vrot.lane.b32.xlu0 %v482, 16
    %v1389 = vpop.permute.xlu0 %1388
    %1390 = vrot.lane.b32.xlu0 %v485, 16
    %v1391 = vpop.permute.xlu0 %1390
    %1392 = vrot.lane.b32.xlu0 %v487, 16
    %v1393 = vpop.permute.xlu0 %1392
    %1394 = vrot.lane.b32.xlu0 %v490, 16
    %v1395 = vpop.permute.xlu0 %1394
    %1396 = vrot.lane.b32.xlu0 %v492, 16
    %v1397 = vpop.permute.xlu0 %1396
    %1398 = vrot.lane.b32.xlu0 %v495, 16
    %v1399 = vpop.permute.xlu0 %1398
    %1400 = vrot.lane.b32.xlu0 %v497, 16
    %v1401 = vpop.permute.xlu0 %1400
    %1402 = vrot.lane.b32.xlu0 %v500, 16
    %v1403 = vpop.permute.xlu0 %1402
    %1404 = vrot.lane.b32.xlu0 %v502, 16
    %v1405 = vpop.permute.xlu0 %1404
    %1406 = vrot.lane.b32.xlu0 %v505, 16
    %v1407 = vpop.permute.xlu0 %1406
    %1408 = vrot.lane.b32.xlu0 %v507, 16
    %v1409 = vpop.permute.xlu0 %1408
    %1410 = vrot.lane.b32.xlu0 %v510, 16
    %v1411 = vpop.permute.xlu0 %1410
    %1412 = vrot.lane.b32.xlu0 %v512, 16
    %v1413 = vpop.permute.xlu0 %1412
    %1414 = vrot.lane.b32.xlu0 %v515, 16
    %v1415 = vpop.permute.xlu0 %1414
    %1416 = vrot.lane.b32.xlu0 %v517, 16
    %v1417 = vpop.permute.xlu0 %1416
    %1418 = vrot.lane.b32.xlu0 %v520, 16
    %v1419 = vpop.permute.xlu0 %1418
    %1420 = vrot.lane.b32.xlu0 %v522, 16
    %v1421 = vpop.permute.xlu0 %1420
    %1422 = vrot.lane.b32.xlu0 %v525, 16
    %v1423 = vpop.permute.xlu0 %1422
    %1424 = vrot.lane.b32.xlu0 %v527, 16
    %v1425 = vpop.permute.xlu0 %1424
    %1426 = vrot.lane.b32.xlu0 %v530, 16
    %v1427 = vpop.permute.xlu0 %1426
    %1428 = vrot.lane.b32.xlu0 %v532, 16
    %v1429 = vpop.permute.xlu0 %1428
    %1430 = vrot.lane.b32.xlu0 %v535, 16
    %v1431 = vpop.permute.xlu0 %1430
    %1432 = vrot.lane.b32.xlu0 %v537, 16
    %v1433 = vpop.permute.xlu0 %1432
    %1434 = vrot.lane.b32.xlu0 %v540, 16
    %v1435 = vpop.permute.xlu0 %1434
    %1436 = vrot.lane.b32.xlu0 %v542, 16
    %v1437 = vpop.permute.xlu0 %1436
    %1438 = vrot.lane.b32.xlu0 %v545, 16
    %v1439 = vpop.permute.xlu0 %1438
    %1440 = vrot.lane.b32.xlu0 %v547, 16
    %v1441 = vpop.permute.xlu0 %1440
    %1442 = vrot.lane.b32.xlu0 %v550, 16
    %v1443 = vpop.permute.xlu0 %1442
    %1444 = vrot.lane.b32.xlu0 %v552, 16
    %v1445 = vpop.permute.xlu0 %1444
    %1446 = vrot.lane.b32.xlu0 %v1378, 16
    %v1447 = vpop.permute.xlu0 %1446
    %1448 = vrot.lane.b32.xlu0 %v1380, 16
    %v1449 = vpop.permute.xlu0 %1448
    %1450 = vrot.lane.b32.xlu0 %v560, 16
    %v1451 = vpop.permute.xlu0 %1450
    %1452 = vrot.lane.b32.xlu0 %v562, 16
    %v1453 = vpop.permute.xlu0 %1452
    %1454 = vrot.lane.b32.xlu0 %v565, 16
    %v1455 = vpop.permute.xlu0 %1454
    %1456 = vrot.lane.b32.xlu0 %v567, 16
    %v1457 = vpop.permute.xlu0 %1456
    %1458 = vrot.lane.b32.xlu0 %v570, 16
    %v1459 = vpop.permute.xlu0 %1458
    %1460 = vrot.lane.b32.xlu0 %v572, 16
    %v1461 = vpop.permute.xlu0 %1460
    %1462 = vrot.lane.b32.xlu0 %v575, 16
    %v1463 = vpop.permute.xlu0 %1462
    %1464 = vrot.lane.b32.xlu0 %v577, 16
    %v1465 = vpop.permute.xlu0 %1464
    %1466 = vrot.lane.b32.xlu0 %v580, 16
    %v1467 = vpop.permute.xlu0 %1466
    %1468 = vrot.lane.b32.xlu0 %v582, 16
    %v1469 = vpop.permute.xlu0 %1468
    %1470 = vrot.lane.b32.xlu0 %v585, 16
    %v1471 = vpop.permute.xlu0 %1470
    %1472 = vrot.lane.b32.xlu0 %v587, 16
    %v1473 = vpop.permute.xlu0 %1472
    %1474 = vrot.lane.b32.xlu0 %v590, 16
    %v1475 = vpop.permute.xlu0 %1474
    %1476 = vrot.lane.b32.xlu0 %v592, 16
    %v1477 = vpop.permute.xlu0 %1476
    %1478 = vrot.lane.b32.xlu0 %v595, 16
    %v1479 = vpop.permute.xlu0 %1478
    %1480 = vrot.lane.b32.xlu0 %v597, 16
    %v1481 = vpop.permute.xlu0 %1480
    %1482 = vrot.lane.b32.xlu0 %v600, 16
    %v1483 = vpop.permute.xlu0 %1482
    %1484 = vrot.lane.b32.xlu0 %v602, 16
    %v1485 = vpop.permute.xlu0 %1484
    %1486 = vrot.lane.b32.xlu0 %v605, 16
    %v1487 = vpop.permute.xlu0 %1486
    %1488 = vrot.lane.b32.xlu0 %v607, 16
    %v1489 = vpop.permute.xlu0 %1488
    %1490 = vrot.lane.b32.xlu0 %v610, 16
    %v1491 = vpop.permute.xlu0 %1490
    %1492 = vrot.lane.b32.xlu0 %v612, 16
    %v1493 = vpop.permute.xlu0 %1492
    %1494 = vrot.lane.b32.xlu0 %v615, 16
    %v1495 = vpop.permute.xlu0 %1494
    %1496 = vrot.lane.b32.xlu0 %v617, 16
    %v1497 = vpop.permute.xlu0 %1496
    %1498 = vrot.lane.b32.xlu0 %v620, 16
    %v1499 = vpop.permute.xlu0 %1498
    %1500 = vrot.lane.b32.xlu0 %v622, 16
    %v1501 = vpop.permute.xlu0 %1500
    %1502 = vrot.lane.b32.xlu0 %v625, 16
    %v1503 = vpop.permute.xlu0 %1502
    %1504 = vrot.lane.b32.xlu0 %v627, 16
    %v1505 = vpop.permute.xlu0 %1504
    %1506 = vrot.lane.b32.xlu0 %v630, 16
    %v1507 = vpop.permute.xlu0 %1506
    %1508 = vrot.lane.b32.xlu0 %v632, 16
    %v1509 = vpop.permute.xlu0 %1508
    %1510 = vrot.lane.b32.xlu0 %v1383, 16
    %v1511 = vpop.permute.xlu0 %1510
    %1512 = vrot.lane.b32.xlu0 %v1385, 16
    %v1513 = vpop.permute.xlu0 %1512
    %v1578 = vrot.slane %v316, 2
    %v1579 = vrot.slane %v317, 2
    %v1580 = vsel %vm825, %v1578, %v1579
    %v1581 = vrot.slane %v318, 2
    %v1582 = vsel %vm825, %v1579, %v1581
    %v1583 = vrot.slane %v370, 2
    %v1584 = vrot.slane %v371, 2
    %v1585 = vsel %vm825, %v1583, %v1584
    %v1586 = vrot.slane %v372, 2
    %v1587 = vsel %vm825, %v1584, %v1586
    %1588 = vrot.lane.b32.xlu0 %v833, 20
    %v1589 = vpop.permute.xlu0 %1588
    %1590 = vrot.lane.b32.xlu0 %v835, 20
    %v1591 = vpop.permute.xlu0 %1590
    %1592 = vrot.lane.b32.xlu0 %v838, 20
    %v1593 = vpop.permute.xlu0 %1592
    %1594 = vrot.lane.b32.xlu0 %v840, 20
    %v1595 = vpop.permute.xlu0 %1594
    %1596 = vrot.lane.b32.xlu0 %v843, 20
    %v1597 = vpop.permute.xlu0 %1596
    %1598 = vrot.lane.b32.xlu0 %v845, 20
    %v1599 = vpop.permute.xlu0 %1598
    %1600 = vrot.lane.b32.xlu0 %v848, 20
    %v1601 = vpop.permute.xlu0 %1600
    %1602 = vrot.lane.b32.xlu0 %v850, 20
    %v1603 = vpop.permute.xlu0 %1602
    %1604 = vrot.lane.b32.xlu0 %v853, 20
    %v1605 = vpop.permute.xlu0 %1604
    %1606 = vrot.lane.b32.xlu0 %v855, 20
    %v1607 = vpop.permute.xlu0 %1606
    %1608 = vrot.lane.b32.xlu0 %v858, 20
    %v1609 = vpop.permute.xlu0 %1608
    %1610 = vrot.lane.b32.xlu0 %v860, 20
    %v1611 = vpop.permute.xlu0 %1610
    %1612 = vrot.lane.b32.xlu0 %v863, 20
    %v1613 = vpop.permute.xlu0 %1612
    %1614 = vrot.lane.b32.xlu0 %v865, 20
    %v1615 = vpop.permute.xlu0 %1614
    %1616 = vrot.lane.b32.xlu0 %v868, 20
    %v1617 = vpop.permute.xlu0 %1616
    %1618 = vrot.lane.b32.xlu0 %v870, 20
    %v1619 = vpop.permute.xlu0 %1618
    %1620 = vrot.lane.b32.xlu0 %v873, 20
    %v1621 = vpop.permute.xlu0 %1620
    %1622 = vrot.lane.b32.xlu0 %v875, 20
    %v1623 = vpop.permute.xlu0 %1622
    %1624 = vrot.lane.b32.xlu0 %v878, 20
    %v1625 = vpop.permute.xlu0 %1624
    %1626 = vrot.lane.b32.xlu0 %v880, 20
    %v1627 = vpop.permute.xlu0 %1626
    %1628 = vrot.lane.b32.xlu0 %v883, 20
    %v1629 = vpop.permute.xlu0 %1628
    %1630 = vrot.lane.b32.xlu0 %v885, 20
    %v1631 = vpop.permute.xlu0 %1630
    %1632 = vrot.lane.b32.xlu0 %v888, 20
    %v1633 = vpop.permute.xlu0 %1632
    %1634 = vrot.lane.b32.xlu0 %v890, 20
    %v1635 = vpop.permute.xlu0 %1634
    %1636 = vrot.lane.b32.xlu0 %v893, 20
    %v1637 = vpop.permute.xlu0 %1636
    %1638 = vrot.lane.b32.xlu0 %v895, 20
    %v1639 = vpop.permute.xlu0 %1638
    %1640 = vrot.lane.b32.xlu0 %v898, 20
    %v1641 = vpop.permute.xlu0 %1640
    %1642 = vrot.lane.b32.xlu0 %v900, 20
    %v1643 = vpop.permute.xlu0 %1642
    %1644 = vrot.lane.b32.xlu0 %v903, 20
    %v1645 = vpop.permute.xlu0 %1644
    %1646 = vrot.lane.b32.xlu0 %v905, 20
    %v1647 = vpop.permute.xlu0 %1646
    %1648 = vrot.lane.b32.xlu0 %v1580, 20
    %v1649 = vpop.permute.xlu0 %1648
    %1650 = vrot.lane.b32.xlu0 %v1582, 20
    %v1651 = vpop.permute.xlu0 %1650
    %1652 = vrot.lane.b32.xlu0 %v913, 20
    %v1653 = vpop.permute.xlu0 %1652
    %1654 = vrot.lane.b32.xlu0 %v915, 20
    %v1655 = vpop.permute.xlu0 %1654
    %1656 = vrot.lane.b32.xlu0 %v918, 20
    %v1657 = vpop.permute.xlu0 %1656
    %1658 = vrot.lane.b32.xlu0 %v920, 20
    %v1659 = vpop.permute.xlu0 %1658
    %1660 = vrot.lane.b32.xlu0 %v923, 20
    %v1661 = vpop.permute.xlu0 %1660
    %1662 = vrot.lane.b32.xlu0 %v925, 20
    %v1663 = vpop.permute.xlu0 %1662
    %1664 = vrot.lane.b32.xlu0 %v928, 20
    %v1665 = vpop.permute.xlu0 %1664
    %1666 = vrot.lane.b32.xlu0 %v930, 20
    %v1667 = vpop.permute.xlu0 %1666
    %1668 = vrot.lane.b32.xlu0 %v933, 20
    %v1669 = vpop.permute.xlu0 %1668
    %1670 = vrot.lane.b32.xlu0 %v935, 20
    %v1671 = vpop.permute.xlu0 %1670
    %1672 = vrot.lane.b32.xlu0 %v938, 20
    %v1673 = vpop.permute.xlu0 %1672
    %1674 = vrot.lane.b32.xlu0 %v940, 20
    %v1675 = vpop.permute.xlu0 %1674
    %1676 = vrot.lane.b32.xlu0 %v943, 20
    %v1677 = vpop.permute.xlu0 %1676
    %1678 = vrot.lane.b32.xlu0 %v945, 20
    %v1679 = vpop.permute.xlu0 %1678
    %1680 = vrot.lane.b32.xlu0 %v948, 20
    %v1681 = vpop.permute.xlu0 %1680
    %1682 = vrot.lane.b32.xlu0 %v950, 20
    %v1683 = vpop.permute.xlu0 %1682
    %1684 = vrot.lane.b32.xlu0 %v953, 20
    %v1685 = vpop.permute.xlu0 %1684
    %1686 = vrot.lane.b32.xlu0 %v955, 20
    %v1687 = vpop.permute.xlu0 %1686
    %1688 = vrot.lane.b32.xlu0 %v958, 20
    %v1689 = vpop.permute.xlu0 %1688
    %1690 = vrot.lane.b32.xlu0 %v960, 20
    %v1691 = vpop.permute.xlu0 %1690
    %1692 = vrot.lane.b32.xlu0 %v963, 20
    %v1693 = vpop.permute.xlu0 %1692
    %1694 = vrot.lane.b32.xlu0 %v965, 20
    %v1695 = vpop.permute.xlu0 %1694
    %1696 = vrot.lane.b32.xlu0 %v968, 20
    %v1697 = vpop.permute.xlu0 %1696
    %1698 = vrot.lane.b32.xlu0 %v970, 20
    %v1699 = vpop.permute.xlu0 %1698
    %1700 = vrot.lane.b32.xlu0 %v973, 20
    %v1701 = vpop.permute.xlu0 %1700
    %1702 = vrot.lane.b32.xlu0 %v975, 20
    %v1703 = vpop.permute.xlu0 %1702
    %1704 = vrot.lane.b32.xlu0 %v978, 20
    %v1705 = vpop.permute.xlu0 %1704
    %1706 = vrot.lane.b32.xlu0 %v980, 20
    %v1707 = vpop.permute.xlu0 %1706
    %1708 = vrot.lane.b32.xlu0 %v983, 20
    %v1709 = vpop.permute.xlu0 %1708
    %1710 = vrot.lane.b32.xlu0 %v985, 20
    %v1711 = vpop.permute.xlu0 %1710
    %1712 = vrot.lane.b32.xlu0 %v1585, 20
    %v1713 = vpop.permute.xlu0 %1712
    %1714 = vrot.lane.b32.xlu0 %v1587, 20
    %v1715 = vpop.permute.xlu0 %1714
    %1784 = vrot.lane.b32.xlu0 %v274, 24
    %v1785 = vpop.permute.xlu0 %1784
    %1786 = vrot.lane.b32.xlu0 %v275, 24
    %v1787 = vpop.permute.xlu0 %1786
    %1788 = vrot.lane.b32.xlu0 %v277, 24
    %v1789 = vpop.permute.xlu0 %1788
    %1790 = vrot.lane.b32.xlu0 %v278, 24
    %v1791 = vpop.permute.xlu0 %1790
    %1792 = vrot.lane.b32.xlu0 %v280, 24
    %v1793 = vpop.permute.xlu0 %1792
    %1794 = vrot.lane.b32.xlu0 %v281, 24
    %v1795 = vpop.permute.xlu0 %1794
    %1796 = vrot.lane.b32.xlu0 %v283, 24
    %v1797 = vpop.permute.xlu0 %1796
    %1798 = vrot.lane.b32.xlu0 %v284, 24
    %v1799 = vpop.permute.xlu0 %1798
    %1800 = vrot.lane.b32.xlu0 %v286, 24
    %v1801 = vpop.permute.xlu0 %1800
    %1802 = vrot.lane.b32.xlu0 %v287, 24
    %v1803 = vpop.permute.xlu0 %1802
    %1804 = vrot.lane.b32.xlu0 %v289, 24
    %v1805 = vpop.permute.xlu0 %1804
    %1806 = vrot.lane.b32.xlu0 %v290, 24
    %v1807 = vpop.permute.xlu0 %1806
    %1808 = vrot.lane.b32.xlu0 %v292, 24
    %v1809 = vpop.permute.xlu0 %1808
    %1810 = vrot.lane.b32.xlu0 %v293, 24
    %v1811 = vpop.permute.xlu0 %1810
    %1812 = vrot.lane.b32.xlu0 %v295, 24
    %v1813 = vpop.permute.xlu0 %1812
    %1814 = vrot.lane.b32.xlu0 %v296, 24
    %v1815 = vpop.permute.xlu0 %1814
    %1816 = vrot.lane.b32.xlu0 %v298, 24
    %v1817 = vpop.permute.xlu0 %1816
    %1818 = vrot.lane.b32.xlu0 %v299, 24
    %v1819 = vpop.permute.xlu0 %1818
    %1820 = vrot.lane.b32.xlu0 %v301, 24
    %v1821 = vpop.permute.xlu0 %1820
    %1822 = vrot.lane.b32.xlu0 %v302, 24
    %v1823 = vpop.permute.xlu0 %1822
    %1824 = vrot.lane.b32.xlu0 %v304, 24
    %v1825 = vpop.permute.xlu0 %1824
    %1826 = vrot.lane.b32.xlu0 %v305, 24
    %v1827 = vpop.permute.xlu0 %1826
    %1828 = vrot.lane.b32.xlu0 %v307, 24
    %v1829 = vpop.permute.xlu0 %1828
    %1830 = vrot.lane.b32.xlu0 %v308, 24
    %v1831 = vpop.permute.xlu0 %1830
    %1832 = vrot.lane.b32.xlu0 %v310, 24
    %v1833 = vpop.permute.xlu0 %1832
    %1834 = vrot.lane.b32.xlu0 %v311, 24
    %v1835 = vpop.permute.xlu0 %1834
    %1836 = vrot.lane.b32.xlu0 %v313, 24
    %v1837 = vpop.permute.xlu0 %1836
    %1838 = vrot.lane.b32.xlu0 %v314, 24
    %v1839 = vpop.permute.xlu0 %1838
    %1840 = vrot.lane.b32.xlu0 %v316, 24
    %v1841 = vpop.permute.xlu0 %1840
    %1842 = vrot.lane.b32.xlu0 %v317, 24
    %v1843 = vpop.permute.xlu0 %1842
    %1844 = vrot.lane.b32.xlu0 %v319, 24
    %v1845 = vpop.permute.xlu0 %1844
    %1846 = vrot.lane.b32.xlu0 %v320, 24
    %v1847 = vpop.permute.xlu0 %1846
    %1848 = vrot.lane.b32.xlu0 %v328, 24
    %v1849 = vpop.permute.xlu0 %1848
    %1850 = vrot.lane.b32.xlu0 %v329, 24
    %v1851 = vpop.permute.xlu0 %1850
    %1852 = vrot.lane.b32.xlu0 %v331, 24
    %v1853 = vpop.permute.xlu0 %1852
    %1854 = vrot.lane.b32.xlu0 %v332, 24
    %v1855 = vpop.permute.xlu0 %1854
    %1856 = vrot.lane.b32.xlu0 %v334, 24
    %v1857 = vpop.permute.xlu0 %1856
    %1858 = vrot.lane.b32.xlu0 %v335, 24
    %v1859 = vpop.permute.xlu0 %1858
    %1860 = vrot.lane.b32.xlu0 %v337, 24
    %v1861 = vpop.permute.xlu0 %1860
    %1862 = vrot.lane.b32.xlu0 %v338, 24
    %v1863 = vpop.permute.xlu0 %1862
    %1864 = vrot.lane.b32.xlu0 %v340, 24
    %v1865 = vpop.permute.xlu0 %1864
    %1866 = vrot.lane.b32.xlu0 %v341, 24
    %v1867 = vpop.permute.xlu0 %1866
    %1868 = vrot.lane.b32.xlu0 %v343, 24
    %v1869 = vpop.permute.xlu0 %1868
    %1870 = vrot.lane.b32.xlu0 %v344, 24
    %v1871 = vpop.permute.xlu0 %1870
    %1872 = vrot.lane.b32.xlu0 %v346, 24
    %v1873 = vpop.permute.xlu0 %1872
    %1874 = vrot.lane.b32.xlu0 %v347, 24
    %v1875 = vpop.permute.xlu0 %1874
    %1876 = vrot.lane.b32.xlu0 %v349, 24
    %v1877 = vpop.permute.xlu0 %1876
    %1878 = vrot.lane.b32.xlu0 %v350, 24
    %v1879 = vpop.permute.xlu0 %1878
    %1880 = vrot.lane.b32.xlu0 %v352, 24
    %v1881 = vpop.permute.xlu0 %1880
    %1882 = vrot.lane.b32.xlu0 %v353, 24
    %v1883 = vpop.permute.xlu0 %1882
    %1884 = vrot.lane.b32.xlu0 %v355, 24
    %v1885 = vpop.permute.xlu0 %1884
    %1886 = vrot.lane.b32.xlu0 %v356, 24
    %v1887 = vpop.permute.xlu0 %1886
    %1888 = vrot.lane.b32.xlu0 %v358, 24
    %v1889 = vpop.permute.xlu0 %1888
    %1890 = vrot.lane.b32.xlu0 %v359, 24
    %v1891 = vpop.permute.xlu0 %1890
    %1892 = vrot.lane.b32.xlu0 %v361, 24
    %v1893 = vpop.permute.xlu0 %1892
    %1894 = vrot.lane.b32.xlu0 %v362, 24
    %v1895 = vpop.permute.xlu0 %1894
    %1896 = vrot.lane.b32.xlu0 %v364, 24
    %v1897 = vpop.permute.xlu0 %1896
    %1898 = vrot.lane.b32.xlu0 %v365, 24
    %v1899 = vpop.permute.xlu0 %1898
    %1900 = vrot.lane.b32.xlu0 %v367, 24
    %v1901 = vpop.permute.xlu0 %1900
    %1902 = vrot.lane.b32.xlu0 %v368, 24
    %v1903 = vpop.permute.xlu0 %1902
    %1904 = vrot.lane.b32.xlu0 %v370, 24
    %v1905 = vpop.permute.xlu0 %1904
    %1906 = vrot.lane.b32.xlu0 %v371, 24
    %v1907 = vpop.permute.xlu0 %1906
    %1908 = vrot.lane.b32.xlu0 %v373, 24
    %v1909 = vpop.permute.xlu0 %1908
    %1910 = vrot.lane.b32.xlu0 %v374, 24
    %v1911 = vpop.permute.xlu0 %1910
    %v1978 = vrot.slane %v319, 1
    %v1979 = vrot.slane %v320, 1
    %v1980 = vsel %vm472, %v1978, %v1979
    %v1981 = vrot.slane %v321, 1
    %v1982 = vsel %vm472, %v1979, %v1981
    %v1983 = vrot.slane %v373, 1
    %v1984 = vrot.slane %v374, 1
    %v1985 = vsel %vm472, %v1983, %v1984
    %v1986 = vrot.slane %v375, 1
    %v1987 = vsel %vm472, %v1984, %v1986
    %1988 = vrot.lane.b32.xlu0 %v485, 28
    %v1989 = vpop.permute.xlu0 %1988
    %1990 = vrot.lane.b32.xlu0 %v487, 28
    %v1991 = vpop.permute.xlu0 %1990
    %1992 = vrot.lane.b32.xlu0 %v490, 28
    %v1993 = vpop.permute.xlu0 %1992
    %1994 = vrot.lane.b32.xlu0 %v492, 28
    %v1995 = vpop.permute.xlu0 %1994
    %1996 = vrot.lane.b32.xlu0 %v495, 28
    %v1997 = vpop.permute.xlu0 %1996
    %1998 = vrot.lane.b32.xlu0 %v497, 28
    %v1999 = vpop.permute.xlu0 %1998
    %2000 = vrot.lane.b32.xlu0 %v500, 28
    %v2001 = vpop.permute.xlu0 %2000
    %2002 = vrot.lane.b32.xlu0 %v502, 28
    %v2003 = vpop.permute.xlu0 %2002
    %2004 = vrot.lane.b32.xlu0 %v505, 28
    %v2005 = vpop.permute.xlu0 %2004
    %2006 = vrot.lane.b32.xlu0 %v507, 28
    %v2007 = vpop.permute.xlu0 %2006
    %2008 = vrot.lane.b32.xlu0 %v510, 28
    %v2009 = vpop.permute.xlu0 %2008
    %2010 = vrot.lane.b32.xlu0 %v512, 28
    %v2011 = vpop.permute.xlu0 %2010
    %2012 = vrot.lane.b32.xlu0 %v515, 28
    %v2013 = vpop.permute.xlu0 %2012
    %2014 = vrot.lane.b32.xlu0 %v517, 28
    %v2015 = vpop.permute.xlu0 %2014
    %2016 = vrot.lane.b32.xlu0 %v520, 28
    %v2017 = vpop.permute.xlu0 %2016
    %2018 = vrot.lane.b32.xlu0 %v522, 28
    %v2019 = vpop.permute.xlu0 %2018
    %2020 = vrot.lane.b32.xlu0 %v525, 28
    %v2021 = vpop.permute.xlu0 %2020
    %2022 = vrot.lane.b32.xlu0 %v527, 28
    %v2023 = vpop.permute.xlu0 %2022
    %2024 = vrot.lane.b32.xlu0 %v530, 28
    %v2025 = vpop.permute.xlu0 %2024
    %2026 = vrot.lane.b32.xlu0 %v532, 28
    %v2027 = vpop.permute.xlu0 %2026
    %2028 = vrot.lane.b32.xlu0 %v535, 28
    %v2029 = vpop.permute.xlu0 %2028
    %2030 = vrot.lane.b32.xlu0 %v537, 28
    %v2031 = vpop.permute.xlu0 %2030
    %2032 = vrot.lane.b32.xlu0 %v540, 28
    %v2033 = vpop.permute.xlu0 %2032
    %2034 = vrot.lane.b32.xlu0 %v542, 28
    %v2035 = vpop.permute.xlu0 %2034
    %2036 = vrot.lane.b32.xlu0 %v545, 28
    %v2037 = vpop.permute.xlu0 %2036
    %2038 = vrot.lane.b32.xlu0 %v547, 28
    %v2039 = vpop.permute.xlu0 %2038
    %2040 = vrot.lane.b32.xlu0 %v550, 28
    %v2041 = vpop.permute.xlu0 %2040
    %2042 = vrot.lane.b32.xlu0 %v552, 28
    %v2043 = vpop.permute.xlu0 %2042
    %2044 = vrot.lane.b32.xlu0 %v1378, 28
    %v2045 = vpop.permute.xlu0 %2044
    %2046 = vrot.lane.b32.xlu0 %v1380, 28
    %v2047 = vpop.permute.xlu0 %2046
    %2048 = vrot.lane.b32.xlu0 %v1980, 28
    %v2049 = vpop.permute.xlu0 %2048
    %2050 = vrot.lane.b32.xlu0 %v1982, 28
    %v2051 = vpop.permute.xlu0 %2050
    %2052 = vrot.lane.b32.xlu0 %v565, 28
    %v2053 = vpop.permute.xlu0 %2052
    %2054 = vrot.lane.b32.xlu0 %v567, 28
    %v2055 = vpop.permute.xlu0 %2054
    %2056 = vrot.lane.b32.xlu0 %v570, 28
    %v2057 = vpop.permute.xlu0 %2056
    %2058 = vrot.lane.b32.xlu0 %v572, 28
    %v2059 = vpop.permute.xlu0 %2058
    %2060 = vrot.lane.b32.xlu0 %v575, 28
    %v2061 = vpop.permute.xlu0 %2060
    %2062 = vrot.lane.b32.xlu0 %v577, 28
    %v2063 = vpop.permute.xlu0 %2062
    %2064 = vrot.lane.b32.xlu0 %v580, 28
    %v2065 = vpop.permute.xlu0 %2064
    %2066 = vrot.lane.b32.xlu0 %v582, 28
    %v2067 = vpop.permute.xlu0 %2066
    %2068 = vrot.lane.b32.xlu0 %v585, 28
    %v2069 = vpop.permute.xlu0 %2068
    %2070 = vrot.lane.b32.xlu0 %v587, 28
    %v2071 = vpop.permute.xlu0 %2070
    %2072 = vrot.lane.b32.xlu0 %v590, 28
    %v2073 = vpop.permute.xlu0 %2072
    %2074 = vrot.lane.b32.xlu0 %v592, 28
    %v2075 = vpop.permute.xlu0 %2074
    %2076 = vrot.lane.b32.xlu0 %v595, 28
    %v2077 = vpop.permute.xlu0 %2076
    %2078 = vrot.lane.b32.xlu0 %v597, 28
    %v2079 = vpop.permute.xlu0 %2078
    %2080 = vrot.lane.b32.xlu0 %v600, 28
    %v2081 = vpop.permute.xlu0 %2080
    %2082 = vrot.lane.b32.xlu0 %v602, 28
    %v2083 = vpop.permute.xlu0 %2082
    %2084 = vrot.lane.b32.xlu0 %v605, 28
    %v2085 = vpop.permute.xlu0 %2084
    %2086 = vrot.lane.b32.xlu0 %v607, 28
    %v2087 = vpop.permute.xlu0 %2086
    %2088 = vrot.lane.b32.xlu0 %v610, 28
    %v2089 = vpop.permute.xlu0 %2088
    %2090 = vrot.lane.b32.xlu0 %v612, 28
    %v2091 = vpop.permute.xlu0 %2090
    %2092 = vrot.lane.b32.xlu0 %v615, 28
    %v2093 = vpop.permute.xlu0 %2092
    %2094 = vrot.lane.b32.xlu0 %v617, 28
    %v2095 = vpop.permute.xlu0 %2094
    %2096 = vrot.lane.b32.xlu0 %v620, 28
    %v2097 = vpop.permute.xlu0 %2096
    %2098 = vrot.lane.b32.xlu0 %v622, 28
    %v2099 = vpop.permute.xlu0 %2098
    %2100 = vrot.lane.b32.xlu0 %v625, 28
    %v2101 = vpop.permute.xlu0 %2100
    %2102 = vrot.lane.b32.xlu0 %v627, 28
    %v2103 = vpop.permute.xlu0 %2102
    %2104 = vrot.lane.b32.xlu0 %v630, 28
    %v2105 = vpop.permute.xlu0 %2104
    %2106 = vrot.lane.b32.xlu0 %v632, 28
    %v2107 = vpop.permute.xlu0 %2106
    %2108 = vrot.lane.b32.xlu0 %v1383, 28
    %v2109 = vpop.permute.xlu0 %2108
    %2110 = vrot.lane.b32.xlu0 %v1385, 28
    %v2111 = vpop.permute.xlu0 %2110
    %2112 = vrot.lane.b32.xlu0 %v1985, 28
    %v2113 = vpop.permute.xlu0 %2112
    %2114 = vrot.lane.b32.xlu0 %v1987, 28
    %v2115 = vpop.permute.xlu0 %2114
    %v2180 = vrot.slane %v319, 2
    %v2181 = vrot.slane %v320, 2
    %v2182 = vsel %vm825, %v2180, %v2181
    %v2183 = vrot.slane %v321, 2
    %v2184 = vsel %vm825, %v2181, %v2183
    %v2185 = vrot.slane %v373, 2
    %v2186 = vrot.slane %v374, 2
    %v2187 = vsel %vm825, %v2185, %v2186
    %v2188 = vrot.slane %v375, 2
    %v2189 = vsel %vm825, %v2186, %v2188
    %2190 = vrot.lane.b32.xlu0 %v838, 32
    %v2191 = vpop.permute.xlu0 %2190
    %2192 = vrot.lane.b32.xlu0 %v840, 32
    %v2193 = vpop.permute.xlu0 %2192
    %2194 = vrot.lane.b32.xlu0 %v843, 32
    %v2195 = vpop.permute.xlu0 %2194
    %2196 = vrot.lane.b32.xlu0 %v845, 32
    %v2197 = vpop.permute.xlu0 %2196
    %2198 = vrot.lane.b32.xlu0 %v848, 32
    %v2199 = vpop.permute.xlu0 %2198
    %2200 = vrot.lane.b32.xlu0 %v850, 32
    %v2201 = vpop.permute.xlu0 %2200
    %2202 = vrot.lane.b32.xlu0 %v853, 32
    %v2203 = vpop.permute.xlu0 %2202
    %2204 = vrot.lane.b32.xlu0 %v855, 32
    %v2205 = vpop.permute.xlu0 %2204
    %2206 = vrot.lane.b32.xlu0 %v858, 32
    %v2207 = vpop.permute.xlu0 %2206
    %2208 = vrot.lane.b32.xlu0 %v860, 32
    %v2209 = vpop.permute.xlu0 %2208
    %2210 = vrot.lane.b32.xlu0 %v863, 32
    %v2211 = vpop.permute.xlu0 %2210
    %2212 = vrot.lane.b32.xlu0 %v865, 32
    %v2213 = vpop.permute.xlu0 %2212
    %2214 = vrot.lane.b32.xlu0 %v868, 32
    %v2215 = vpop.permute.xlu0 %2214
    %2216 = vrot.lane.b32.xlu0 %v870, 32
    %v2217 = vpop.permute.xlu0 %2216
    %2218 = vrot.lane.b32.xlu0 %v873, 32
    %v2219 = vpop.permute.xlu0 %2218
    %2220 = vrot.lane.b32.xlu0 %v875, 32
    %v2221 = vpop.permute.xlu0 %2220
    %2222 = vrot.lane.b32.xlu0 %v878, 32
    %v2223 = vpop.permute.xlu0 %2222
    %2224 = vrot.lane.b32.xlu0 %v880, 32
    %v2225 = vpop.permute.xlu0 %2224
    %2226 = vrot.lane.b32.xlu0 %v883, 32
    %v2227 = vpop.permute.xlu0 %2226
    %2228 = vrot.lane.b32.xlu0 %v885, 32
    %v2229 = vpop.permute.xlu0 %2228
    %2230 = vrot.lane.b32.xlu0 %v888, 32
    %v2231 = vpop.permute.xlu0 %2230
    %2232 = vrot.lane.b32.xlu0 %v890, 32
    %v2233 = vpop.permute.xlu0 %2232
    %2234 = vrot.lane.b32.xlu0 %v893, 32
    %v2235 = vpop.permute.xlu0 %2234
    %2236 = vrot.lane.b32.xlu0 %v895, 32
    %v2237 = vpop.permute.xlu0 %2236
    %2238 = vrot.lane.b32.xlu0 %v898, 32
    %v2239 = vpop.permute.xlu0 %2238
    %2240 = vrot.lane.b32.xlu0 %v900, 32
    %v2241 = vpop.permute.xlu0 %2240
    %2242 = vrot.lane.b32.xlu0 %v903, 32
    %v2243 = vpop.permute.xlu0 %2242
    %2244 = vrot.lane.b32.xlu0 %v905, 32
    %v2245 = vpop.permute.xlu0 %2244
    %2246 = vrot.lane.b32.xlu0 %v1580, 32
    %v2247 = vpop.permute.xlu0 %2246
    %2248 = vrot.lane.b32.xlu0 %v1582, 32
    %v2249 = vpop.permute.xlu0 %2248
    %2250 = vrot.lane.b32.xlu0 %v2182, 32
    %v2251 = vpop.permute.xlu0 %2250
    %2252 = vrot.lane.b32.xlu0 %v2184, 32
    %v2253 = vpop.permute.xlu0 %2252
    %2254 = vrot.lane.b32.xlu0 %v918, 32
    %v2255 = vpop.permute.xlu0 %2254
    %2256 = vrot.lane.b32.xlu0 %v920, 32
    %v2257 = vpop.permute.xlu0 %2256
    %2258 = vrot.lane.b32.xlu0 %v923, 32
    %v2259 = vpop.permute.xlu0 %2258
    %2260 = vrot.lane.b32.xlu0 %v925, 32
    %v2261 = vpop.permute.xlu0 %2260
    %2262 = vrot.lane.b32.xlu0 %v928, 32
    %v2263 = vpop.permute.xlu0 %2262
    %2264 = vrot.lane.b32.xlu0 %v930, 32
    %v2265 = vpop.permute.xlu0 %2264
    %2266 = vrot.lane.b32.xlu0 %v933, 32
    %v2267 = vpop.permute.xlu0 %2266
    %2268 = vrot.lane.b32.xlu0 %v935, 32
    %v2269 = vpop.permute.xlu0 %2268
    %2270 = vrot.lane.b32.xlu0 %v938, 32
    %v2271 = vpop.permute.xlu0 %2270
    %2272 = vrot.lane.b32.xlu0 %v940, 32
    %v2273 = vpop.permute.xlu0 %2272
    %2274 = vrot.lane.b32.xlu0 %v943, 32
    %v2275 = vpop.permute.xlu0 %2274
    %2276 = vrot.lane.b32.xlu0 %v945, 32
    %v2277 = vpop.permute.xlu0 %2276
    %2278 = vrot.lane.b32.xlu0 %v948, 32
    %v2279 = vpop.permute.xlu0 %2278
    %2280 = vrot.lane.b32.xlu0 %v950, 32
    %v2281 = vpop.permute.xlu0 %2280
    %2282 = vrot.lane.b32.xlu0 %v953, 32
    %v2283 = vpop.permute.xlu0 %2282
    %2284 = vrot.lane.b32.xlu0 %v955, 32
    %v2285 = vpop.permute.xlu0 %2284
    %2286 = vrot.lane.b32.xlu0 %v958, 32
    %v2287 = vpop.permute.xlu0 %2286
    %2288 = vrot.lane.b32.xlu0 %v960, 32
    %v2289 = vpop.permute.xlu0 %2288
    %2290 = vrot.lane.b32.xlu0 %v963, 32
    %v2291 = vpop.permute.xlu0 %2290
    %2292 = vrot.lane.b32.xlu0 %v965, 32
    %v2293 = vpop.permute.xlu0 %2292
    %2294 = vrot.lane.b32.xlu0 %v968, 32
    %v2295 = vpop.permute.xlu0 %2294
    %2296 = vrot.lane.b32.xlu0 %v970, 32
    %v2297 = vpop.permute.xlu0 %2296
    %2298 = vrot.lane.b32.xlu0 %v973, 32
    %v2299 = vpop.permute.xlu0 %2298
    %2300 = vrot.lane.b32.xlu0 %v975, 32
    %v2301 = vpop.permute.xlu0 %2300
    %2302 = vrot.lane.b32.xlu0 %v978, 32
    %v2303 = vpop.permute.xlu0 %2302
    %2304 = vrot.lane.b32.xlu0 %v980, 32
    %v2305 = vpop.permute.xlu0 %2304
    %2306 = vrot.lane.b32.xlu0 %v983, 32
    %v2307 = vpop.permute.xlu0 %2306
    %2308 = vrot.lane.b32.xlu0 %v985, 32
    %v2309 = vpop.permute.xlu0 %2308
    %2310 = vrot.lane.b32.xlu0 %v1585, 32
    %v2311 = vpop.permute.xlu0 %2310
    %2312 = vrot.lane.b32.xlu0 %v1587, 32
    %v2313 = vpop.permute.xlu0 %2312
    %2314 = vrot.lane.b32.xlu0 %v2187, 32
    %v2315 = vpop.permute.xlu0 %2314
    %2316 = vrot.lane.b32.xlu0 %v2189, 32
    %v2317 = vpop.permute.xlu0 %2316
    %v2382 = vsel %vm93, %v268, %v634
    %v2383 = vsel %vm93, %v269, %v636
    %v2384 = vsel %vm93, %v271, %v638
    %v2385 = vsel %vm93, %v272, %v640
    %v2386 = vsel %vm93, %v274, %v642
    %v2387 = vsel %vm93, %v275, %v644
    %v2388 = vsel %vm93, %v277, %v646
    %v2389 = vsel %vm93, %v278, %v648
    %v2390 = vsel %vm93, %v280, %v650
    %v2391 = vsel %vm93, %v281, %v652
    %v2392 = vsel %vm93, %v283, %v654
    %v2393 = vsel %vm93, %v284, %v656
    %v2394 = vsel %vm93, %v286, %v658
    %v2395 = vsel %vm93, %v287, %v660
    %v2396 = vsel %vm93, %v289, %v662
    %v2397 = vsel %vm93, %v290, %v664
    %v2398 = vsel %vm93, %v292, %v666
    %v2399 = vsel %vm93, %v293, %v668
    %v2400 = vsel %vm93, %v295, %v670
    %v2401 = vsel %vm93, %v296, %v672
    %v2402 = vsel %vm93, %v298, %v674
    %v2403 = vsel %vm93, %v299, %v676
    %v2404 = vsel %vm93, %v301, %v678
    %v2405 = vsel %vm93, %v302, %v680
    %v2406 = vsel %vm93, %v304, %v682
    %v2407 = vsel %vm93, %v305, %v684
    %v2408 = vsel %vm93, %v307, %v686
    %v2409 = vsel %vm93, %v308, %v688
    %v2410 = vsel %vm93, %v310, %v690
    %v2411 = vsel %vm93, %v311, %v692
    %v2412 = vsel %vm93, %v313, %v694
    %v2413 = vsel %vm93, %v314, %v696
    %v2414 = vsel %vm93, %v322, %v698
    %v2415 = vsel %vm93, %v323, %v700
    %v2416 = vsel %vm93, %v325, %v702
    %v2417 = vsel %vm93, %v326, %v704
    %v2418 = vsel %vm93, %v328, %v706
    %v2419 = vsel %vm93, %v329, %v708
    %v2420 = vsel %vm93, %v331, %v710
    %v2421 = vsel %vm93, %v332, %v712
    %v2422 = vsel %vm93, %v334, %v714
    %v2423 = vsel %vm93, %v335, %v716
    %v2424 = vsel %vm93, %v337, %v718
    %v2425 = vsel %vm93, %v338, %v720
    %v2426 = vsel %vm93, %v340, %v722
    %v2427 = vsel %vm93, %v341, %v724
    %v2428 = vsel %vm93, %v343, %v726
    %v2429 = vsel %vm93, %v344, %v728
    %v2430 = vsel %vm93, %v346, %v730
    %v2431 = vsel %vm93, %v347, %v732
    %v2432 = vsel %vm93, %v349, %v734
    %v2433 = vsel %vm93, %v350, %v736
    %v2434 = vsel %vm93, %v352, %v738
    %v2435 = vsel %vm93, %v353, %v740
    %v2436 = vsel %vm93, %v355, %v742
    %v2437 = vsel %vm93, %v356, %v744
    %v2438 = vsel %vm93, %v358, %v746
    %v2439 = vsel %vm93, %v359, %v748
    %v2440 = vsel %vm93, %v361, %v750
    %v2441 = vsel %vm93, %v362, %v752
    %v2442 = vsel %vm93, %v364, %v754
    %v2443 = vsel %vm93, %v365, %v756
    %v2444 = vsel %vm93, %v367, %v758
    %v2445 = vsel %vm93, %v368, %v760
    %vm2446 = vcmask 64512
    %v2447 = vsel %vm2446, %v2382, %v987
    %v2448 = vsel %vm2446, %v2383, %v989
    %v2449 = vsel %vm2446, %v2384, %v991
    %v2450 = vsel %vm2446, %v2385, %v993
    %v2451 = vsel %vm2446, %v2386, %v995
    %v2452 = vsel %vm2446, %v2387, %v997
    %v2453 = vsel %vm2446, %v2388, %v999
    %v2454 = vsel %vm2446, %v2389, %v1001
    %v2455 = vsel %vm2446, %v2390, %v1003
    %v2456 = vsel %vm2446, %v2391, %v1005
    %v2457 = vsel %vm2446, %v2392, %v1007
    %v2458 = vsel %vm2446, %v2393, %v1009
    %v2459 = vsel %vm2446, %v2394, %v1011
    %v2460 = vsel %vm2446, %v2395, %v1013
    %v2461 = vsel %vm2446, %v2396, %v1015
    %v2462 = vsel %vm2446, %v2397, %v1017
    %v2463 = vsel %vm2446, %v2398, %v1019
    %v2464 = vsel %vm2446, %v2399, %v1021
    %v2465 = vsel %vm2446, %v2400, %v1023
    %v2466 = vsel %vm2446, %v2401, %v1025
    %v2467 = vsel %vm2446, %v2402, %v1027
    %v2468 = vsel %vm2446, %v2403, %v1029
    %v2469 = vsel %vm2446, %v2404, %v1031
    %v2470 = vsel %vm2446, %v2405, %v1033
    %v2471 = vsel %vm2446, %v2406, %v1035
    %v2472 = vsel %vm2446, %v2407, %v1037
    %v2473 = vsel %vm2446, %v2408, %v1039
    %v2474 = vsel %vm2446, %v2409, %v1041
    %v2475 = vsel %vm2446, %v2410, %v1043
    %v2476 = vsel %vm2446, %v2411, %v1045
    %v2477 = vsel %vm2446, %v2412, %v1047
    %v2478 = vsel %vm2446, %v2413, %v1049
    %v2479 = vsel %vm2446, %v2414, %v1051
    %v2480 = vsel %vm2446, %v2415, %v1053
    %v2481 = vsel %vm2446, %v2416, %v1055
    %v2482 = vsel %vm2446, %v2417, %v1057
    %v2483 = vsel %vm2446, %v2418, %v1059
    %v2484 = vsel %vm2446, %v2419, %v1061
    %v2485 = vsel %vm2446, %v2420, %v1063
    %v2486 = vsel %vm2446, %v2421, %v1065
    %v2487 = vsel %vm2446, %v2422, %v1067
    %v2488 = vsel %vm2446, %v2423, %v1069
    %v2489 = vsel %vm2446, %v2424, %v1071
    %v2490 = vsel %vm2446, %v2425, %v1073
    %v2491 = vsel %vm2446, %v2426, %v1075
    %v2492 = vsel %vm2446, %v2427, %v1077
    %v2493 = vsel %vm2446, %v2428, %v1079
    %v2494 = vsel %vm2446, %v2429, %v1081
    %v2495 = vsel %vm2446, %v2430, %v1083
    %v2496 = vsel %vm2446, %v2431, %v1085
    %v2497 = vsel %vm2446, %v2432, %v1087
    %v2498 = vsel %vm2446, %v2433, %v1089
    %v2499 = vsel %vm2446, %v2434, %v1091
    %v2500 = vsel %vm2446, %v2435, %v1093
    %v2501 = vsel %vm2446, %v2436, %v1095
    %v2502 = vsel %vm2446, %v2437, %v1097
    %v2503 = vsel %vm2446, %v2438, %v1099
    %v2504 = vsel %vm2446, %v2439, %v1101
    %v2505 = vsel %vm2446, %v2440, %v1103
    %v2506 = vsel %vm2446, %v2441, %v1105
    %v2507 = vsel %vm2446, %v2442, %v1107
    %v2508 = vsel %vm2446, %v2443, %v1109
    %v2509 = vsel %vm2446, %v2444, %v1111
    %v2510 = vsel %vm2446, %v2445, %v1113
    %vm2511 = vcmask 97280
    %v2512 = vsel %vm2511, %v2447, %v1183
    %v2513 = vsel %vm2511, %v2448, %v1185
    %v2514 = vsel %vm2511, %v2449, %v1187
    %v2515 = vsel %vm2511, %v2450, %v1189
    %v2516 = vsel %vm2511, %v2451, %v1191
    %v2517 = vsel %vm2511, %v2452, %v1193
    %v2518 = vsel %vm2511, %v2453, %v1195
    %v2519 = vsel %vm2511, %v2454, %v1197
    %v2520 = vsel %vm2511, %v2455, %v1199
    %v2521 = vsel %vm2511, %v2456, %v1201
    %v2522 = vsel %vm2511, %v2457, %v1203
    %v2523 = vsel %vm2511, %v2458, %v1205
    %v2524 = vsel %vm2511, %v2459, %v1207
    %v2525 = vsel %vm2511, %v2460, %v1209
    %v2526 = vsel %vm2511, %v2461, %v1211
    %v2527 = vsel %vm2511, %v2462, %v1213
    %v2528 = vsel %vm2511, %v2463, %v1215
    %v2529 = vsel %vm2511, %v2464, %v1217
    %v2530 = vsel %vm2511, %v2465, %v1219
    %v2531 = vsel %vm2511, %v2466, %v1221
    %v2532 = vsel %vm2511, %v2467, %v1223
    %v2533 = vsel %vm2511, %v2468, %v1225
    %v2534 = vsel %vm2511, %v2469, %v1227
    %v2535 = vsel %vm2511, %v2470, %v1229
    %v2536 = vsel %vm2511, %v2471, %v1231
    %v2537 = vsel %vm2511, %v2472, %v1233
    %v2538 = vsel %vm2511, %v2473, %v1235
    %v2539 = vsel %vm2511, %v2474, %v1237
    %v2540 = vsel %vm2511, %v2475, %v1239
    %v2541 = vsel %vm2511, %v2476, %v1241
    %v2542 = vsel %vm2511, %v2477, %v1243
    %v2543 = vsel %vm2511, %v2478, %v1245
    %v2544 = vsel %vm2511, %v2479, %v1247
    %v2545 = vsel %vm2511, %v2480, %v1249
    %v2546 = vsel %vm2511, %v2481, %v1251
    %v2547 = vsel %vm2511, %v2482, %v1253
    %v2548 = vsel %vm2511, %v2483, %v1255
    %v2549 = vsel %vm2511, %v2484, %v1257
    %v2550 = vsel %vm2511, %v2485, %v1259
    %v2551 = vsel %vm2511, %v2486, %v1261
    %v2552 = vsel %vm2511, %v2487, %v1263
    %v2553 = vsel %vm2511, %v2488, %v1265
    %v2554 = vsel %vm2511, %v2489, %v1267
    %v2555 = vsel %vm2511, %v2490, %v1269
    %v2556 = vsel %vm2511, %v2491, %v1271
    %v2557 = vsel %vm2511, %v2492, %v1273
    %v2558 = vsel %vm2511, %v2493, %v1275
    %v2559 = vsel %vm2511, %v2494, %v1277
    %v2560 = vsel %vm2511, %v2495, %v1279
    %v2561 = vsel %vm2511, %v2496, %v1281
    %v2562 = vsel %vm2511, %v2497, %v1283
    %v2563 = vsel %vm2511, %v2498, %v1285
    %v2564 = vsel %vm2511, %v2499, %v1287
    %v2565 = vsel %vm2511, %v2500, %v1289
    %v2566 = vsel %vm2511, %v2501, %v1291
    %v2567 = vsel %vm2511, %v2502, %v1293
    %v2568 = vsel %vm2511, %v2503, %v1295
    %v2569 = vsel %vm2511, %v2504, %v1297
    %v2570 = vsel %vm2511, %v2505, %v1299
    %v2571 = vsel %vm2511, %v2506, %v1301
    %v2572 = vsel %vm2511, %v2507, %v1303
    %v2573 = vsel %vm2511, %v2508, %v1305
    %v2574 = vsel %vm2511, %v2509, %v1307
    %v2575 = vsel %vm2511, %v2510, %v1309
    %vm2576 = vcmask 130048
    %v2577 = vsel %vm2576, %v2512, %v1387
    %v2578 = vsel %vm2576, %v2513, %v1389
    %v2579 = vsel %vm2576, %v2514, %v1391
    %v2580 = vsel %vm2576, %v2515, %v1393
    %v2581 = vsel %vm2576, %v2516, %v1395
    %v2582 = vsel %vm2576, %v2517, %v1397
    %v2583 = vsel %vm2576, %v2518, %v1399
    %v2584 = vsel %vm2576, %v2519, %v1401
    %v2585 = vsel %vm2576, %v2520, %v1403
    %v2586 = vsel %vm2576, %v2521, %v1405
    %v2587 = vsel %vm2576, %v2522, %v1407
    %v2588 = vsel %vm2576, %v2523, %v1409
    %v2589 = vsel %vm2576, %v2524, %v1411
    %v2590 = vsel %vm2576, %v2525, %v1413
    %v2591 = vsel %vm2576, %v2526, %v1415
    %v2592 = vsel %vm2576, %v2527, %v1417
    %v2593 = vsel %vm2576, %v2528, %v1419
    %v2594 = vsel %vm2576, %v2529, %v1421
    %v2595 = vsel %vm2576, %v2530, %v1423
    %v2596 = vsel %vm2576, %v2531, %v1425
    %v2597 = vsel %vm2576, %v2532, %v1427
    %v2598 = vsel %vm2576, %v2533, %v1429
    %v2599 = vsel %vm2576, %v2534, %v1431
    %v2600 = vsel %vm2576, %v2535, %v1433
    %v2601 = vsel %vm2576, %v2536, %v1435
    %v2602 = vsel %vm2576, %v2537, %v1437
    %v2603 = vsel %vm2576, %v2538, %v1439
    %v2604 = vsel %vm2576, %v2539, %v1441
    %v2605 = vsel %vm2576, %v2540, %v1443
    %v2606 = vsel %vm2576, %v2541, %v1445
    %v2607 = vsel %vm2576, %v2542, %v1447
    %v2608 = vsel %vm2576, %v2543, %v1449
    %v2609 = vsel %vm2576, %v2544, %v1451
    %v2610 = vsel %vm2576, %v2545, %v1453
    %v2611 = vsel %vm2576, %v2546, %v1455
    %v2612 = vsel %vm2576, %v2547, %v1457
    %v2613 = vsel %vm2576, %v2548, %v1459
    %v2614 = vsel %vm2576, %v2549, %v1461
    %v2615 = vsel %vm2576, %v2550, %v1463
    %v2616 = vsel %vm2576, %v2551, %v1465
    %v2617 = vsel %vm2576, %v2552, %v1467
    %v2618 = vsel %vm2576, %v2553, %v1469
    %v2619 = vsel %vm2576, %v2554, %v1471
    %v2620 = vsel %vm2576, %v2555, %v1473
    %v2621 = vsel %vm2576, %v2556, %v1475
    %v2622 = vsel %vm2576, %v2557, %v1477
    %v2623 = vsel %vm2576, %v2558, %v1479
    %v2624 = vsel %vm2576, %v2559, %v1481
    %v2625 = vsel %vm2576, %v2560, %v1483
    %v2626 = vsel %vm2576, %v2561, %v1485
    %v2627 = vsel %vm2576, %v2562, %v1487
    %v2628 = vsel %vm2576, %v2563, %v1489
    %v2629 = vsel %vm2576, %v2564, %v1491
    %v2630 = vsel %vm2576, %v2565, %v1493
    %v2631 = vsel %vm2576, %v2566, %v1495
    %v2632 = vsel %vm2576, %v2567, %v1497
    %v2633 = vsel %vm2576, %v2568, %v1499
    %v2634 = vsel %vm2576, %v2569, %v1501
    %v2635 = vsel %vm2576, %v2570, %v1503
    %v2636 = vsel %vm2576, %v2571, %v1505
    %v2637 = vsel %vm2576, %v2572, %v1507
    %v2638 = vsel %vm2576, %v2573, %v1509
    %v2639 = vsel %vm2576, %v2574, %v1511
    %v2640 = vsel %vm2576, %v2575, %v1513
    %vm2641 = vcmask 162816
    %v2642 = vsel %vm2641, %v2577, %v1589
    %v2643 = vsel %vm2641, %v2578, %v1591
    %v2644 = vsel %vm2641, %v2579, %v1593
    %v2645 = vsel %vm2641, %v2580, %v1595
    %v2646 = vsel %vm2641, %v2581, %v1597
    %v2647 = vsel %vm2641, %v2582, %v1599
    %v2648 = vsel %vm2641, %v2583, %v1601
    %v2649 = vsel %vm2641, %v2584, %v1603
    %v2650 = vsel %vm2641, %v2585, %v1605
    %v2651 = vsel %vm2641, %v2586, %v1607
    %v2652 = vsel %vm2641, %v2587, %v1609
    %v2653 = vsel %vm2641, %v2588, %v1611
    %v2654 = vsel %vm2641, %v2589, %v1613
    %v2655 = vsel %vm2641, %v2590, %v1615
    %v2656 = vsel %vm2641, %v2591, %v1617
    %v2657 = vsel %vm2641, %v2592, %v1619
    %v2658 = vsel %vm2641, %v2593, %v1621
    %v2659 = vsel %vm2641, %v2594, %v1623
    %v2660 = vsel %vm2641, %v2595, %v1625
    %v2661 = vsel %vm2641, %v2596, %v1627
    %v2662 = vsel %vm2641, %v2597, %v1629
    %v2663 = vsel %vm2641, %v2598, %v1631
    %v2664 = vsel %vm2641, %v2599, %v1633
    %v2665 = vsel %vm2641, %v2600, %v1635
    %v2666 = vsel %vm2641, %v2601, %v1637
    %v2667 = vsel %vm2641, %v2602, %v1639
    %v2668 = vsel %vm2641, %v2603, %v1641
    %v2669 = vsel %vm2641, %v2604, %v1643
    %v2670 = vsel %vm2641, %v2605, %v1645
    %v2671 = vsel %vm2641, %v2606, %v1647
    %v2672 = vsel %vm2641, %v2607, %v1649
    %v2673 = vsel %vm2641, %v2608, %v1651
    %v2674 = vsel %vm2641, %v2609, %v1653
    %v2675 = vsel %vm2641, %v2610, %v1655
    %v2676 = vsel %vm2641, %v2611, %v1657
    %v2677 = vsel %vm2641, %v2612, %v1659
    %v2678 = vsel %vm2641, %v2613, %v1661
    %v2679 = vsel %vm2641, %v2614, %v1663
    %v2680 = vsel %vm2641, %v2615, %v1665
    %v2681 = vsel %vm2641, %v2616, %v1667
    %v2682 = vsel %vm2641, %v2617, %v1669
    %v2683 = vsel %vm2641, %v2618, %v1671
    %v2684 = vsel %vm2641, %v2619, %v1673
    %v2685 = vsel %vm2641, %v2620, %v1675
    %v2686 = vsel %vm2641, %v2621, %v1677
    %v2687 = vsel %vm2641, %v2622, %v1679
    %v2688 = vsel %vm2641, %v2623, %v1681
    %v2689 = vsel %vm2641, %v2624, %v1683
    %v2690 = vsel %vm2641, %v2625, %v1685
    %v2691 = vsel %vm2641, %v2626, %v1687
    %v2692 = vsel %vm2641, %v2627, %v1689
    %v2693 = vsel %vm2641, %v2628, %v1691
    %v2694 = vsel %vm2641, %v2629, %v1693
    %v2695 = vsel %vm2641, %v2630, %v1695
    %v2696 = vsel %vm2641, %v2631, %v1697
    %v2697 = vsel %vm2641, %v2632, %v1699
    %v2698 = vsel %vm2641, %v2633, %v1701
    %v2699 = vsel %vm2641, %v2634, %v1703
    %v2700 = vsel %vm2641, %v2635, %v1705
    %v2701 = vsel %vm2641, %v2636, %v1707
    %v2702 = vsel %vm2641, %v2637, %v1709
    %v2703 = vsel %vm2641, %v2638, %v1711
    %v2704 = vsel %vm2641, %v2639, %v1713
    %v2705 = vsel %vm2641, %v2640, %v1715
    %vm2706 = vcmask 195584
    %v2707 = vsel %vm2706, %v2642, %v1785
    %v2708 = vsel %vm2706, %v2643, %v1787
    %v2709 = vsel %vm2706, %v2644, %v1789
    %v2710 = vsel %vm2706, %v2645, %v1791
    %v2711 = vsel %vm2706, %v2646, %v1793
    %v2712 = vsel %vm2706, %v2647, %v1795
    %v2713 = vsel %vm2706, %v2648, %v1797
    %v2714 = vsel %vm2706, %v2649, %v1799
    %v2715 = vsel %vm2706, %v2650, %v1801
    %v2716 = vsel %vm2706, %v2651, %v1803
    %v2717 = vsel %vm2706, %v2652, %v1805
    %v2718 = vsel %vm2706, %v2653, %v1807
    %v2719 = vsel %vm2706, %v2654, %v1809
    %v2720 = vsel %vm2706, %v2655, %v1811
    %v2721 = vsel %vm2706, %v2656, %v1813
    %v2722 = vsel %vm2706, %v2657, %v1815
    %v2723 = vsel %vm2706, %v2658, %v1817
    %v2724 = vsel %vm2706, %v2659, %v1819
    %v2725 = vsel %vm2706, %v2660, %v1821
    %v2726 = vsel %vm2706, %v2661, %v1823
    %v2727 = vsel %vm2706, %v2662, %v1825
    %v2728 = vsel %vm2706, %v2663, %v1827
    %v2729 = vsel %vm2706, %v2664, %v1829
    %v2730 = vsel %vm2706, %v2665, %v1831
    %v2731 = vsel %vm2706, %v2666, %v1833
    %v2732 = vsel %vm2706, %v2667, %v1835
    %v2733 = vsel %vm2706, %v2668, %v1837
    %v2734 = vsel %vm2706, %v2669, %v1839
    %v2735 = vsel %vm2706, %v2670, %v1841
    %v2736 = vsel %vm2706, %v2671, %v1843
    %v2737 = vsel %vm2706, %v2672, %v1845
    %v2738 = vsel %vm2706, %v2673, %v1847
    %v2739 = vsel %vm2706, %v2674, %v1849
    %v2740 = vsel %vm2706, %v2675, %v1851
    %v2741 = vsel %vm2706, %v2676, %v1853
    %v2742 = vsel %vm2706, %v2677, %v1855
    %v2743 = vsel %vm2706, %v2678, %v1857
    %v2744 = vsel %vm2706, %v2679, %v1859
    %v2745 = vsel %vm2706, %v2680, %v1861
    %v2746 = vsel %vm2706, %v2681, %v1863
    %v2747 = vsel %vm2706, %v2682, %v1865
    %v2748 = vsel %vm2706, %v2683, %v1867
    %v2749 = vsel %vm2706, %v2684, %v1869
    %v2750 = vsel %vm2706, %v2685, %v1871
    %v2751 = vsel %vm2706, %v2686, %v1873
    %v2752 = vsel %vm2706, %v2687, %v1875
    %v2753 = vsel %vm2706, %v2688, %v1877
    %v2754 = vsel %vm2706, %v2689, %v1879
    %v2755 = vsel %vm2706, %v2690, %v1881
    %v2756 = vsel %vm2706, %v2691, %v1883
    %v2757 = vsel %vm2706, %v2692, %v1885
    %v2758 = vsel %vm2706, %v2693, %v1887
    %v2759 = vsel %vm2706, %v2694, %v1889
    %v2760 = vsel %vm2706, %v2695, %v1891
    %v2761 = vsel %vm2706, %v2696, %v1893
    %v2762 = vsel %vm2706, %v2697, %v1895
    %v2763 = vsel %vm2706, %v2698, %v1897
    %v2764 = vsel %vm2706, %v2699, %v1899
    %v2765 = vsel %vm2706, %v2700, %v1901
    %v2766 = vsel %vm2706, %v2701, %v1903
    %v2767 = vsel %vm2706, %v2702, %v1905
    %v2768 = vsel %vm2706, %v2703, %v1907
    %v2769 = vsel %vm2706, %v2704, %v1909
    %v2770 = vsel %vm2706, %v2705, %v1911
    %vm2771 = vcmask 228352
    %v2772 = vsel %vm2771, %v2707, %v1989
    %v2773 = vsel %vm2771, %v2708, %v1991
    %v2774 = vsel %vm2771, %v2709, %v1993
    %v2775 = vsel %vm2771, %v2710, %v1995
    %v2776 = vsel %vm2771, %v2711, %v1997
    %v2777 = vsel %vm2771, %v2712, %v1999
    %v2778 = vsel %vm2771, %v2713, %v2001
    %v2779 = vsel %vm2771, %v2714, %v2003
    %v2780 = vsel %vm2771, %v2715, %v2005
    %v2781 = vsel %vm2771, %v2716, %v2007
    %v2782 = vsel %vm2771, %v2717, %v2009
    %v2783 = vsel %vm2771, %v2718, %v2011
    %v2784 = vsel %vm2771, %v2719, %v2013
    %v2785 = vsel %vm2771, %v2720, %v2015
    %v2786 = vsel %vm2771, %v2721, %v2017
    %v2787 = vsel %vm2771, %v2722, %v2019
    %v2788 = vsel %vm2771, %v2723, %v2021
    %v2789 = vsel %vm2771, %v2724, %v2023
    %v2790 = vsel %vm2771, %v2725, %v2025
    %v2791 = vsel %vm2771, %v2726, %v2027
    %v2792 = vsel %vm2771, %v2727, %v2029
    %v2793 = vsel %vm2771, %v2728, %v2031
    %v2794 = vsel %vm2771, %v2729, %v2033
    %v2795 = vsel %vm2771, %v2730, %v2035
    %v2796 = vsel %vm2771, %v2731, %v2037
    %v2797 = vsel %vm2771, %v2732, %v2039
    %v2798 = vsel %vm2771, %v2733, %v2041
    %v2799 = vsel %vm2771, %v2734, %v2043
    %v2800 = vsel %vm2771, %v2735, %v2045
    %v2801 = vsel %vm2771, %v2736, %v2047
    %v2802 = vsel %vm2771, %v2737, %v2049
    %v2803 = vsel %vm2771, %v2738, %v2051
    %v2804 = vsel %vm2771, %v2739, %v2053
    %v2805 = vsel %vm2771, %v2740, %v2055
    %v2806 = vsel %vm2771, %v2741, %v2057
    %v2807 = vsel %vm2771, %v2742, %v2059
    %v2808 = vsel %vm2771, %v2743, %v2061
    %v2809 = vsel %vm2771, %v2744, %v2063
    %v2810 = vsel %vm2771, %v2745, %v2065
    %v2811 = vsel %vm2771, %v2746, %v2067
    %v2812 = vsel %vm2771, %v2747, %v2069
    %v2813 = vsel %vm2771, %v2748, %v2071
    %v2814 = vsel %vm2771, %v2749, %v2073
    %v2815 = vsel %vm2771, %v2750, %v2075
    %v2816 = vsel %vm2771, %v2751, %v2077
    %v2817 = vsel %vm2771, %v2752, %v2079
    %v2818 = vsel %vm2771, %v2753, %v2081
    %v2819 = vsel %vm2771, %v2754, %v2083
    %v2820 = vsel %vm2771, %v2755, %v2085
    %v2821 = vsel %vm2771, %v2756, %v2087
    %v2822 = vsel %vm2771, %v2757, %v2089
    %v2823 = vsel %vm2771, %v2758, %v2091
    %v2824 = vsel %vm2771, %v2759, %v2093
    %v2825 = vsel %vm2771, %v2760, %v2095
    %v2826 = vsel %vm2771, %v2761, %v2097
    %v2827 = vsel %vm2771, %v2762, %v2099
    %v2828 = vsel %vm2771, %v2763, %v2101
    %v2829 = vsel %vm2771, %v2764, %v2103
    %v2830 = vsel %vm2771, %v2765, %v2105
    %v2831 = vsel %vm2771, %v2766, %v2107
    %v2832 = vsel %vm2771, %v2767, %v2109
    %v2833 = vsel %vm2771, %v2768, %v2111
    %v2834 = vsel %vm2771, %v2769, %v2113
    %v2835 = vsel %vm2771, %v2770, %v2115
    %vm2836 = vcmask 261120
    %v2837 = vsel %vm2836, %v2772, %v2191
    %v2838 = vsel %vm2836, %v2773, %v2193
    %v2839 = vsel %vm2836, %v2774, %v2195
    %v2840 = vsel %vm2836, %v2775, %v2197
    %v2841 = vsel %vm2836, %v2776, %v2199
    %v2842 = vsel %vm2836, %v2777, %v2201
    %v2843 = vsel %vm2836, %v2778, %v2203
    %v2844 = vsel %vm2836, %v2779, %v2205
    %v2845 = vsel %vm2836, %v2780, %v2207
    %v2846 = vsel %vm2836, %v2781, %v2209
    %v2847 = vsel %vm2836, %v2782, %v2211
    %v2848 = vsel %vm2836, %v2783, %v2213
    %v2849 = vsel %vm2836, %v2784, %v2215
    %v2850 = vsel %vm2836, %v2785, %v2217
    %v2851 = vsel %vm2836, %v2786, %v2219
    %v2852 = vsel %vm2836, %v2787, %v2221
    %v2853 = vsel %vm2836, %v2788, %v2223
    %v2854 = vsel %vm2836, %v2789, %v2225
    %v2855 = vsel %vm2836, %v2790, %v2227
    %v2856 = vsel %vm2836, %v2791, %v2229
    %v2857 = vsel %vm2836, %v2792, %v2231
    %v2858 = vsel %vm2836, %v2793, %v2233
    %v2859 = vsel %vm2836, %v2794, %v2235
    %v2860 = vsel %vm2836, %v2795, %v2237
    %v2861 = vsel %vm2836, %v2796, %v2239
    %v2862 = vsel %vm2836, %v2797, %v2241
    %v2863 = vsel %vm2836, %v2798, %v2243
    %v2864 = vsel %vm2836, %v2799, %v2245
    %v2865 = vsel %vm2836, %v2800, %v2247
    %v2866 = vsel %vm2836, %v2801, %v2249
    %v2867 = vsel %vm2836, %v2802, %v2251
    %v2868 = vsel %vm2836, %v2803, %v2253
    %v2869 = vsel %vm2836, %v2804, %v2255
    %v2870 = vsel %vm2836, %v2805, %v2257
    %v2871 = vsel %vm2836, %v2806, %v2259
    %v2872 = vsel %vm2836, %v2807, %v2261
    %v2873 = vsel %vm2836, %v2808, %v2263
    %v2874 = vsel %vm2836, %v2809, %v2265
    %v2875 = vsel %vm2836, %v2810, %v2267
    %v2876 = vsel %vm2836, %v2811, %v2269
    %v2877 = vsel %vm2836, %v2812, %v2271
    %v2878 = vsel %vm2836, %v2813, %v2273
    %v2879 = vsel %vm2836, %v2814, %v2275
    %v2880 = vsel %vm2836, %v2815, %v2277
    %v2881 = vsel %vm2836, %v2816, %v2279
    %v2882 = vsel %vm2836, %v2817, %v2281
    %v2883 = vsel %vm2836, %v2818, %v2283
    %v2884 = vsel %vm2836, %v2819, %v2285
    %v2885 = vsel %vm2836, %v2820, %v2287
    %v2886 = vsel %vm2836, %v2821, %v2289
    %v2887 = vsel %vm2836, %v2822, %v2291
    %v2888 = vsel %vm2836, %v2823, %v2293
    %v2889 = vsel %vm2836, %v2824, %v2295
    %v2890 = vsel %vm2836, %v2825, %v2297
    %v2891 = vsel %vm2836, %v2826, %v2299
    %v2892 = vsel %vm2836, %v2827, %v2301
    %v2893 = vsel %vm2836, %v2828, %v2303
    %v2894 = vsel %vm2836, %v2829, %v2305
    %v2895 = vsel %vm2836, %v2830, %v2307
    %v2896 = vsel %vm2836, %v2831, %v2309
    %v2897 = vsel %vm2836, %v2832, %v2311
    %v2898 = vsel %vm2836, %v2833, %v2313
    %v2899 = vsel %vm2836, %v2834, %v2315
    %v2900 = vsel %vm2836, %v2835, %v2317
    %v2902 = vlaneseq
    %v2903 = vshrl.u32 %v2902, 7
    %v2904 = vsub.s32 0, %v2903
    %v2905 = vrot.slane %v92, %v2904
    %vm2907 = vcmask 293888
    %v2909 = vsel %vm2907, %v2837, 0
    %v2912 = vsel %vm2907, %v2838, 0
    %v2915 = vsel %vm2907, %v2839, 0
    %v2918 = vsel %vm2907, %v2840, 0
    %v2921 = vsel %vm2907, %v2841, 0
    %v2924 = vsel %vm2907, %v2842, 0
    %v2927 = vsel %vm2907, %v2843, 0
    %v2930 = vsel %vm2907, %v2844, 0
    %v2933 = vsel %vm2907, %v2845, 0
    %v2936 = vsel %vm2907, %v2846, 0
    %v2939 = vsel %vm2907, %v2847, 0
    %v2942 = vsel %vm2907, %v2848, 0
    %v2945 = vsel %vm2907, %v2849, 0
    %v2948 = vsel %vm2907, %v2850, 0
    %v2951 = vsel %vm2907, %v2851, 0
    %v2954 = vsel %vm2907, %v2852, 0
    %v2957 = vsel %vm2907, %v2853, 0
    %v2960 = vsel %vm2907, %v2854, 0
    %v2963 = vsel %vm2907, %v2855, 0
    %v2966 = vsel %vm2907, %v2856, 0
    %v2969 = vsel %vm2907, %v2857, 0
    %v2972 = vsel %vm2907, %v2858, 0
    %v2975 = vsel %vm2907, %v2859, 0
    %v2978 = vsel %vm2907, %v2860, 0
    %v2981 = vsel %vm2907, %v2861, 0
    %v2984 = vsel %vm2907, %v2862, 0
    %v2987 = vsel %vm2907, %v2863, 0
    %v2990 = vsel %vm2907, %v2864, 0
    %v2993 = vsel %vm2907, %v2865, 0
    %v2996 = vsel %vm2907, %v2866, 0
    %v2999 = vsel %vm2907, %v2867, 0
    %v3002 = vsel %vm2907, %v2868, 0
    %v3005 = vsel %vm2907, %v2869, 0
    %v3008 = vsel %vm2907, %v2870, 0
    %v3011 = vsel %vm2907, %v2871, 0
    %v3014 = vsel %vm2907, %v2872, 0
    %v3017 = vsel %vm2907, %v2873, 0
    %v3020 = vsel %vm2907, %v2874, 0
    %v3023 = vsel %vm2907, %v2875, 0
    %v3026 = vsel %vm2907, %v2876, 0
    %v3029 = vsel %vm2907, %v2877, 0
    %v3032 = vsel %vm2907, %v2878, 0
    %v3035 = vsel %vm2907, %v2879, 0
    %v3038 = vsel %vm2907, %v2880, 0
    %v3041 = vsel %vm2907, %v2881, 0
    %v3044 = vsel %vm2907, %v2882, 0
    %v3047 = vsel %vm2907, %v2883, 0
    %v3050 = vsel %vm2907, %v2884, 0
    %v3053 = vsel %vm2907, %v2885, 0
    %v3056 = vsel %vm2907, %v2886, 0
    %v3059 = vsel %vm2907, %v2887, 0
    %v3062 = vsel %vm2907, %v2888, 0
    %v3065 = vsel %vm2907, %v2889, 0
    %v3068 = vsel %vm2907, %v2890, 0
    %v3071 = vsel %vm2907, %v2891, 0
    %v3074 = vsel %vm2907, %v2892, 0
    %v3077 = vsel %vm2907, %v2893, 0
    %v3080 = vsel %vm2907, %v2894, 0
    %v3083 = vsel %vm2907, %v2895, 0
    %v3086 = vsel %vm2907, %v2896, 0
    %v3089 = vsel %vm2907, %v2897, 0
    %v3092 = vsel %vm2907, %v2898, 0
    %v3095 = vsel %vm2907, %v2899, 0
    %v3098 = vsel %vm2907, %v2900, 0
    %vm3100 = vcmask 1043456
    %v3102 = vsel %vm3100, %v91, 0
    %3104 = vmatprep.subr.mxu0 0.0
    %3105 = vmatpush1.msra.mxu0 %v87
    %3106 = vmatprep.subr.mxu0 0.0
    %3107 = vmatpush1.msra.mxu0 %v88
    %3108 = vmatprep.subr.mxu0 0.0
    %3109 = vmatpush1.msra.mxu0 %v89
    %3110 = vmatprep.subr.mxu0 0.0
    %3111 = vmatpush1.msra.mxu0 %v90
    %3112 = vmatprep.subr.mxu0 0.0
    %3113 = vmatpush1.msra.mxu0 %v3102
    %3114 = vmatprep.subr.mxu0 0.0
    %3115 = vmatpush1.msra.mxu0 0.0
    %3116 = vmatprep.subr.mxu0 0.0
    %3117 = vmatpush1.msra.mxu0 0.0
    %3118 = vmatprep.subr.mxu0 0.0
    %3119 = vmatpush1.msra.mxu0 0.0
    %3120 = vmatprep.subr.mxu0 0.0
    %3121 = vmatpush1.msra.mxu0 0.0
    %3122 = vmatprep.subr.mxu0 0.0
    %3123 = vmatpush1.msra.mxu0 0.0
    %3124 = vmatprep.subr.mxu0 0.0
    %3125 = vmatpush1.msra.mxu0 0.0
    %3126 = vmatprep.subr.mxu0 0.0
    %3127 = vmatpush1.msra.mxu0 0.0
    %3128 = vmatprep.subr.mxu0 0.0
    %3129 = vmatpush1.msra.mxu0 0.0
    %3130 = vmatprep.subr.mxu0 0.0
    %3131 = vmatpush1.msra.mxu0 0.0
    %3132 = vmatprep.subr.mxu0 0.0
    %3133 = vmatpush1.msra.mxu0 0.0
    %3134 = vmatprep.subr.mxu0 0.0
    %3135 = vmatpush1.msra.mxu0 0.0
    %3136 = vmatprep.subr.mxu0 0.0
    %3137 = vmatpush1.msra.mxu0 0.0
    %3138 = vmatprep.subr.mxu0 0.0
    %3139 = vmatpush1.msra.mxu0 0.0
    %3140 = vmatprep.subr.mxu0 0.0
    %3141 = vmatpush1.msra.mxu0 0.0
    %3142 = vmatprep.subr.mxu0 0.0
    %3143 = vmatpush1.msra.mxu0 0.0
    %3144 = vmatprep.subr.mxu0 0.0
    %3145 = vmatpush1.msra.mxu0 0.0
    %3146 = vmatprep.subr.mxu0 0.0
    %3147 = vmatpush1.msra.mxu0 0.0
    %3148 = vmatprep.subr.mxu0 0.0
    %3149 = vmatpush1.msra.mxu0 0.0
    %3150 = vmatprep.subr.mxu0 0.0
    %3151 = vmatpush1.msra.mxu0 0.0
    %3152 = vmatprep.subr.mxu0 0.0
    %3153 = vmatpush1.msra.mxu0 0.0
    %3154 = vmatprep.subr.mxu0 0.0
    %3155 = vmatpush1.msra.mxu0 0.0
    %3156 = vmatprep.subr.mxu0 0.0
    %3157 = vmatpush1.msra.mxu0 0.0
    %3158 = vmatprep.subr.mxu0 0.0
    %3159 = vmatpush1.msra.mxu0 0.0
    %3160 = vmatprep.subr.mxu0 0.0
    %3161 = vmatpush1.msra.mxu0 0.0
    %3162 = vmatprep.subr.mxu0 0.0
    %3163 = vmatpush1.msra.mxu0 0.0
    %3164 = vmatprep.subr.mxu0 0.0
    %3165 = vmatpush1.msra.mxu0 0.0
    %3166 = vmatprep.subr.mxu0 0.0
    %3167 = vmatpush1.msra.mxu0 0.0
    %3168 = vmatprep.mubr.f32.mxu0 0.0
    %3169 = vmatmul.mubr.f32.gmra.mrb[0].mxu0 %v2909
    %v3170 = vpop.f32.mrb[0].mxu0
    %v3171 = vadd.f32 %v2905, %v3170
    %v3172 = vpop.f32.mrb[0].mxu0
    %3173 = vmatprep.mubr.f32.mxu0 0.0
    %3174 = vmatmul.mubr.f32.gmra.mrb[0].mxu0 %v2912
    %v3175 = vpop.f32.mrb[0].mxu0
    %v3176 = vadd.f32 %v2905, %v3175
    %v3177 = vpop.f32.mrb[0].mxu0
    %3178 = vmatprep.mubr.f32.mxu0 0.0
    %3179 = vmatmul.mubr.f32.gmra.mrb[0].mxu0 %v2915
    %v3180 = vpop.f32.mrb[0].mxu0
    %v3181 = vadd.f32 %v2905, %v3180
    %v3182 = vpop.f32.mrb[0].mxu0
    %3183 = vmatprep.mubr.f32.mxu0 0.0
    %3184 = vmatmul.mubr.f32.gmra.mrb[0].mxu0 %v2918
    %v3185 = vpop.f32.mrb[0].mxu0
    %v3186 = vadd.f32 %v2905, %v3185
    %v3187 = vpop.f32.mrb[0].mxu0
    %3188 = vmatprep.mubr.f32.mxu0 0.0
    %3189 = vmatmul.mubr.f32.gmra.mrb[0].mxu0 %v2921
    %v3190 = vpop.f32.mrb[0].mxu0
    %v3191 = vadd.f32 %v2905, %v3190
    %v3192 = vpop.f32.mrb[0].mxu0
    %3193 = vmatprep.mubr.f32.mxu0 0.0
    %3194 = vmatmul.mubr.f32.gmra.mrb[0].mxu0 %v2924
    %v3195 = vpop.f32.mrb[0].mxu0
    %v3196 = vadd.f32 %v2905, %v3195
    %v3197 = vpop.f32.mrb[0].mxu0
    %3198 = vmatprep.mubr.f32.mxu0 0.0
    %3199 = vmatmul.mubr.f32.gmra.mrb[0].mxu0 %v2927
    %v3200 = vpop.f32.mrb[0].mxu0
    %v3201 = vadd.f32 %v2905, %v3200
    %v3202 = vpop.f32.mrb[0].mxu0
    %3203 = vmatprep.mubr.f32.mxu0 0.0
    %3204 = vmatmul.mubr.f32.gmra.mrb[0].mxu0 %v2930
    %v3205 = vpop.f32.mrb[0].mxu0
    %v3206 = vadd.f32 %v2905, %v3205
    %v3207 = vpop.f32.mrb[0].mxu0
    %3208 = vmatprep.mubr.f32.mxu0 0.0
    %3209 = vmatmul.mubr.f32.gmra.mrb[0].mxu0 %v2933
    %v3210 = vpop.f32.mrb[0].mxu0
    %v3211 = vadd.f32 %v2905, %v3210
    %v3212 = vpop.f32.mrb[0].mxu0
    %3213 = vmatprep.mubr.f32.mxu0 0.0
    %3214 = vmatmul.mubr.f32.gmra.mrb[0].mxu0 %v2936
    %v3215 = vpop.f32.mrb[0].mxu0
    %v3216 = vadd.f32 %v2905, %v3215
    %v3217 = vpop.f32.mrb[0].mxu0
    %3218 = vmatprep.mubr.f32.mxu0 0.0
    %3219 = vmatmul.mubr.f32.gmra.mrb[0].mxu0 %v2939
    %v3220 = vpop.f32.mrb[0].mxu0
    %v3221 = vadd.f32 %v2905, %v3220
    %v3222 = vpop.f32.mrb[0].mxu0
    %3223 = vmatprep.mubr.f32.mxu0 0.0
    %3224 = vmatmul.mubr.f32.gmra.mrb[0].mxu0 %v2942
    %v3225 = vpop.f32.mrb[0].mxu0
    %v3226 = vadd.f32 %v2905, %v3225
    %v3227 = vpop.f32.mrb[0].mxu0
    %3228 = vmatprep.mubr.f32.mxu0 0.0
    %3229 = vmatmul.mubr.f32.gmra.mrb[0].mxu0 %v2945
    %v3230 = vpop.f32.mrb[0].mxu0
    %v3231 = vadd.f32 %v2905, %v3230
    %v3232 = vpop.f32.mrb[0].mxu0
    %3233 = vmatprep.mubr.f32.mxu0 0.0
    %3234 = vmatmul.mubr.f32.gmra.mrb[0].mxu0 %v2948
    %v3235 = vpop.f32.mrb[0].mxu0
    %v3236 = vadd.f32 %v2905, %v3235
    %v3237 = vpop.f32.mrb[0].mxu0
    %3238 = vmatprep.mubr.f32.mxu0 0.0
    %3239 = vmatmul.mubr.f32.gmra.mrb[0].mxu0 %v2951
    %v3240 = vpop.f32.mrb[0].mxu0
    %v3241 = vadd.f32 %v2905, %v3240
    %v3242 = vpop.f32.mrb[0].mxu0
    %3243 = vmatprep.mubr.f32.mxu0 0.0
    %3244 = vmatmul.mubr.f32.gmra.mrb[0].mxu0 %v2954
    %v3245 = vpop.f32.mrb[0].mxu0
    %v3246 = vadd.f32 %v2905, %v3245
    %v3247 = vpop.f32.mrb[0].mxu0
    %3248 = vmatprep.mubr.f32.mxu0 0.0
    %3249 = vmatmul.mubr.f32.gmra.mrb[0].mxu0 %v2957
    %v3250 = vpop.f32.mrb[0].mxu0
    %v3251 = vadd.f32 %v2905, %v3250
    %v3252 = vpop.f32.mrb[0].mxu0
    %3253 = vmatprep.mubr.f32.mxu0 0.0
    %3254 = vmatmul.mubr.f32.gmra.mrb[0].mxu0 %v2960
    %v3255 = vpop.f32.mrb[0].mxu0
    %v3256 = vadd.f32 %v2905, %v3255
    %v3257 = vpop.f32.mrb[0].mxu0
    %3258 = vmatprep.mubr.f32.mxu0 0.0
    %3259 = vmatmul.mubr.f32.gmra.mrb[0].mxu0 %v2963
    %v3260 = vpop.f32.mrb[0].mxu0
    %v3261 = vadd.f32 %v2905, %v3260
    %v3262 = vpop.f32.mrb[0].mxu0
    %3263 = vmatprep.mubr.f32.mxu0 0.0
    %3264 = vmatmul.mubr.f32.gmra.mrb[0].mxu0 %v2966
    %v3265 = vpop.f32.mrb[0].mxu0
    %v3266 = vadd.f32 %v2905, %v3265
    %v3267 = vpop.f32.mrb[0].mxu0
    %3268 = vmatprep.mubr.f32.mxu0 0.0
    %3269 = vmatmul.mubr.f32.gmra.mrb[0].mxu0 %v2969
    %v3270 = vpop.f32.mrb[0].mxu0
    %v3271 = vadd.f32 %v2905, %v3270
    %v3272 = vpop.f32.mrb[0].mxu0
    %3273 = vmatprep.mubr.f32.mxu0 0.0
    %3274 = vmatmul.mubr.f32.gmra.mrb[0].mxu0 %v2972
    %v3275 = vpop.f32.mrb[0].mxu0
    %v3276 = vadd.f32 %v2905, %v3275
    %v3277 = vpop.f32.mrb[0].mxu0
    %3278 = vmatprep.mubr.f32.mxu0 0.0
    %3279 = vmatmul.mubr.f32.gmra.mrb[0].mxu0 %v2975
    %v3280 = vpop.f32.mrb[0].mxu0
    %v3281 = vadd.f32 %v2905, %v3280
    %v3282 = vpop.f32.mrb[0].mxu0
    %3283 = vmatprep.mubr.f32.mxu0 0.0
    %3284 = vmatmul.mubr.f32.gmra.mrb[0].mxu0 %v2978
    %v3285 = vpop.f32.mrb[0].mxu0
    %v3286 = vadd.f32 %v2905, %v3285
    %v3287 = vpop.f32.mrb[0].mxu0
    %3288 = vmatprep.mubr.f32.mxu0 0.0
    %3289 = vmatmul.mubr.f32.gmra.mrb[0].mxu0 %v2981
    %v3290 = vpop.f32.mrb[0].mxu0
    %v3291 = vadd.f32 %v2905, %v3290
    %v3292 = vpop.f32.mrb[0].mxu0
    %3293 = vmatprep.mubr.f32.mxu0 0.0
    %3294 = vmatmul.mubr.f32.gmra.mrb[0].mxu0 %v2984
    %v3295 = vpop.f32.mrb[0].mxu0
    %v3296 = vadd.f32 %v2905, %v3295
    %v3297 = vpop.f32.mrb[0].mxu0
    %3298 = vmatprep.mubr.f32.mxu0 0.0
    %3299 = vmatmul.mubr.f32.gmra.mrb[0].mxu0 %v2987
    %v3300 = vpop.f32.mrb[0].mxu0
    %v3301 = vadd.f32 %v2905, %v3300
    %v3302 = vpop.f32.mrb[0].mxu0
    %3303 = vmatprep.mubr.f32.mxu0 0.0
    %3304 = vmatmul.mubr.f32.gmra.mrb[0].mxu0 %v2990
    %v3305 = vpop.f32.mrb[0].mxu0
    %v3306 = vadd.f32 %v2905, %v3305
    %v3307 = vpop.f32.mrb[0].mxu0
    %3308 = vmatprep.mubr.f32.mxu0 0.0
    %3309 = vmatmul.mubr.f32.gmra.mrb[0].mxu0 %v2993
    %v3310 = vpop.f32.mrb[0].mxu0
    %v3311 = vadd.f32 %v2905, %v3310
    %v3312 = vpop.f32.mrb[0].mxu0
    %3313 = vmatprep.mubr.f32.mxu0 0.0
    %3314 = vmatmul.mubr.f32.gmra.mrb[0].mxu0 %v2996
    %v3315 = vpop.f32.mrb[0].mxu0
    %v3316 = vadd.f32 %v2905, %v3315
    %v3317 = vpop.f32.mrb[0].mxu0
    %3318 = vmatprep.mubr.f32.mxu0 0.0
    %3319 = vmatmul.mubr.f32.gmra.mrb[0].mxu0 %v2999
    %v3320 = vpop.f32.mrb[0].mxu0
    %v3321 = vadd.f32 %v2905, %v3320
    %v3322 = vpop.f32.mrb[0].mxu0
    %3323 = vmatprep.mubr.f32.mxu0 0.0
    %3324 = vmatmul.mubr.f32.gmra.mrb[0].mxu0 %v3002
    %v3325 = vpop.f32.mrb[0].mxu0
    %v3326 = vadd.f32 %v2905, %v3325
    %v3327 = vpop.f32.mrb[0].mxu0
    %3328 = vmatprep.mubr.f32.mxu0 0.0
    %3329 = vmatmul.mubr.f32.gmra.mrb[0].mxu0 %v3005
    %v3330 = vpop.f32.mrb[0].mxu0
    %v3331 = vadd.f32 %v2905, %v3330
    %v3332 = vpop.f32.mrb[0].mxu0
    %3333 = vmatprep.mubr.f32.mxu0 0.0
    %3334 = vmatmul.mubr.f32.gmra.mrb[0].mxu0 %v3008
    %v3335 = vpop.f32.mrb[0].mxu0
    %v3336 = vadd.f32 %v2905, %v3335
    %v3337 = vpop.f32.mrb[0].mxu0
    %3338 = vmatprep.mubr.f32.mxu0 0.0
    %3339 = vmatmul.mubr.f32.gmra.mrb[0].mxu0 %v3011
    %v3340 = vpop.f32.mrb[0].mxu0
    %v3341 = vadd.f32 %v2905, %v3340
    %v3342 = vpop.f32.mrb[0].mxu0
    %3343 = vmatprep.mubr.f32.mxu0 0.0
    %3344 = vmatmul.mubr.f32.gmra.mrb[0].mxu0 %v3014
    %v3345 = vpop.f32.mrb[0].mxu0
    %v3346 = vadd.f32 %v2905, %v3345
    %v3347 = vpop.f32.mrb[0].mxu0
    %3348 = vmatprep.mubr.f32.mxu0 0.0
    %3349 = vmatmul.mubr.f32.gmra.mrb[0].mxu0 %v3017
    %v3350 = vpop.f32.mrb[0].mxu0
    %v3351 = vadd.f32 %v2905, %v3350
    %v3352 = vpop.f32.mrb[0].mxu0
    %3353 = vmatprep.mubr.f32.mxu0 0.0
    %3354 = vmatmul.mubr.f32.gmra.mrb[0].mxu0 %v3020
    %v3355 = vpop.f32.mrb[0].mxu0
    %v3356 = vadd.f32 %v2905, %v3355
    %v3357 = vpop.f32.mrb[0].mxu0
    %3358 = vmatprep.mubr.f32.mxu0 0.0
    %3359 = vmatmul.mubr.f32.gmra.mrb[0].mxu0 %v3023
    %v3360 = vpop.f32.mrb[0].mxu0
    %v3361 = vadd.f32 %v2905, %v3360
    %v3362 = vpop.f32.mrb[0].mxu0
    %3363 = vmatprep.mubr.f32.mxu0 0.0
    %3364 = vmatmul.mubr.f32.gmra.mrb[0].mxu0 %v3026
    %v3365 = vpop.f32.mrb[0].mxu0
    %v3366 = vadd.f32 %v2905, %v3365
    %v3367 = vpop.f32.mrb[0].mxu0
    %3368 = vmatprep.mubr.f32.mxu0 0.0
    %3369 = vmatmul.mubr.f32.gmra.mrb[0].mxu0 %v3029
    %v3370 = vpop.f32.mrb[0].mxu0
    %v3371 = vadd.f32 %v2905, %v3370
    %v3372 = vpop.f32.mrb[0].mxu0
    %3373 = vmatprep.mubr.f32.mxu0 0.0
    %3374 = vmatmul.mubr.f32.gmra.mrb[0].mxu0 %v3032
    %v3375 = vpop.f32.mrb[0].mxu0
    %v3376 = vadd.f32 %v2905, %v3375
    %v3377 = vpop.f32.mrb[0].mxu0
    %3378 = vmatprep.mubr.f32.mxu0 0.0
    %3379 = vmatmul.mubr.f32.gmra.mrb[0].mxu0 %v3035
    %v3380 = vpop.f32.mrb[0].mxu0
    %v3381 = vadd.f32 %v2905, %v3380
    %v3382 = vpop.f32.mrb[0].mxu0
    %3383 = vmatprep.mubr.f32.mxu0 0.0
    %3384 = vmatmul.mubr.f32.gmra.mrb[0].mxu0 %v3038
    %v3385 = vpop.f32.mrb[0].mxu0
    %v3386 = vadd.f32 %v2905, %v3385
    %v3387 = vpop.f32.mrb[0].mxu0
    %3388 = vmatprep.mubr.f32.mxu0 0.0
    %3389 = vmatmul.mubr.f32.gmra.mrb[0].mxu0 %v3041
    %v3390 = vpop.f32.mrb[0].mxu0
    %v3391 = vadd.f32 %v2905, %v3390
    %v3392 = vpop.f32.mrb[0].mxu0
    %3393 = vmatprep.mubr.f32.mxu0 0.0
    %3394 = vmatmul.mubr.f32.gmra.mrb[0].mxu0 %v3044
    %v3395 = vpop.f32.mrb[0].mxu0
    %v3396 = vadd.f32 %v2905, %v3395
    %v3397 = vpop.f32.mrb[0].mxu0
    %3398 = vmatprep.mubr.f32.mxu0 0.0
    %3399 = vmatmul.mubr.f32.gmra.mrb[0].mxu0 %v3047
    %v3400 = vpop.f32.mrb[0].mxu0
    %v3401 = vadd.f32 %v2905, %v3400
    %v3402 = vpop.f32.mrb[0].mxu0
    %3403 = vmatprep.mubr.f32.mxu0 0.0
    %3404 = vmatmul.mubr.f32.gmra.mrb[0].mxu0 %v3050
    %v3405 = vpop.f32.mrb[0].mxu0
    %v3406 = vadd.f32 %v2905, %v3405
    %v3407 = vpop.f32.mrb[0].mxu0
    %3408 = vmatprep.mubr.f32.mxu0 0.0
    %3409 = vmatmul.mubr.f32.gmra.mrb[0].mxu0 %v3053
    %v3410 = vpop.f32.mrb[0].mxu0
    %v3411 = vadd.f32 %v2905, %v3410
    %v3412 = vpop.f32.mrb[0].mxu0
    %3413 = vmatprep.mubr.f32.mxu0 0.0
    %3414 = vmatmul.mubr.f32.gmra.mrb[0].mxu0 %v3056
    %v3415 = vpop.f32.mrb[0].mxu0
    %v3416 = vadd.f32 %v2905, %v3415
    %v3417 = vpop.f32.mrb[0].mxu0
    %3418 = vmatprep.mubr.f32.mxu0 0.0
    %3419 = vmatmul.mubr.f32.gmra.mrb[0].mxu0 %v3059
    %v3420 = vpop.f32.mrb[0].mxu0
    %v3421 = vadd.f32 %v2905, %v3420
    %v3422 = vpop.f32.mrb[0].mxu0
    %3423 = vmatprep.mubr.f32.mxu0 0.0
    %3424 = vmatmul.mubr.f32.gmra.mrb[0].mxu0 %v3062
    %v3425 = vpop.f32.mrb[0].mxu0
    %v3426 = vadd.f32 %v2905, %v3425
    %v3427 = vpop.f32.mrb[0].mxu0
    %3428 = vmatprep.mubr.f32.mxu0 0.0
    %3429 = vmatmul.mubr.f32.gmra.mrb[0].mxu0 %v3065
    %v3430 = vpop.f32.mrb[0].mxu0
    %v3431 = vadd.f32 %v2905, %v3430
    %v3432 = vpop.f32.mrb[0].mxu0
    %3433 = vmatprep.mubr.f32.mxu0 0.0
    %3434 = vmatmul.mubr.f32.gmra.mrb[0].mxu0 %v3068
    %v3435 = vpop.f32.mrb[0].mxu0
    %v3436 = vadd.f32 %v2905, %v3435
    %v3437 = vpop.f32.mrb[0].mxu0
    %3438 = vmatprep.mubr.f32.mxu0 0.0
    %3439 = vmatmul.mubr.f32.gmra.mrb[0].mxu0 %v3071
    %v3440 = vpop.f32.mrb[0].mxu0
    %v3441 = vadd.f32 %v2905, %v3440
    %v3442 = vpop.f32.mrb[0].mxu0
    %3443 = vmatprep.mubr.f32.mxu0 0.0
    %3444 = vmatmul.mubr.f32.gmra.mrb[0].mxu0 %v3074
    %v3445 = vpop.f32.mrb[0].mxu0
    %v3446 = vadd.f32 %v2905, %v3445
    %v3447 = vpop.f32.mrb[0].mxu0
    %3448 = vmatprep.mubr.f32.mxu0 0.0
    %3449 = vmatmul.mubr.f32.gmra.mrb[0].mxu0 %v3077
    %v3450 = vpop.f32.mrb[0].mxu0
    %v3451 = vadd.f32 %v2905, %v3450
    %v3452 = vpop.f32.mrb[0].mxu0
    %3453 = vmatprep.mubr.f32.mxu0 0.0
    %3454 = vmatmul.mubr.f32.gmra.mrb[0].mxu0 %v3080
    %v3455 = vpop.f32.mrb[0].mxu0
    %v3456 = vadd.f32 %v2905, %v3455
    %v3457 = vpop.f32.mrb[0].mxu0
    %3458 = vmatprep.mubr.f32.mxu0 0.0
    %3459 = vmatmul.mubr.f32.gmra.mrb[0].mxu0 %v3083
    %v3460 = vpop.f32.mrb[0].mxu0
    %v3461 = vadd.f32 %v2905, %v3460
    %v3462 = vpop.f32.mrb[0].mxu0
    %3463 = vmatprep.mubr.f32.mxu0 0.0
    %3464 = vmatmul.mubr.f32.gmra.mrb[0].mxu0 %v3086
    %v3465 = vpop.f32.mrb[0].mxu0
    %v3466 = vadd.f32 %v2905, %v3465
    %v3467 = vpop.f32.mrb[0].mxu0
    %3468 = vmatprep.mubr.f32.mxu0 0.0
    %3469 = vmatmul.mubr.f32.gmra.mrb[0].mxu0 %v3089
    %v3470 = vpop.f32.mrb[0].mxu0
    %v3471 = vadd.f32 %v2905, %v3470
    %v3472 = vpop.f32.mrb[0].mxu0
    %3473 = vmatprep.mubr.f32.mxu0 0.0
    %3474 = vmatmul.mubr.f32.gmra.mrb[0].mxu0 %v3092
    %v3475 = vpop.f32.mrb[0].mxu0
    %v3476 = vadd.f32 %v2905, %v3475
    %v3477 = vpop.f32.mrb[0].mxu0
    %3478 = vmatprep.mubr.f32.mxu0 0.0
    %3479 = vmatmul.mubr.f32.gmra.mrb[0].mxu0 %v3095
    %v3480 = vpop.f32.mrb[0].mxu0
    %v3481 = vadd.f32 %v2905, %v3480
    %v3482 = vpop.f32.mrb[0].mxu0
    %3483 = vmatprep.mubr.f32.mxu0 0.0
    %3484 = vmatmul.mubr.f32.gmra.mrb[0].mxu0 %v3098
    %v3485 = vpop.f32.mrb[0].mxu0
    %v3486 = vadd.f32 %v2905, %v3485
    %v3487 = vpop.f32.mrb[0].mxu0
    %3488 = vdwg.mxu0
    %v3489 = vmax.f32 %v3171, 0.0
    %v3490 = vmax.f32 %v3176, 0.0
    %v3491 = vmax.f32 %v3181, 0.0
    %v3492 = vmax.f32 %v3186, 0.0
    %v3493 = vmax.f32 %v3191, 0.0
    %v3494 = vmax.f32 %v3196, 0.0
    %v3495 = vmax.f32 %v3201, 0.0
    %v3496 = vmax.f32 %v3206, 0.0
    %v3497 = vmax.f32 %v3211, 0.0
    %v3498 = vmax.f32 %v3216, 0.0
    %v3499 = vmax.f32 %v3221, 0.0
    %v3500 = vmax.f32 %v3226, 0.0
    %v3501 = vmax.f32 %v3231, 0.0
    %v3502 = vmax.f32 %v3236, 0.0
    %v3503 = vmax.f32 %v3241, 0.0
    %v3504 = vmax.f32 %v3246, 0.0
    %v3505 = vmax.f32 %v3251, 0.0
    %v3506 = vmax.f32 %v3256, 0.0
    %v3507 = vmax.f32 %v3261, 0.0
    %v3508 = vmax.f32 %v3266, 0.0
    %v3509 = vmax.f32 %v3271, 0.0
    %v3510 = vmax.f32 %v3276, 0.0
    %v3511 = vmax.f32 %v3281, 0.0
    %v3512 = vmax.f32 %v3286, 0.0
    %v3513 = vmax.f32 %v3291, 0.0
    %v3514 = vmax.f32 %v3296, 0.0
    %v3515 = vmax.f32 %v3301, 0.0
    %v3516 = vmax.f32 %v3306, 0.0
    %v3517 = vmax.f32 %v3311, 0.0
    %v3518 = vmax.f32 %v3316, 0.0
    %v3519 = vmax.f32 %v3321, 0.0
    %v3520 = vmax.f32 %v3326, 0.0
    %v3521 = vmax.f32 %v3331, 0.0
    %v3522 = vmax.f32 %v3336, 0.0
    %v3523 = vmax.f32 %v3341, 0.0
    %v3524 = vmax.f32 %v3346, 0.0
    %v3525 = vmax.f32 %v3351, 0.0
    %v3526 = vmax.f32 %v3356, 0.0
    %v3527 = vmax.f32 %v3361, 0.0
    %v3528 = vmax.f32 %v3366, 0.0
    %v3529 = vmax.f32 %v3371, 0.0
    %v3530 = vmax.f32 %v3376, 0.0
    %v3531 = vmax.f32 %v3381, 0.0
    %v3532 = vmax.f32 %v3386, 0.0
    %v3533 = vmax.f32 %v3391, 0.0
    %v3534 = vmax.f32 %v3396, 0.0
    %v3535 = vmax.f32 %v3401, 0.0
    %v3536 = vmax.f32 %v3406, 0.0
    %v3537 = vmax.f32 %v3411, 0.0
    %v3538 = vmax.f32 %v3416, 0.0
    %v3539 = vmax.f32 %v3421, 0.0
    %v3540 = vmax.f32 %v3426, 0.0
    %v3541 = vmax.f32 %v3431, 0.0
    %v3542 = vmax.f32 %v3436, 0.0
    %v3543 = vmax.f32 %v3441, 0.0
    %v3544 = vmax.f32 %v3446, 0.0
    %v3545 = vmax.f32 %v3451, 0.0
    %v3546 = vmax.f32 %v3456, 0.0
    %v3547 = vmax.f32 %v3461, 0.0
    %v3548 = vmax.f32 %v3466, 0.0
    %v3549 = vmax.f32 %v3471, 0.0
    %v3550 = vmax.f32 %v3476, 0.0
    %v3551 = vmax.f32 %v3481, 0.0
    %v3552 = vmax.f32 %v3486, 0.0
    %3553 = vst.msk [vmem:[%s5] sm:$0xff] %vm2446, %v3489
    %3554 = vst.msk [vmem:[%s5 + $0x8] sm:$0xff] %vm2446, %v3490
    %3555 = vst.msk [vmem:[%s5 + $0x10] sm:$0xff] %vm2446, %v3491
    %3556 = vst.msk [vmem:[%s5 + $0x18] sm:$0xff] %vm2446, %v3492
    %3557 = vst.msk [vmem:[%s5 + $0x20] sm:$0xff] %vm2446, %v3493
    %3558 = vst.msk [vmem:[%s5 + $0x28] sm:$0xff] %vm2446, %v3494
    %3559 = vst.msk [vmem:[%s5 + $0x30] sm:$0xff] %vm2446, %v3495
    %3560 = vst.msk [vmem:[%s5 + $0x38] sm:$0xff] %vm2446, %v3496
    %3561 = vst.msk [vmem:[%s5 + $0x40] sm:$0xff] %vm2446, %v3497
    %3562 = vst.msk [vmem:[%s5 + $0x48] sm:$0xff] %vm2446, %v3498
    %3563 = vst.msk [vmem:[%s5 + $0x50] sm:$0xff] %vm2446, %v3499
    %3564 = vst.msk [vmem:[%s5 + $0x58] sm:$0xff] %vm2446, %v3500
    %3565 = vst.msk [vmem:[%s5 + $0x60] sm:$0xff] %vm2446, %v3501
    %3566 = vst.msk [vmem:[%s5 + $0x68] sm:$0xff] %vm2446, %v3502
    %3567 = vst.msk [vmem:[%s5 + $0x70] sm:$0xff] %vm2446, %v3503
    %3568 = vst.msk [vmem:[%s5 + $0x78] sm:$0xff] %vm2446, %v3504
    %3569 = vst.msk [vmem:[%s5 + $0x80] sm:$0xff] %vm2446, %v3505
    %3570 = vst.msk [vmem:[%s5 + $0x88] sm:$0xff] %vm2446, %v3506
    %3571 = vst.msk [vmem:[%s5 + $0x90] sm:$0xff] %vm2446, %v3507
    %3572 = vst.msk [vmem:[%s5 + $0x98] sm:$0xff] %vm2446, %v3508
    %3573 = vst.msk [vmem:[%s5 + $0xa0] sm:$0xff] %vm2446, %v3509
    %3574 = vst.msk [vmem:[%s5 + $0xa8] sm:$0xff] %vm2446, %v3510
    %3575 = vst.msk [vmem:[%s5 + $0xb0] sm:$0xff] %vm2446, %v3511
    %3576 = vst.msk [vmem:[%s5 + $0xb8] sm:$0xff] %vm2446, %v3512
    %3577 = vst.msk [vmem:[%s5 + $0xc0] sm:$0xff] %vm2446, %v3513
    %3578 = vst.msk [vmem:[%s5 + $0xc8] sm:$0xff] %vm2446, %v3514
    %3579 = vst.msk [vmem:[%s5 + $0xd0] sm:$0xff] %vm2446, %v3515
    %3580 = vst.msk [vmem:[%s5 + $0xd8] sm:$0xff] %vm2446, %v3516
    %3581 = vst.msk [vmem:[%s5 + $0xe0] sm:$0xff] %vm2446, %v3517
    %3582 = vst.msk [vmem:[%s5 + $0xe8] sm:$0xff] %vm2446, %v3518
    %3583 = vst.msk [vmem:[%s5 + $0xf0] sm:$0xff] %vm2446, %v3519
    %3584 = vst.msk [vmem:[%s5 + $0xf8] sm:$0xff] %vm2446, %v3520
    %3585 = vst.msk [vmem:[%s5 + $0x100] sm:$0xff] %vm2446, %v3521
    %3586 = vst.msk [vmem:[%s5 + $0x108] sm:$0xff] %vm2446, %v3522
    %3587 = vst.msk [vmem:[%s5 + $0x110] sm:$0xff] %vm2446, %v3523
    %3588 = vst.msk [vmem:[%s5 + $0x118] sm:$0xff] %vm2446, %v3524
    %3589 = vst.msk [vmem:[%s5 + $0x120] sm:$0xff] %vm2446, %v3525
    %3590 = vst.msk [vmem:[%s5 + $0x128] sm:$0xff] %vm2446, %v3526
    %3591 = vst.msk [vmem:[%s5 + $0x130] sm:$0xff] %vm2446, %v3527
    %3592 = vst.msk [vmem:[%s5 + $0x138] sm:$0xff] %vm2446, %v3528
    %3593 = vst.msk [vmem:[%s5 + $0x140] sm:$0xff] %vm2446, %v3529
    %3594 = vst.msk [vmem:[%s5 + $0x148] sm:$0xff] %vm2446, %v3530
    %3595 = vst.msk [vmem:[%s5 + $0x150] sm:$0xff] %vm2446, %v3531
    %3596 = vst.msk [vmem:[%s5 + $0x158] sm:$0xff] %vm2446, %v3532
    %3597 = vst.msk [vmem:[%s5 + $0x160] sm:$0xff] %vm2446, %v3533
    %3598 = vst.msk [vmem:[%s5 + $0x168] sm:$0xff] %vm2446, %v3534
    %3599 = vst.msk [vmem:[%s5 + $0x170] sm:$0xff] %vm2446, %v3535
    %3600 = vst.msk [vmem:[%s5 + $0x178] sm:$0xff] %vm2446, %v3536
    %3601 = vst.msk [vmem:[%s5 + $0x180] sm:$0xff] %vm2446, %v3537
    %3602 = vst.msk [vmem:[%s5 + $0x188] sm:$0xff] %vm2446, %v3538
    %3603 = vst.msk [vmem:[%s5 + $0x190] sm:$0xff] %vm2446, %v3539
    %3604 = vst.msk [vmem:[%s5 + $0x198] sm:$0xff] %vm2446, %v3540
    %3605 = vst.msk [vmem:[%s5 + $0x1a0] sm:$0xff] %vm2446, %v3541
    %3606 = vst.msk [vmem:[%s5 + $0x1a8] sm:$0xff] %vm2446, %v3542
    %3607 = vst.msk [vmem:[%s5 + $0x1b0] sm:$0xff] %vm2446, %v3543
    %3608 = vst.msk [vmem:[%s5 + $0x1b8] sm:$0xff] %vm2446, %v3544
    %3609 = vst.msk [vmem:[%s5 + $0x1c0] sm:$0xff] %vm2446, %v3545
    %3610 = vst.msk [vmem:[%s5 + $0x1c8] sm:$0xff] %vm2446, %v3546
    %3611 = vst.msk [vmem:[%s5 + $0x1d0] sm:$0xff] %vm2446, %v3547
    %3612 = vst.msk [vmem:[%s5 + $0x1d8] sm:$0xff] %vm2446, %v3548
    %3613 = vst.msk [vmem:[%s5 + $0x1e0] sm:$0xff] %vm2446, %v3549
    %3614 = vst.msk [vmem:[%s5 + $0x1e8] sm:$0xff] %vm2446, %v3550
    %3615 = vst.msk [vmem:[%s5 + $0x1f0] sm:$0xff] %vm2446, %v3551
    %3616 = vst.msk [vmem:[%s5 + $0x1f8] sm:$0xff] %vm2446, %v3552
    %v3617 = vmax.f32 %v3489, %v3491
    %v3618 = vmax.f32 %v3490, %v3492
    %v3619 = vmax.f32 %v3493, %v3495
    %v3620 = vmax.f32 %v3494, %v3496
    %v3621 = vmax.f32 %v3497, %v3499
    %v3622 = vmax.f32 %v3498, %v3500
    %v3623 = vmax.f32 %v3501, %v3503
    %v3624 = vmax.f32 %v3502, %v3504
    %v3625 = vmax.f32 %v3505, %v3507
    %v3626 = vmax.f32 %v3506, %v3508
    %v3627 = vmax.f32 %v3509, %v3511
    %v3628 = vmax.f32 %v3510, %v3512
    %v3629 = vmax.f32 %v3513, %v3515
    %v3630 = vmax.f32 %v3514, %v3516
    %v3631 = vmax.f32 %v3517, %v3519
    %v3632 = vmax.f32 %v3518, %v3520
    %v3633 = vmax.f32 %v3521, %v3523
    %v3634 = vmax.f32 %v3522, %v3524
    %v3635 = vmax.f32 %v3525, %v3527
    %v3636 = vmax.f32 %v3526, %v3528
    %v3637 = vmax.f32 %v3529, %v3531
    %v3638 = vmax.f32 %v3530, %v3532
    %v3639 = vmax.f32 %v3533, %v3535
    %v3640 = vmax.f32 %v3534, %v3536
    %v3641 = vmax.f32 %v3537, %v3539
    %v3642 = vmax.f32 %v3538, %v3540
    %v3643 = vmax.f32 %v3541, %v3543
    %v3644 = vmax.f32 %v3542, %v3544
    %v3645 = vmax.f32 %v3545, %v3547
    %v3646 = vmax.f32 %v3546, %v3548
    %v3647 = vmax.f32 %v3549, %v3551
    %v3648 = vmax.f32 %v3550, %v3552
    %v3665 = vrot.slane %v3617, 1
    %v3666 = vrot.slane %v3619, 1
    %v3667 = vrot.slane %v3621, 1
    %v3668 = vrot.slane %v3623, 1
    %v3669 = vrot.slane %v3625, 1
    %v3670 = vrot.slane %v3627, 1
    %v3671 = vrot.slane %v3629, 1
    %v3672 = vrot.slane %v3631, 1
    %v3673 = vrot.slane %v3633, 1
    %v3674 = vrot.slane %v3635, 1
    %v3675 = vrot.slane %v3637, 1
    %v3676 = vrot.slane %v3639, 1
    %v3677 = vrot.slane %v3641, 1
    %v3678 = vrot.slane %v3643, 1
    %v3679 = vrot.slane %v3645, 1
    %v3680 = vrot.slane %v3647, 1
    %v3697 = vmax.f32 %v3617, %v3665
    %v3698 = vmax.f32 %v3619, %v3666
    %v3699 = vmax.f32 %v3621, %v3667
    %v3700 = vmax.f32 %v3623, %v3668
    %v3701 = vmax.f32 %v3625, %v3669
    %v3702 = vmax.f32 %v3627, %v3670
    %v3703 = vmax.f32 %v3629, %v3671
    %v3704 = vmax.f32 %v3631, %v3672
    %v3705 = vmax.f32 %v3633, %v3673
    %v3706 = vmax.f32 %v3635, %v3674
    %v3707 = vmax.f32 %v3637, %v3675
    %v3708 = vmax.f32 %v3639, %v3676
    %v3709 = vmax.f32 %v3641, %v3677
    %v3710 = vmax.f32 %v3643, %v3678
    %v3711 = vmax.f32 %v3645, %v3679
    %v3712 = vmax.f32 %v3647, %v3680
    %vm3713 = vcmask 57344
    %3714 = vst.msk [vmem:[#allocation4] sm:$0x1] %vm3713, %v3697
    %3715 = vst.msk [vmem:[#allocation4 + $0x8] sm:$0x1] %vm3713, %v3698
    %3716 = vst.msk [vmem:[#allocation4 + $0x10] sm:$0x1] %vm3713, %v3699
    %3717 = vst.msk [vmem:[#allocation4 + $0x18] sm:$0x1] %vm3713, %v3700
    %3718 = vst.msk [vmem:[#allocation4 + $0x20] sm:$0x1] %vm3713, %v3701
    %3719 = vst.msk [vmem:[#allocation4 + $0x28] sm:$0x1] %vm3713, %v3702
    %3720 = vst.msk [vmem:[#allocation4 + $0x30] sm:$0x1] %vm3713, %v3703
    %3721 = vst.msk [vmem:[#allocation4 + $0x38] sm:$0x1] %vm3713, %v3704
    %3722 = vst.msk [vmem:[#allocation4 + $0x40] sm:$0x1] %vm3713, %v3705
    %3723 = vst.msk [vmem:[#allocation4 + $0x48] sm:$0x1] %vm3713, %v3706
    %3724 = vst.msk [vmem:[#allocation4 + $0x50] sm:$0x1] %vm3713, %v3707
    %3725 = vst.msk [vmem:[#allocation4 + $0x58] sm:$0x1] %vm3713, %v3708
    %3726 = vst.msk [vmem:[#allocation4 + $0x60] sm:$0x1] %vm3713, %v3709
    %3727 = vst.msk [vmem:[#allocation4 + $0x68] sm:$0x1] %vm3713, %v3710
    %3728 = vst.msk [vmem:[#allocation4 + $0x70] sm:$0x1] %vm3713, %v3711
    %3729 = vst.msk [vmem:[#allocation4 + $0x78] sm:$0x1] %vm3713, %v3712
    %vm3730 = vcmask 59394
    %3731 = vst.msk [vmem:[#allocation4 - $0x1] sm:$0x4] %vm3730, %v3697
    %3732 = vst.msk [vmem:[#allocation4 + $0x7] sm:$0x4] %vm3730, %v3698
    %3733 = vst.msk [vmem:[#allocation4 + $0xf] sm:$0x4] %vm3730, %v3699
    %3734 = vst.msk [vmem:[#allocation4 + $0x17] sm:$0x4] %vm3730, %v3700
    %3735 = vst.msk [vmem:[#allocation4 + $0x1f] sm:$0x4] %vm3730, %v3701
    %3736 = vst.msk [vmem:[#allocation4 + $0x27] sm:$0x4] %vm3730, %v3702
    %3737 = vst.msk [vmem:[#allocation4 + $0x2f] sm:$0x4] %vm3730, %v3703
    %3738 = vst.msk [vmem:[#allocation4 + $0x37] sm:$0x4] %vm3730, %v3704
    %3739 = vst.msk [vmem:[#allocation4 + $0x3f] sm:$0x4] %vm3730, %v3705
    %3740 = vst.msk [vmem:[#allocation4 + $0x47] sm:$0x4] %vm3730, %v3706
    %3741 = vst.msk [vmem:[#allocation4 + $0x4f] sm:$0x4] %vm3730, %v3707
    %3742 = vst.msk [vmem:[#allocation4 + $0x57] sm:$0x4] %vm3730, %v3708
    %3743 = vst.msk [vmem:[#allocation4 + $0x5f] sm:$0x4] %vm3730, %v3709
    %3744 = vst.msk [vmem:[#allocation4 + $0x67] sm:$0x4] %vm3730, %v3710
    %3745 = vst.msk [vmem:[#allocation4 + $0x6f] sm:$0x4] %vm3730, %v3711
    %3746 = vst.msk [vmem:[#allocation4 + $0x77] sm:$0x4] %vm3730, %v3712
    %vm3747 = vcmask 61444
    %3748 = vst.msk [vmem:[#allocation4 - $0x2] sm:$0x10] %vm3747, %v3697
    %3749 = vst.msk [vmem:[#allocation4 + $0x6] sm:$0x10] %vm3747, %v3698
    %3750 = vst.msk [vmem:[#allocation4 + $0xe] sm:$0x10] %vm3747, %v3699
    %3751 = vst.msk [vmem:[#allocation4 + $0x16] sm:$0x10] %vm3747, %v3700
    %3752 = vst.msk [vmem:[#allocation4 + $0x1e] sm:$0x10] %vm3747, %v3701
    %3753 = vst.msk [vmem:[#allocation4 + $0x26] sm:$0x10] %vm3747, %v3702
    %3754 = vst.msk [vmem:[#allocation4 + $0x2e] sm:$0x10] %vm3747, %v3703
    %3755 = vst.msk [vmem:[#allocation4 + $0x36] sm:$0x10] %vm3747, %v3704
    %3756 = vst.msk [vmem:[#allocation4 + $0x3e] sm:$0x10] %vm3747, %v3705
    %3757 = vst.msk [vmem:[#allocation4 + $0x46] sm:$0x10] %vm3747, %v3706
    %3758 = vst.msk [vmem:[#allocation4 + $0x4e] sm:$0x10] %vm3747, %v3707
    %3759 = vst.msk [vmem:[#allocation4 + $0x56] sm:$0x10] %vm3747, %v3708
    %3760 = vst.msk [vmem:[#allocation4 + $0x5e] sm:$0x10] %vm3747, %v3709
    %3761 = vst.msk [vmem:[#allocation4 + $0x66] sm:$0x10] %vm3747, %v3710
    %3762 = vst.msk [vmem:[#allocation4 + $0x6e] sm:$0x10] %vm3747, %v3711
    %3763 = vst.msk [vmem:[#allocation4 + $0x76] sm:$0x10] %vm3747, %v3712
    %vm3764 = vcmask 63494
    %3765 = vst.msk [vmem:[#allocation4 - $0x3] sm:$0x40] %vm3764, %v3697
    %3766 = vst.msk [vmem:[#allocation4 + $0x5] sm:$0x40] %vm3764, %v3698
    %3767 = vst.msk [vmem:[#allocation4 + $0xd] sm:$0x40] %vm3764, %v3699
    %3768 = vst.msk [vmem:[#allocation4 + $0x15] sm:$0x40] %vm3764, %v3700
    %3769 = vst.msk [vmem:[#allocation4 + $0x1d] sm:$0x40] %vm3764, %v3701
    %3770 = vst.msk [vmem:[#allocation4 + $0x25] sm:$0x40] %vm3764, %v3702
    %3771 = vst.msk [vmem:[#allocation4 + $0x2d] sm:$0x40] %vm3764, %v3703
    %3772 = vst.msk [vmem:[#allocation4 + $0x35] sm:$0x40] %vm3764, %v3704
    %3773 = vst.msk [vmem:[#allocation4 + $0x3d] sm:$0x40] %vm3764, %v3705
    %3774 = vst.msk [vmem:[#allocation4 + $0x45] sm:$0x40] %vm3764, %v3706
    %3775 = vst.msk [vmem:[#allocation4 + $0x4d] sm:$0x40] %vm3764, %v3707
    %3776 = vst.msk [vmem:[#allocation4 + $0x55] sm:$0x40] %vm3764, %v3708
    %3777 = vst.msk [vmem:[#allocation4 + $0x5d] sm:$0x40] %vm3764, %v3709
    %3778 = vst.msk [vmem:[#allocation4 + $0x65] sm:$0x40] %vm3764, %v3710
    %3779 = vst.msk [vmem:[#allocation4 + $0x6d] sm:$0x40] %vm3764, %v3711
    %3780 = vst.msk [vmem:[#allocation4 + $0x75] sm:$0x40] %vm3764, %v3712
    %v3797 = vrot.slane %v3618, 1
    %v3798 = vrot.slane %v3620, 1
    %v3799 = vrot.slane %v3622, 1
    %v3800 = vrot.slane %v3624, 1
    %v3801 = vrot.slane %v3626, 1
    %v3802 = vrot.slane %v3628, 1
    %v3803 = vrot.slane %v3630, 1
    %v3804 = vrot.slane %v3632, 1
    %v3805 = vrot.slane %v3634, 1
    %v3806 = vrot.slane %v3636, 1
    %v3807 = vrot.slane %v3638, 1
    %v3808 = vrot.slane %v3640, 1
    %v3809 = vrot.slane %v3642, 1
    %v3810 = vrot.slane %v3644, 1
    %v3811 = vrot.slane %v3646, 1
    %v3812 = vrot.slane %v3648, 1
    %v3829 = vmax.f32 %v3618, %v3797
    %v3830 = vmax.f32 %v3620, %v3798
    %v3831 = vmax.f32 %v3622, %v3799
    %v3832 = vmax.f32 %v3624, %v3800
    %v3833 = vmax.f32 %v3626, %v3801
    %v3834 = vmax.f32 %v3628, %v3802
    %v3835 = vmax.f32 %v3630, %v3803
    %v3836 = vmax.f32 %v3632, %v3804
    %v3837 = vmax.f32 %v3634, %v3805
    %v3838 = vmax.f32 %v3636, %v3806
    %v3839 = vmax.f32 %v3638, %v3807
    %v3840 = vmax.f32 %v3640, %v3808
    %v3841 = vmax.f32 %v3642, %v3809
    %v3842 = vmax.f32 %v3644, %v3810
    %v3843 = vmax.f32 %v3646, %v3811
    %v3844 = vmax.f32 %v3648, %v3812
    %3845 = vst.msk [vmem:[#allocation4 + $0x4] sm:$0x1] %vm3713, %v3829
    %3846 = vst.msk [vmem:[#allocation4 + $0xc] sm:$0x1] %vm3713, %v3830
    %3847 = vst.msk [vmem:[#allocation4 + $0x14] sm:$0x1] %vm3713, %v3831
    %3848 = vst.msk [vmem:[#allocation4 + $0x1c] sm:$0x1] %vm3713, %v3832
    %3849 = vst.msk [vmem:[#allocation4 + $0x24] sm:$0x1] %vm3713, %v3833
    %3850 = vst.msk [vmem:[#allocation4 + $0x2c] sm:$0x1] %vm3713, %v3834
    %3851 = vst.msk [vmem:[#allocation4 + $0x34] sm:$0x1] %vm3713, %v3835
    %3852 = vst.msk [vmem:[#allocation4 + $0x3c] sm:$0x1] %vm3713, %v3836
    %3853 = vst.msk [vmem:[#allocation4 + $0x44] sm:$0x1] %vm3713, %v3837
    %3854 = vst.msk [vmem:[#allocation4 + $0x4c] sm:$0x1] %vm3713, %v3838
    %3855 = vst.msk [vmem:[#allocation4 + $0x54] sm:$0x1] %vm3713, %v3839
    %3856 = vst.msk [vmem:[#allocation4 + $0x5c] sm:$0x1] %vm3713, %v3840
    %3857 = vst.msk [vmem:[#allocation4 + $0x64] sm:$0x1] %vm3713, %v3841
    %3858 = vst.msk [vmem:[#allocation4 + $0x6c] sm:$0x1] %vm3713, %v3842
    %3859 = vst.msk [vmem:[#allocation4 + $0x74] sm:$0x1] %vm3713, %v3843
    %3860 = vst.msk [vmem:[#allocation4 + $0x7c] sm:$0x1] %vm3713, %v3844
    %3861 = vst.msk [vmem:[#allocation4 + $0x3] sm:$0x4] %vm3730, %v3829
    %3862 = vst.msk [vmem:[#allocation4 + $0xb] sm:$0x4] %vm3730, %v3830
    %3863 = vst.msk [vmem:[#allocation4 + $0x13] sm:$0x4] %vm3730, %v3831
    %3864 = vst.msk [vmem:[#allocation4 + $0x1b] sm:$0x4] %vm3730, %v3832
    %3865 = vst.msk [vmem:[#allocation4 + $0x23] sm:$0x4] %vm3730, %v3833
    %3866 = vst.msk [vmem:[#allocation4 + $0x2b] sm:$0x4] %vm3730, %v3834
    %3867 = vst.msk [vmem:[#allocation4 + $0x33] sm:$0x4] %vm3730, %v3835
    %3868 = vst.msk [vmem:[#allocation4 + $0x3b] sm:$0x4] %vm3730, %v3836
    %3869 = vst.msk [vmem:[#allocation4 + $0x43] sm:$0x4] %vm3730, %v3837
    %3870 = vst.msk [vmem:[#allocation4 + $0x4b] sm:$0x4] %vm3730, %v3838
    %3871 = vst.msk [vmem:[#allocation4 + $0x53] sm:$0x4] %vm3730, %v3839
    %3872 = vst.msk [vmem:[#allocation4 + $0x5b] sm:$0x4] %vm3730, %v3840
    %3873 = vst.msk [vmem:[#allocation4 + $0x63] sm:$0x4] %vm3730, %v3841
    %3874 = vst.msk [vmem:[#allocation4 + $0x6b] sm:$0x4] %vm3730, %v3842
    %3875 = vst.msk [vmem:[#allocation4 + $0x73] sm:$0x4] %vm3730, %v3843
    %3876 = vst.msk [vmem:[#allocation4 + $0x7b] sm:$0x4] %vm3730, %v3844
    %3877 = vst.msk [vmem:[#allocation4 + $0x2] sm:$0x10] %vm3747, %v3829
    %3878 = vst.msk [vmem:[#allocation4 + $0xa] sm:$0x10] %vm3747, %v3830
    %3879 = vst.msk [vmem:[#allocation4 + $0x12] sm:$0x10] %vm3747, %v3831
    %3880 = vst.msk [vmem:[#allocation4 + $0x1a] sm:$0x10] %vm3747, %v3832
    %3881 = vst.msk [vmem:[#allocation4 + $0x22] sm:$0x10] %vm3747, %v3833
    %3882 = vst.msk [vmem:[#allocation4 + $0x2a] sm:$0x10] %vm3747, %v3834
    %3883 = vst.msk [vmem:[#allocation4 + $0x32] sm:$0x10] %vm3747, %v3835
    %3884 = vst.msk [vmem:[#allocation4 + $0x3a] sm:$0x10] %vm3747, %v3836
    %3885 = vst.msk [vmem:[#allocation4 + $0x42] sm:$0x10] %vm3747, %v3837
    %3886 = vst.msk [vmem:[#allocation4 + $0x4a] sm:$0x10] %vm3747, %v3838
    %3887 = vst.msk [vmem:[#allocation4 + $0x52] sm:$0x10] %vm3747, %v3839
    %3888 = vst.msk [vmem:[#allocation4 + $0x5a] sm:$0x10] %vm3747, %v3840
    %3889 = vst.msk [vmem:[#allocation4 + $0x62] sm:$0x10] %vm3747, %v3841
    %3890 = vst.msk [vmem:[#allocation4 + $0x6a] sm:$0x10] %vm3747, %v3842
    %3891 = vst.msk [vmem:[#allocation4 + $0x72] sm:$0x10] %vm3747, %v3843
    %3892 = vst.msk [vmem:[#allocation4 + $0x7a] sm:$0x10] %vm3747, %v3844
    %3893 = vst.msk [vmem:[#allocation4 + $0x1] sm:$0x40] %vm3764, %v3829
    %3894 = vst.msk [vmem:[#allocation4 + $0x9] sm:$0x40] %vm3764, %v3830
    %3895 = vst.msk [vmem:[#allocation4 + $0x11] sm:$0x40] %vm3764, %v3831
    %3896 = vst.msk [vmem:[#allocation4 + $0x19] sm:$0x40] %vm3764, %v3832
    %3897 = vst.msk [vmem:[#allocation4 + $0x21] sm:$0x40] %vm3764, %v3833
    %3898 = vst.msk [vmem:[#allocation4 + $0x29] sm:$0x40] %vm3764, %v3834
    %3899 = vst.msk [vmem:[#allocation4 + $0x31] sm:$0x40] %vm3764, %v3835
    %3900 = vst.msk [vmem:[#allocation4 + $0x39] sm:$0x40] %vm3764, %v3836
    %3901 = vst.msk [vmem:[#allocation4 + $0x41] sm:$0x40] %vm3764, %v3837
    %3902 = vst.msk [vmem:[#allocation4 + $0x49] sm:$0x40] %vm3764, %v3838
    %3903 = vst.msk [vmem:[#allocation4 + $0x51] sm:$0x40] %vm3764, %v3839
    %3904 = vst.msk [vmem:[#allocation4 + $0x59] sm:$0x40] %vm3764, %v3840
    %3905 = vst.msk [vmem:[#allocation4 + $0x61] sm:$0x40] %vm3764, %v3841
    %3906 = vst.msk [vmem:[#allocation4 + $0x69] sm:$0x40] %vm3764, %v3842
    %3907 = vst.msk [vmem:[#allocation4 + $0x71] sm:$0x40] %vm3764, %v3843
    %3908 = vst.msk [vmem:[#allocation4 + $0x79] sm:$0x40] %vm3764, %v3844
    %v3909 = vld [vmem:[#allocation4] sm:$0xff]
    %v3910 = vld [vmem:[#allocation4 + $0x8] sm:$0xff]
    %v3911 = vld [vmem:[#allocation4 + $0x10] sm:$0xff]
    %v3912 = vld [vmem:[#allocation4 + $0x18] sm:$0xff]
    %v3913 = vld [vmem:[#allocation4 + $0x20] sm:$0xff]
    %v3914 = vld [vmem:[#allocation4 + $0x28] sm:$0xff]
    %v3915 = vld [vmem:[#allocation4 + $0x30] sm:$0xff]
    %v3916 = vld [vmem:[#allocation4 + $0x38] sm:$0xff]
    %v3917 = vld [vmem:[#allocation4 + $0x40] sm:$0xff]
    %v3918 = vld [vmem:[#allocation4 + $0x48] sm:$0xff]
    %v3919 = vld [vmem:[#allocation4 + $0x50] sm:$0xff]
    %v3920 = vld [vmem:[#allocation4 + $0x58] sm:$0xff]
    %v3921 = vld [vmem:[#allocation4 + $0x60] sm:$0xff]
    %v3922 = vld [vmem:[#allocation4 + $0x68] sm:$0xff]
    %v3923 = vld [vmem:[#allocation4 + $0x70] sm:$0xff]
    %v3924 = vld [vmem:[#allocation4 + $0x78] sm:$0xff]
    %v3925 = vld [vmem:[%s3] sm:$0xff]
    %v3926 = vld [vmem:[%s3 + $0x8] sm:$0xff]
    %v3927 = vld [vmem:[%s3 + $0x10] sm:$0xff]
    %v3928 = vld [vmem:[%s3 + $0x18] sm:$0xff]
    %v3929 = vld [vmem:[%s3 + $0x20] sm:$0xff]
    %v3930 = vld [vmem:[%s3 + $0x28] sm:$0xff]
    %v3931 = vld [vmem:[%s3 + $0x30] sm:$0xff]
    %v3932 = vld [vmem:[%s3 + $0x38] sm:$0xff]
    %v3933 = vld [vmem:[%s3 + $0x40] sm:$0xff]
    %v3934 = vld [vmem:[%s4] sm:$0x1]
    %3935 = vst.msk [vmem:[#allocation3] sm:$0xff] %vm2446, 0.0
    %vm3936 = vcmask 58368
    %3937 = vst.msk [vmem:[#allocation3 + $0x8] sm:$0x3] %vm3936, 0.0
    %3938 = vst.msk [vmem:[#allocation3 + $0x10] sm:$0xff] %vm2446, 0.0
    %3939 = vst.msk [vmem:[#allocation3 + $0x18] sm:$0x3] %vm3936, 0.0
    %3940 = vst.msk [vmem:[#allocation3 + $0x20] sm:$0xff] %vm2446, 0.0
    %3941 = vst.msk [vmem:[#allocation3 + $0x28] sm:$0x3] %vm3936, 0.0
    %3942 = vst.msk [vmem:[#allocation3 + $0x30] sm:$0xff] %vm2446, 0.0
    %3943 = vst.msk [vmem:[#allocation3 + $0x38] sm:$0x3] %vm3936, 0.0
    %3944 = vst.msk [vmem:[#allocation3 + $0x40] sm:$0xff] %vm2446, 0.0
    %3945 = vst.msk [vmem:[#allocation3 + $0x48] sm:$0x3] %vm3936, 0.0
    %3946 = vst.msk [vmem:[#allocation3 + $0x50] sm:$0xff] %vm2446, 0.0
    %3947 = vst.msk [vmem:[#allocation3 + $0x58] sm:$0x3] %vm3936, 0.0
    %3948 = vst.msk [vmem:[#allocation3 + $0x60] sm:$0xff] %vm2446, 0.0
    %3949 = vst.msk [vmem:[#allocation3 + $0x68] sm:$0x3] %vm3936, 0.0
    %3950 = vst.msk [vmem:[#allocation3 + $0x70] sm:$0xff] %vm2446, 0.0
    %3951 = vst.msk [vmem:[#allocation3 + $0x78] sm:$0x3] %vm3936, 0.0
    %3952 = vst.msk [vmem:[#allocation3 + $0x80] sm:$0xff] %vm2446, 0.0
    %3953 = vst.msk [vmem:[#allocation3 + $0x88] sm:$0x3] %vm3936, 0.0
    %3954 = vst.msk [vmem:[#allocation3 + $0x90] sm:$0xff] %vm2446, 0.0
    %3955 = vst.msk [vmem:[#allocation3 + $0x98] sm:$0x3] %vm3936, 0.0
    %3956 = vst.msk [vmem:[#allocation3 + $0xa0] sm:$0xff] %vm2446, 0.0
    %3957 = vst.msk [vmem:[#allocation3 + $0xa8] sm:$0x3] %vm3936, 0.0
    %3958 = vst.msk [vmem:[#allocation3 + $0xb0] sm:$0xff] %vm2446, 0.0
    %3959 = vst.msk [vmem:[#allocation3 + $0xb8] sm:$0x3] %vm3936, 0.0
    %3960 = vst.msk [vmem:[#allocation3 + $0xc0] sm:$0xff] %vm2446, 0.0
    %3961 = vst.msk [vmem:[#allocation3 + $0xc8] sm:$0x3] %vm3936, 0.0
    %3962 = vst.msk [vmem:[#allocation3 + $0xd0] sm:$0xff] %vm2446, 0.0
    %3963 = vst.msk [vmem:[#allocation3 + $0xd8] sm:$0x3] %vm3936, 0.0
    %3964 = vst.msk [vmem:[#allocation3 + $0xe0] sm:$0xff] %vm2446, 0.0
    %3965 = vst.msk [vmem:[#allocation3 + $0xe8] sm:$0x3] %vm3936, 0.0
    %3966 = vst.msk [vmem:[#allocation3 + $0xf0] sm:$0xff] %vm2446, 0.0
    %3967 = vst.msk [vmem:[#allocation3 + $0xf8] sm:$0x3] %vm3936, 0.0
    %3968 = vst.msk [vmem:[#allocation3 + $0x100] sm:$0xff] %vm2446, 0.0
    %3969 = vst.msk [vmem:[#allocation3 + $0x108] sm:$0x3] %vm3936, 0.0
    %3970 = vst.msk [vmem:[#allocation3 + $0x110] sm:$0xff] %vm2446, 0.0
    %3971 = vst.msk [vmem:[#allocation3 + $0x118] sm:$0x3] %vm3936, 0.0
    %3972 = vst.msk [vmem:[#allocation3 + $0x120] sm:$0xff] %vm2446, 0.0
    %3973 = vst.msk [vmem:[#allocation3 + $0x128] sm:$0x3] %vm3936, 0.0
    %3974 = vst.msk [vmem:[#allocation3 + $0x130] sm:$0xff] %vm2446, 0.0
    %3975 = vst.msk [vmem:[#allocation3 + $0x138] sm:$0x3] %vm3936, 0.0
    %s3976 = scalar_lea.vmem [#allocation3], 16
    %3977 = vst.msk [vmem:[%s3976 + $0x1] sm:$0xff] %vm2446, %v3909
    %3978 = vst.msk [vmem:[%s3976 + $0x11] sm:$0xff] %vm2446, %v3910
    %3979 = vst.msk [vmem:[%s3976 + $0x21] sm:$0xff] %vm2446, %v3911
    %3980 = vst.msk [vmem:[%s3976 + $0x31] sm:$0xff] %vm2446, %v3912
    %3981 = vst.msk [vmem:[%s3976 + $0x41] sm:$0xff] %vm2446, %v3913
    %3982 = vst.msk [vmem:[%s3976 + $0x51] sm:$0xff] %vm2446, %v3914
    %3983 = vst.msk [vmem:[%s3976 + $0x61] sm:$0xff] %vm2446, %v3915
    %3984 = vst.msk [vmem:[%s3976 + $0x71] sm:$0xff] %vm2446, %v3916
    %3985 = vst.msk [vmem:[%s3976 + $0xa1] sm:$0xff] %vm2446, %v3917
    %3986 = vst.msk [vmem:[%s3976 + $0xb1] sm:$0xff] %vm2446, %v3918
    %3987 = vst.msk [vmem:[%s3976 + $0xc1] sm:$0xff] %vm2446, %v3919
    %3988 = vst.msk [vmem:[%s3976 + $0xd1] sm:$0xff] %vm2446, %v3920
    %3989 = vst.msk [vmem:[%s3976 + $0xe1] sm:$0xff] %vm2446, %v3921
    %3990 = vst.msk [vmem:[%s3976 + $0xf1] sm:$0xff] %vm2446, %v3922
    %3991 = vst.msk [vmem:[%s3976 + $0x101] sm:$0xff] %vm2446, %v3923
    %3992 = vst.msk [vmem:[%s3976 + $0x111] sm:$0xff] %vm2446, %v3924
    %v3993 = vld [vmem:[#allocation3] sm:$0xff]
    %v3994 = vld [vmem:[#allocation3 + $0x8] sm:$0x3]
    %v3995 = vld [vmem:[#allocation3 + $0x10] sm:$0xff]
    %v3996 = vld [vmem:[#allocation3 + $0x18] sm:$0x3]
    %v3997 = vld [vmem:[#allocation3 + $0x20] sm:$0xff]
    %v3998 = vld [vmem:[#allocation3 + $0x28] sm:$0x3]
    %v3999 = vld [vmem:[#allocation3 + $0x30] sm:$0xff]
    %v4000 = vld [vmem:[#allocation3 + $0x38] sm:$0x3]
    %v4001 = vld [vmem:[#allocation3 + $0x40] sm:$0xff]
    %v4002 = vld [vmem:[#allocation3 + $0x48] sm:$0x3]
    %v4003 = vld [vmem:[#allocation3 + $0x50] sm:$0xff]
    %v4004 = vld [vmem:[#allocation3 + $0x58] sm:$0x3]
    %v4005 = vld [vmem:[#allocation3 + $0x60] sm:$0xff]
    %v4006 = vld [vmem:[#allocation3 + $0x68] sm:$0x3]
    %v4007 = vld [vmem:[#allocation3 + $0x70] sm:$0xff]
    %v4008 = vld [vmem:[#allocation3 + $0x78] sm:$0x3]
    %v4009 = vld [vmem:[#allocation3 + $0x80] sm:$0xff]
    %v4010 = vld [vmem:[#allocation3 + $0x88] sm:$0x3]
    %v4011 = vld [vmem:[#allocation3 + $0x90] sm:$0xff]
    %v4012 = vld [vmem:[#allocation3 + $0x98] sm:$0x3]
    %v4013 = vld [vmem:[#allocation3 + $0xa0] sm:$0xff]
    %v4014 = vld [vmem:[#allocation3 + $0xa8] sm:$0x3]
    %v4015 = vld [vmem:[#allocation3 + $0xb0] sm:$0xff]
    %v4016 = vld [vmem:[#allocation3 + $0xb8] sm:$0x3]
    %v4017 = vld [vmem:[#allocation3 + $0xc0] sm:$0xff]
    %v4018 = vld [vmem:[#allocation3 + $0xc8] sm:$0x3]
    %v4019 = vld [vmem:[#allocation3 + $0xd0] sm:$0xff]
    %v4020 = vld [vmem:[#allocation3 + $0xd8] sm:$0x3]
    %v4021 = vld [vmem:[#allocation3 + $0xe0] sm:$0xff]
    %v4022 = vld [vmem:[#allocation3 + $0xe8] sm:$0x3]
    %v4023 = vld [vmem:[#allocation3 + $0xf0] sm:$0xff]
    %v4024 = vld [vmem:[#allocation3 + $0xf8] sm:$0x3]
    %v4025 = vld [vmem:[#allocation3 + $0x100] sm:$0xff]
    %v4026 = vld [vmem:[#allocation3 + $0x108] sm:$0x3]
    %v4027 = vld [vmem:[#allocation3 + $0x110] sm:$0xff]
    %v4028 = vld [vmem:[#allocation3 + $0x118] sm:$0x3]
    %v4029 = vld [vmem:[#allocation3 + $0x120] sm:$0xff]
    %v4030 = vld [vmem:[#allocation3 + $0x128] sm:$0x3]
    %v4031 = vld [vmem:[#allocation3 + $0x130] sm:$0xff]
    %v4032 = vld [vmem:[#allocation3 + $0x138] sm:$0x3]
    %v4065 = vrot.slane %v3993, 1
    %v4066 = vrot.slane %v3994, 1
    %v4067 = vsel %vm472, %v4065, %v4066
    %v4068 = vrot.slane %v3995, 1
    %v4069 = vrot.slane %v3996, 1
    %v4070 = vsel %vm472, %v4068, %v4069
    %v4071 = vrot.slane %v3997, 1
    %v4072 = vrot.slane %v3998, 1
    %v4073 = vsel %vm472, %v4071, %v4072
    %v4074 = vrot.slane %v3999, 1
    %v4075 = vrot.slane %v4000, 1
    %v4076 = vsel %vm472, %v4074, %v4075
    %v4077 = vrot.slane %v4001, 1
    %v4078 = vrot.slane %v4002, 1
    %v4079 = vsel %vm472, %v4077, %v4078
    %v4080 = vrot.slane %v4003, 1
    %v4081 = vrot.slane %v4004, 1
    %v4082 = vsel %vm472, %v4080, %v4081
    %v4083 = vrot.slane %v4005, 1
    %v4084 = vrot.slane %v4006, 1
    %v4085 = vsel %vm472, %v4083, %v4084
    %v4086 = vrot.slane %v4007, 1
    %v4087 = vrot.slane %v4008, 1
    %v4088 = vsel %vm472, %v4086, %v4087
    %v4089 = vrot.slane %v4013, 1
    %v4090 = vrot.slane %v4014, 1
    %v4091 = vsel %vm472, %v4089, %v4090
    %v4092 = vrot.slane %v4015, 1
    %v4093 = vrot.slane %v4016, 1
    %v4094 = vsel %vm472, %v4092, %v4093
    %v4095 = vrot.slane %v4017, 1
    %v4096 = vrot.slane %v4018, 1
    %v4097 = vsel %vm472, %v4095, %v4096
    %v4098 = vrot.slane %v4019, 1
    %v4099 = vrot.slane %v4020, 1
    %v4100 = vsel %vm472, %v4098, %v4099
    %v4101 = vrot.slane %v4021, 1
    %v4102 = vrot.slane %v4022, 1
    %v4103 = vsel %vm472, %v4101, %v4102
    %v4104 = vrot.slane %v4023, 1
    %v4105 = vrot.slane %v4024, 1
    %v4106 = vsel %vm472, %v4104, %v4105
    %v4107 = vrot.slane %v4025, 1
    %v4108 = vrot.slane %v4026, 1
    %v4109 = vsel %vm472, %v4107, %v4108
    %v4110 = vrot.slane %v4027, 1
    %v4111 = vrot.slane %v4028, 1
    %v4112 = vsel %vm472, %v4110, %v4111
    %4113 = vrot.lane.b32.xlu0 %v4067, 8
    %v4114 = vpop.permute.xlu0 %4113
    %4115 = vrot.lane.b32.xlu0 %v4070, 8
    %v4116 = vpop.permute.xlu0 %4115
    %4117 = vrot.lane.b32.xlu0 %v4073, 8
    %v4118 = vpop.permute.xlu0 %4117
    %4119 = vrot.lane.b32.xlu0 %v4076, 8
    %v4120 = vpop.permute.xlu0 %4119
    %4121 = vrot.lane.b32.xlu0 %v4079, 8
    %v4122 = vpop.permute.xlu0 %4121
    %4123 = vrot.lane.b32.xlu0 %v4082, 8
    %v4124 = vpop.permute.xlu0 %4123
    %4125 = vrot.lane.b32.xlu0 %v4085, 8
    %v4126 = vpop.permute.xlu0 %4125
    %4127 = vrot.lane.b32.xlu0 %v4088, 8
    %v4128 = vpop.permute.xlu0 %4127
    %4129 = vrot.lane.b32.xlu0 %v4091, 8
    %v4130 = vpop.permute.xlu0 %4129
    %4131 = vrot.lane.b32.xlu0 %v4094, 8
    %v4132 = vpop.permute.xlu0 %4131
    %4133 = vrot.lane.b32.xlu0 %v4097, 8
    %v4134 = vpop.permute.xlu0 %4133
    %4135 = vrot.lane.b32.xlu0 %v4100, 8
    %v4136 = vpop.permute.xlu0 %4135
    %4137 = vrot.lane.b32.xlu0 %v4103, 8
    %v4138 = vpop.permute.xlu0 %4137
    %4139 = vrot.lane.b32.xlu0 %v4106, 8
    %v4140 = vpop.permute.xlu0 %4139
    %4141 = vrot.lane.b32.xlu0 %v4109, 8
    %v4142 = vpop.permute.xlu0 %4141
    %4143 = vrot.lane.b32.xlu0 %v4112, 8
    %v4144 = vpop.permute.xlu0 %4143
    %v4161 = vrot.slane %v3993, 2
    %v4162 = vrot.slane %v3994, 2
    %v4163 = vsel %vm825, %v4161, %v4162
    %v4164 = vrot.slane %v3995, 2
    %v4165 = vrot.slane %v3996, 2
    %v4166 = vsel %vm825, %v4164, %v4165
    %v4167 = vrot.slane %v3997, 2
    %v4168 = vrot.slane %v3998, 2
    %v4169 = vsel %vm825, %v4167, %v4168
    %v4170 = vrot.slane %v3999, 2
    %v4171 = vrot.slane %v4000, 2
    %v4172 = vsel %vm825, %v4170, %v4171
    %v4173 = vrot.slane %v4001, 2
    %v4174 = vrot.slane %v4002, 2
    %v4175 = vsel %vm825, %v4173, %v4174
    %v4176 = vrot.slane %v4003, 2
    %v4177 = vrot.slane %v4004, 2
    %v4178 = vsel %vm825, %v4176, %v4177
    %v4179 = vrot.slane %v4005, 2
    %v4180 = vrot.slane %v4006, 2
    %v4181 = vsel %vm825, %v4179, %v4180
    %v4182 = vrot.slane %v4007, 2
    %v4183 = vrot.slane %v4008, 2
    %v4184 = vsel %vm825, %v4182, %v4183
    %v4185 = vrot.slane %v4013, 2
    %v4186 = vrot.slane %v4014, 2
    %v4187 = vsel %vm825, %v4185, %v4186
    %v4188 = vrot.slane %v4015, 2
    %v4189 = vrot.slane %v4016, 2
    %v4190 = vsel %vm825, %v4188, %v4189
    %v4191 = vrot.slane %v4017, 2
    %v4192 = vrot.slane %v4018, 2
    %v4193 = vsel %vm825, %v4191, %v4192
    %v4194 = vrot.slane %v4019, 2
    %v4195 = vrot.slane %v4020, 2
    %v4196 = vsel %vm825, %v4194, %v4195
    %v4197 = vrot.slane %v4021, 2
    %v4198 = vrot.slane %v4022, 2
    %v4199 = vsel %vm825, %v4197, %v4198
    %v4200 = vrot.slane %v4023, 2
    %v4201 = vrot.slane %v4024, 2
    %v4202 = vsel %vm825, %v4200, %v4201
    %v4203 = vrot.slane %v4025, 2
    %v4204 = vrot.slane %v4026, 2
    %v4205 = vsel %vm825, %v4203, %v4204
    %v4206 = vrot.slane %v4027, 2
    %v4207 = vrot.slane %v4028, 2
    %v4208 = vsel %vm825, %v4206, %v4207
    %4209 = vrot.lane.b32.xlu0 %v4163, 16
    %v4210 = vpop.permute.xlu0 %4209
    %4211 = vrot.lane.b32.xlu0 %v4166, 16
    %v4212 = vpop.permute.xlu0 %4211
    %4213 = vrot.lane.b32.xlu0 %v4169, 16
    %v4214 = vpop.permute.xlu0 %4213
    %4215 = vrot.lane.b32.xlu0 %v4172, 16
    %v4216 = vpop.permute.xlu0 %4215
    %4217 = vrot.lane.b32.xlu0 %v4175, 16
    %v4218 = vpop.permute.xlu0 %4217
    %4219 = vrot.lane.b32.xlu0 %v4178, 16
    %v4220 = vpop.permute.xlu0 %4219
    %4221 = vrot.lane.b32.xlu0 %v4181, 16
    %v4222 = vpop.permute.xlu0 %4221
    %4223 = vrot.lane.b32.xlu0 %v4184, 16
    %v4224 = vpop.permute.xlu0 %4223
    %4225 = vrot.lane.b32.xlu0 %v4187, 16
    %v4226 = vpop.permute.xlu0 %4225
    %4227 = vrot.lane.b32.xlu0 %v4190, 16
    %v4228 = vpop.permute.xlu0 %4227
    %4229 = vrot.lane.b32.xlu0 %v4193, 16
    %v4230 = vpop.permute.xlu0 %4229
    %4231 = vrot.lane.b32.xlu0 %v4196, 16
    %v4232 = vpop.permute.xlu0 %4231
    %4233 = vrot.lane.b32.xlu0 %v4199, 16
    %v4234 = vpop.permute.xlu0 %4233
    %4235 = vrot.lane.b32.xlu0 %v4202, 16
    %v4236 = vpop.permute.xlu0 %4235
    %4237 = vrot.lane.b32.xlu0 %v4205, 16
    %v4238 = vpop.permute.xlu0 %4237
    %4239 = vrot.lane.b32.xlu0 %v4208, 16
    %v4240 = vpop.permute.xlu0 %4239
    %4259 = vrot.lane.b32.xlu0 %v3995, 24
    %v4260 = vpop.permute.xlu0 %4259
    %4261 = vrot.lane.b32.xlu0 %v3997, 24
    %v4262 = vpop.permute.xlu0 %4261
    %4263 = vrot.lane.b32.xlu0 %v3999, 24
    %v4264 = vpop.permute.xlu0 %4263
    %4265 = vrot.lane.b32.xlu0 %v4001, 24
    %v4266 = vpop.permute.xlu0 %4265
    %4267 = vrot.lane.b32.xlu0 %v4003, 24
    %v4268 = vpop.permute.xlu0 %4267
    %4269 = vrot.lane.b32.xlu0 %v4005, 24
    %v4270 = vpop.permute.xlu0 %4269
    %4271 = vrot.lane.b32.xlu0 %v4007, 24
    %v4272 = vpop.permute.xlu0 %4271
    %4273 = vrot.lane.b32.xlu0 %v4009, 24
    %v4274 = vpop.permute.xlu0 %4273
    %4275 = vrot.lane.b32.xlu0 %v4015, 24
    %v4276 = vpop.permute.xlu0 %4275
    %4277 = vrot.lane.b32.xlu0 %v4017, 24
    %v4278 = vpop.permute.xlu0 %4277
    %4279 = vrot.lane.b32.xlu0 %v4019, 24
    %v4280 = vpop.permute.xlu0 %4279
    %4281 = vrot.lane.b32.xlu0 %v4021, 24
    %v4282 = vpop.permute.xlu0 %4281
    %4283 = vrot.lane.b32.xlu0 %v4023, 24
    %v4284 = vpop.permute.xlu0 %4283
    %4285 = vrot.lane.b32.xlu0 %v4025, 24
    %v4286 = vpop.permute.xlu0 %4285
    %4287 = vrot.lane.b32.xlu0 %v4027, 24
    %v4288 = vpop.permute.xlu0 %4287
    %4289 = vrot.lane.b32.xlu0 %v4029, 24
    %v4290 = vpop.permute.xlu0 %4289
    %v4309 = vrot.slane %v4009, 1
    %v4310 = vrot.slane %v4010, 1
    %v4311 = vsel %vm472, %v4309, %v4310
    %v4312 = vrot.slane %v4029, 1
    %v4313 = vrot.slane %v4030, 1
    %v4314 = vsel %vm472, %v4312, %v4313
    %4315 = vrot.lane.b32.xlu0 %v4070, 32
    %v4316 = vpop.permute.xlu0 %4315
    %4317 = vrot.lane.b32.xlu0 %v4073, 32
    %v4318 = vpop.permute.xlu0 %4317
    %4319 = vrot.lane.b32.xlu0 %v4076, 32
    %v4320 = vpop.permute.xlu0 %4319
    %4321 = vrot.lane.b32.xlu0 %v4079, 32
    %v4322 = vpop.permute.xlu0 %4321
    %4323 = vrot.lane.b32.xlu0 %v4082, 32
    %v4324 = vpop.permute.xlu0 %4323
    %4325 = vrot.lane.b32.xlu0 %v4085, 32
    %v4326 = vpop.permute.xlu0 %4325
    %4327 = vrot.lane.b32.xlu0 %v4088, 32
    %v4328 = vpop.permute.xlu0 %4327
    %4329 = vrot.lane.b32.xlu0 %v4311, 32
    %v4330 = vpop.permute.xlu0 %4329
    %4331 = vrot.lane.b32.xlu0 %v4094, 32
    %v4332 = vpop.permute.xlu0 %4331
    %4333 = vrot.lane.b32.xlu0 %v4097, 32
    %v4334 = vpop.permute.xlu0 %4333
    %4335 = vrot.lane.b32.xlu0 %v4100, 32
    %v4336 = vpop.permute.xlu0 %4335
    %4337 = vrot.lane.b32.xlu0 %v4103, 32
    %v4338 = vpop.permute.xlu0 %4337
    %4339 = vrot.lane.b32.xlu0 %v4106, 32
    %v4340 = vpop.permute.xlu0 %4339
    %4341 = vrot.lane.b32.xlu0 %v4109, 32
    %v4342 = vpop.permute.xlu0 %4341
    %4343 = vrot.lane.b32.xlu0 %v4112, 32
    %v4344 = vpop.permute.xlu0 %4343
    %4345 = vrot.lane.b32.xlu0 %v4314, 32
    %v4346 = vpop.permute.xlu0 %4345
    %v4363 = vrot.slane %v4009, 2
    %v4364 = vrot.slane %v4010, 2
    %v4365 = vsel %vm825, %v4363, %v4364
    %v4366 = vrot.slane %v4029, 2
    %v4367 = vrot.slane %v4030, 2
    %v4368 = vsel %vm825, %v4366, %v4367
    %4369 = vrot.lane.b32.xlu0 %v4166, 40
    %v4370 = vpop.permute.xlu0 %4369
    %4371 = vrot.lane.b32.xlu0 %v4169, 40
    %v4372 = vpop.permute.xlu0 %4371
    %4373 = vrot.lane.b32.xlu0 %v4172, 40
    %v4374 = vpop.permute.xlu0 %4373
    %4375 = vrot.lane.b32.xlu0 %v4175, 40
    %v4376 = vpop.permute.xlu0 %4375
    %4377 = vrot.lane.b32.xlu0 %v4178, 40
    %v4378 = vpop.permute.xlu0 %4377
    %4379 = vrot.lane.b32.xlu0 %v4181, 40
    %v4380 = vpop.permute.xlu0 %4379
    %4381 = vrot.lane.b32.xlu0 %v4184, 40
    %v4382 = vpop.permute.xlu0 %4381
    %4383 = vrot.lane.b32.xlu0 %v4365, 40
    %v4384 = vpop.permute.xlu0 %4383
    %4385 = vrot.lane.b32.xlu0 %v4190, 40
    %v4386 = vpop.permute.xlu0 %4385
    %4387 = vrot.lane.b32.xlu0 %v4193, 40
    %v4388 = vpop.permute.xlu0 %4387
    %4389 = vrot.lane.b32.xlu0 %v4196, 40
    %v4390 = vpop.permute.xlu0 %4389
    %4391 = vrot.lane.b32.xlu0 %v4199, 40
    %v4392 = vpop.permute.xlu0 %4391
    %4393 = vrot.lane.b32.xlu0 %v4202, 40
    %v4394 = vpop.permute.xlu0 %4393
    %4395 = vrot.lane.b32.xlu0 %v4205, 40
    %v4396 = vpop.permute.xlu0 %4395
    %4397 = vrot.lane.b32.xlu0 %v4208, 40
    %v4398 = vpop.permute.xlu0 %4397
    %4399 = vrot.lane.b32.xlu0 %v4368, 40
    %v4400 = vpop.permute.xlu0 %4399
    %4419 = vrot.lane.b32.xlu0 %v3997, 48
    %v4420 = vpop.permute.xlu0 %4419
    %4421 = vrot.lane.b32.xlu0 %v3999, 48
    %v4422 = vpop.permute.xlu0 %4421
    %4423 = vrot.lane.b32.xlu0 %v4001, 48
    %v4424 = vpop.permute.xlu0 %4423
    %4425 = vrot.lane.b32.xlu0 %v4003, 48
    %v4426 = vpop.permute.xlu0 %4425
    %4427 = vrot.lane.b32.xlu0 %v4005, 48
    %v4428 = vpop.permute.xlu0 %4427
    %4429 = vrot.lane.b32.xlu0 %v4007, 48
    %v4430 = vpop.permute.xlu0 %4429
    %4431 = vrot.lane.b32.xlu0 %v4009, 48
    %v4432 = vpop.permute.xlu0 %4431
    %4433 = vrot.lane.b32.xlu0 %v4011, 48
    %v4434 = vpop.permute.xlu0 %4433
    %4435 = vrot.lane.b32.xlu0 %v4017, 48
    %v4436 = vpop.permute.xlu0 %4435
    %4437 = vrot.lane.b32.xlu0 %v4019, 48
    %v4438 = vpop.permute.xlu0 %4437
    %4439 = vrot.lane.b32.xlu0 %v4021, 48
    %v4440 = vpop.permute.xlu0 %4439
    %4441 = vrot.lane.b32.xlu0 %v4023, 48
    %v4442 = vpop.permute.xlu0 %4441
    %4443 = vrot.lane.b32.xlu0 %v4025, 48
    %v4444 = vpop.permute.xlu0 %4443
    %4445 = vrot.lane.b32.xlu0 %v4027, 48
    %v4446 = vpop.permute.xlu0 %4445
    %4447 = vrot.lane.b32.xlu0 %v4029, 48
    %v4448 = vpop.permute.xlu0 %4447
    %4449 = vrot.lane.b32.xlu0 %v4031, 48
    %v4450 = vpop.permute.xlu0 %4449
    %v4469 = vrot.slane %v4011, 1
    %v4470 = vrot.slane %v4012, 1
    %v4471 = vsel %vm472, %v4469, %v4470
    %v4472 = vrot.slane %v4031, 1
    %v4473 = vrot.slane %v4032, 1
    %v4474 = vsel %vm472, %v4472, %v4473
    %4475 = vrot.lane.b32.xlu0 %v4073, 56
    %v4476 = vpop.permute.xlu0 %4475
    %4477 = vrot.lane.b32.xlu0 %v4076, 56
    %v4478 = vpop.permute.xlu0 %4477
    %4479 = vrot.lane.b32.xlu0 %v4079, 56
    %v4480 = vpop.permute.xlu0 %4479
    %4481 = vrot.lane.b32.xlu0 %v4082, 56
    %v4482 = vpop.permute.xlu0 %4481
    %4483 = vrot.lane.b32.xlu0 %v4085, 56
    %v4484 = vpop.permute.xlu0 %4483
    %4485 = vrot.lane.b32.xlu0 %v4088, 56
    %v4486 = vpop.permute.xlu0 %4485
    %4487 = vrot.lane.b32.xlu0 %v4311, 56
    %v4488 = vpop.permute.xlu0 %4487
    %4489 = vrot.lane.b32.xlu0 %v4471, 56
    %v4490 = vpop.permute.xlu0 %4489
    %4491 = vrot.lane.b32.xlu0 %v4097, 56
    %v4492 = vpop.permute.xlu0 %4491
    %4493 = vrot.lane.b32.xlu0 %v4100, 56
    %v4494 = vpop.permute.xlu0 %4493
    %4495 = vrot.lane.b32.xlu0 %v4103, 56
    %v4496 = vpop.permute.xlu0 %4495
    %4497 = vrot.lane.b32.xlu0 %v4106, 56
    %v4498 = vpop.permute.xlu0 %4497
    %4499 = vrot.lane.b32.xlu0 %v4109, 56
    %v4500 = vpop.permute.xlu0 %4499
    %4501 = vrot.lane.b32.xlu0 %v4112, 56
    %v4502 = vpop.permute.xlu0 %4501
    %4503 = vrot.lane.b32.xlu0 %v4314, 56
    %v4504 = vpop.permute.xlu0 %4503
    %4505 = vrot.lane.b32.xlu0 %v4474, 56
    %v4506 = vpop.permute.xlu0 %4505
    %v4523 = vrot.slane %v4011, 2
    %v4524 = vrot.slane %v4012, 2
    %v4525 = vsel %vm825, %v4523, %v4524
    %v4526 = vrot.slane %v4031, 2
    %v4527 = vrot.slane %v4032, 2
    %v4528 = vsel %vm825, %v4526, %v4527
    %4529 = vrot.lane.b32.xlu0 %v4169, 64
    %v4530 = vpop.permute.xlu0 %4529
    %4531 = vrot.lane.b32.xlu0 %v4172, 64
    %v4532 = vpop.permute.xlu0 %4531
    %4533 = vrot.lane.b32.xlu0 %v4175, 64
    %v4534 = vpop.permute.xlu0 %4533
    %4535 = vrot.lane.b32.xlu0 %v4178, 64
    %v4536 = vpop.permute.xlu0 %4535
    %4537 = vrot.lane.b32.xlu0 %v4181, 64
    %v4538 = vpop.permute.xlu0 %4537
    %4539 = vrot.lane.b32.xlu0 %v4184, 64
    %v4540 = vpop.permute.xlu0 %4539
    %4541 = vrot.lane.b32.xlu0 %v4365, 64
    %v4542 = vpop.permute.xlu0 %4541
    %4543 = vrot.lane.b32.xlu0 %v4525, 64
    %v4544 = vpop.permute.xlu0 %4543
    %4545 = vrot.lane.b32.xlu0 %v4193, 64
    %v4546 = vpop.permute.xlu0 %4545
    %4547 = vrot.lane.b32.xlu0 %v4196, 64
    %v4548 = vpop.permute.xlu0 %4547
    %4549 = vrot.lane.b32.xlu0 %v4199, 64
    %v4550 = vpop.permute.xlu0 %4549
    %4551 = vrot.lane.b32.xlu0 %v4202, 64
    %v4552 = vpop.permute.xlu0 %4551
    %4553 = vrot.lane.b32.xlu0 %v4205, 64
    %v4554 = vpop.permute.xlu0 %4553
    %4555 = vrot.lane.b32.xlu0 %v4208, 64
    %v4556 = vpop.permute.xlu0 %4555
    %4557 = vrot.lane.b32.xlu0 %v4368, 64
    %v4558 = vpop.permute.xlu0 %4557
    %4559 = vrot.lane.b32.xlu0 %v4528, 64
    %v4560 = vpop.permute.xlu0 %4559
    %v4577 = vsel %vm2446, %v3993, %v4114
    %v4578 = vsel %vm2446, %v3995, %v4116
    %v4579 = vsel %vm2446, %v3997, %v4118
    %v4580 = vsel %vm2446, %v3999, %v4120
    %v4581 = vsel %vm2446, %v4001, %v4122
    %v4582 = vsel %vm2446, %v4003, %v4124
    %v4583 = vsel %vm2446, %v4005, %v4126
    %v4584 = vsel %vm2446, %v4007, %v4128
    %v4585 = vsel %vm2446, %v4013, %v4130
    %v4586 = vsel %vm2446, %v4015, %v4132
    %v4587 = vsel %vm2446, %v4017, %v4134
    %v4588 = vsel %vm2446, %v4019, %v4136
    %v4589 = vsel %vm2446, %v4021, %v4138
    %v4590 = vsel %vm2446, %v4023, %v4140
    %v4591 = vsel %vm2446, %v4025, %v4142
    %v4592 = vsel %vm2446, %v4027, %v4144
    %v4593 = vsel %vm2576, %v4577, %v4210
    %v4594 = vsel %vm2576, %v4578, %v4212
    %v4595 = vsel %vm2576, %v4579, %v4214
    %v4596 = vsel %vm2576, %v4580, %v4216
    %v4597 = vsel %vm2576, %v4581, %v4218
    %v4598 = vsel %vm2576, %v4582, %v4220
    %v4599 = vsel %vm2576, %v4583, %v4222
    %v4600 = vsel %vm2576, %v4584, %v4224
    %v4601 = vsel %vm2576, %v4585, %v4226
    %v4602 = vsel %vm2576, %v4586, %v4228
    %v4603 = vsel %vm2576, %v4587, %v4230
    %v4604 = vsel %vm2576, %v4588, %v4232
    %v4605 = vsel %vm2576, %v4589, %v4234
    %v4606 = vsel %vm2576, %v4590, %v4236
    %v4607 = vsel %vm2576, %v4591, %v4238
    %v4608 = vsel %vm2576, %v4592, %v4240
    %v4609 = vsel %vm2706, %v4593, %v4260
    %v4610 = vsel %vm2706, %v4594, %v4262
    %v4611 = vsel %vm2706, %v4595, %v4264
    %v4612 = vsel %vm2706, %v4596, %v4266
    %v4613 = vsel %vm2706, %v4597, %v4268
    %v4614 = vsel %vm2706, %v4598, %v4270
    %v4615 = vsel %vm2706, %v4599, %v4272
    %v4616 = vsel %vm2706, %v4600, %v4274
    %v4617 = vsel %vm2706, %v4601, %v4276
    %v4618 = vsel %vm2706, %v4602, %v4278
    %v4619 = vsel %vm2706, %v4603, %v4280
    %v4620 = vsel %vm2706, %v4604, %v4282
    %v4621 = vsel %vm2706, %v4605, %v4284
    %v4622 = vsel %vm2706, %v4606, %v4286
    %v4623 = vsel %vm2706, %v4607, %v4288
    %v4624 = vsel %vm2706, %v4608, %v4290
    %v4625 = vsel %vm2836, %v4609, %v4316
    %v4626 = vsel %vm2836, %v4610, %v4318
    %v4627 = vsel %vm2836, %v4611, %v4320
    %v4628 = vsel %vm2836, %v4612, %v4322
    %v4629 = vsel %vm2836, %v4613, %v4324
    %v4630 = vsel %vm2836, %v4614, %v4326
    %v4631 = vsel %vm2836, %v4615, %v4328
    %v4632 = vsel %vm2836, %v4616, %v4330
    %v4633 = vsel %vm2836, %v4617, %v4332
    %v4634 = vsel %vm2836, %v4618, %v4334
    %v4635 = vsel %vm2836, %v4619, %v4336
    %v4636 = vsel %vm2836, %v4620, %v4338
    %v4637 = vsel %vm2836, %v4621, %v4340
    %v4638 = vsel %vm2836, %v4622, %v4342
    %v4639 = vsel %vm2836, %v4623, %v4344
    %v4640 = vsel %vm2836, %v4624, %v4346
    %vm4641 = vcmask 326656
    %v4642 = vsel %vm4641, %v4625, %v4370
    %v4643 = vsel %vm4641, %v4626, %v4372
    %v4644 = vsel %vm4641, %v4627, %v4374
    %v4645 = vsel %vm4641, %v4628, %v4376
    %v4646 = vsel %vm4641, %v4629, %v4378
    %v4647 = vsel %vm4641, %v4630, %v4380
    %v4648 = vsel %vm4641, %v4631, %v4382
    %v4649 = vsel %vm4641, %v4632, %v4384
    %v4650 = vsel %vm4641, %v4633, %v4386
    %v4651 = vsel %vm4641, %v4634, %v4388
    %v4652 = vsel %vm4641, %v4635, %v4390
    %v4653 = vsel %vm4641, %v4636, %v4392
    %v4654 = vsel %vm4641, %v4637, %v4394
    %v4655 = vsel %vm4641, %v4638, %v4396
    %v4656 = vsel %vm4641, %v4639, %v4398
    %v4657 = vsel %vm4641, %v4640, %v4400
    %vm4658 = vcmask 392192
    %v4659 = vsel %vm4658, %v4642, %v4420
    %v4660 = vsel %vm4658, %v4643, %v4422
    %v4661 = vsel %vm4658, %v4644, %v4424
    %v4662 = vsel %vm4658, %v4645, %v4426
    %v4663 = vsel %vm4658, %v4646, %v4428
    %v4664 = vsel %vm4658, %v4647, %v4430
    %v4665 = vsel %vm4658, %v4648, %v4432
    %v4666 = vsel %vm4658, %v4649, %v4434
    %v4667 = vsel %vm4658, %v4650, %v4436
    %v4668 = vsel %vm4658, %v4651, %v4438
    %v4669 = vsel %vm4658, %v4652, %v4440
    %v4670 = vsel %vm4658, %v4653, %v4442
    %v4671 = vsel %vm4658, %v4654, %v4444
    %v4672 = vsel %vm4658, %v4655, %v4446
    %v4673 = vsel %vm4658, %v4656, %v4448
    %v4674 = vsel %vm4658, %v4657, %v4450
    %vm4675 = vcmask 457728
    %v4676 = vsel %vm4675, %v4659, %v4476
    %v4677 = vsel %vm4675, %v4660, %v4478
    %v4678 = vsel %vm4675, %v4661, %v4480
    %v4679 = vsel %vm4675, %v4662, %v4482
    %v4680 = vsel %vm4675, %v4663, %v4484
    %v4681 = vsel %vm4675, %v4664, %v4486
    %v4682 = vsel %vm4675, %v4665, %v4488
    %v4683 = vsel %vm4675, %v4666, %v4490
    %v4684 = vsel %vm4675, %v4667, %v4492
    %v4685 = vsel %vm4675, %v4668, %v4494
    %v4686 = vsel %vm4675, %v4669, %v4496
    %v4687 = vsel %vm4675, %v4670, %v4498
    %v4688 = vsel %vm4675, %v4671, %v4500
    %v4689 = vsel %vm4675, %v4672, %v4502
    %v4690 = vsel %vm4675, %v4673, %v4504
    %v4691 = vsel %vm4675, %v4674, %v4506
    %vm4692 = vcmask 523264
    %v4693 = vsel %vm4692, %v4676, %v4530
    %v4694 = vsel %vm4692, %v4677, %v4532
    %v4695 = vsel %vm4692, %v4678, %v4534
    %v4696 = vsel %vm4692, %v4679, %v4536
    %v4697 = vsel %vm4692, %v4680, %v4538
    %v4698 = vsel %vm4692, %v4681, %v4540
    %v4699 = vsel %vm4692, %v4682, %v4542
    %v4700 = vsel %vm4692, %v4683, %v4544
    %v4701 = vsel %vm4692, %v4684, %v4546
    %v4702 = vsel %vm4692, %v4685, %v4548
    %v4703 = vsel %vm4692, %v4686, %v4550
    %v4704 = vsel %vm4692, %v4687, %v4552
    %v4705 = vsel %vm4692, %v4688, %v4554
    %v4706 = vsel %vm4692, %v4689, %v4556
    %v4707 = vsel %vm4692, %v4690, %v4558
    %v4708 = vsel %vm4692, %v4691, %v4560
    %v4710 = vlaneseq
    %v4711 = vshrl.u32 %v4710, 7
    %v4712 = vsub.s32 0, %v4711
    %v4713 = vrot.slane %v3934, %v4712
    %vm4715 = vcmask 588800
    %v4717 = vsel %vm4715, %v4693, 0
    %v4720 = vsel %vm4715, %v4694, 0
    %v4723 = vsel %vm4715, %v4695, 0
    %v4726 = vsel %vm4715, %v4696, 0
    %v4729 = vsel %vm4715, %v4697, 0
    %v4732 = vsel %vm4715, %v4698, 0
    %v4735 = vsel %vm4715, %v4699, 0
    %v4738 = vsel %vm4715, %v4700, 0
    %v4741 = vsel %vm4715, %v4701, 0
    %v4744 = vsel %vm4715, %v4702, 0
    %v4747 = vsel %vm4715, %v4703, 0
    %v4750 = vsel %vm4715, %v4704, 0
    %v4753 = vsel %vm4715, %v4705, 0
    %v4756 = vsel %vm4715, %v4706, 0
    %v4759 = vsel %vm4715, %v4707, 0
    %v4762 = vsel %vm4715, %v4708, 0
    %4764 = vmatprep.subr.mxu0 0.0
    %4765 = vmatpush1.msra.mxu0 %v3925
    %4766 = vmatprep.subr.mxu0 0.0
    %4767 = vmatpush1.msra.mxu0 %v3926
    %4768 = vmatprep.subr.mxu0 0.0
    %4769 = vmatpush1.msra.mxu0 %v3927
    %4770 = vmatprep.subr.mxu0 0.0
    %4771 = vmatpush1.msra.mxu0 %v3928
    %4772 = vmatprep.subr.mxu0 0.0
    %4773 = vmatpush1.msra.mxu0 %v3929
    %4774 = vmatprep.subr.mxu0 0.0
    %4775 = vmatpush1.msra.mxu0 %v3930
    %4776 = vmatprep.subr.mxu0 0.0
    %4777 = vmatpush1.msra.mxu0 %v3931
    %4778 = vmatprep.subr.mxu0 0.0
    %4779 = vmatpush1.msra.mxu0 %v3932
    %4780 = vmatprep.subr.mxu0 0.0
    %4781 = vmatpush1.msra.mxu0 %v3933
    %4782 = vmatprep.subr.mxu0 0.0
    %4783 = vmatpush1.msra.mxu0 0.0
    %4784 = vmatprep.subr.mxu0 0.0
    %4785 = vmatpush1.msra.mxu0 0.0
    %4786 = vmatprep.subr.mxu0 0.0
    %4787 = vmatpush1.msra.mxu0 0.0
    %4788 = vmatprep.subr.mxu0 0.0
    %4789 = vmatpush1.msra.mxu0 0.0
    %4790 = vmatprep.subr.mxu0 0.0
    %4791 = vmatpush1.msra.mxu0 0.0
    %4792 = vmatprep.subr.mxu0 0.0
    %4793 = vmatpush1.msra.mxu0 0.0
    %4794 = vmatprep.subr.mxu0 0.0
    %4795 = vmatpush1.msra.mxu0 0.0
    %4796 = vmatprep.subr.mxu0 0.0
    %4797 = vmatpush1.msra.mxu0 0.0
    %4798 = vmatprep.subr.mxu0 0.0
    %4799 = vmatpush1.msra.mxu0 0.0
    %4800 = vmatprep.subr.mxu0 0.0
    %4801 = vmatpush1.msra.mxu0 0.0
    %4802 = vmatprep.subr.mxu0 0.0
    %4803 = vmatpush1.msra.mxu0 0.0
    %4804 = vmatprep.subr.mxu0 0.0
    %4805 = vmatpush1.msra.mxu0 0.0
    %4806 = vmatprep.subr.mxu0 0.0
    %4807 = vmatpush1.msra.mxu0 0.0
    %4808 = vmatprep.subr.mxu0 0.0
    %4809 = vmatpush1.msra.mxu0 0.0
    %4810 = vmatprep.subr.mxu0 0.0
    %4811 = vmatpush1.msra.mxu0 0.0
    %4812 = vmatprep.subr.mxu0 0.0
    %4813 = vmatpush1.msra.mxu0 0.0
    %4814 = vmatprep.subr.mxu0 0.0
    %4815 = vmatpush1.msra.mxu0 0.0
    %4816 = vmatprep.subr.mxu0 0.0
    %4817 = vmatpush1.msra.mxu0 0.0
    %4818 = vmatprep.subr.mxu0 0.0
    %4819 = vmatpush1.msra.mxu0 0.0
    %4820 = vmatprep.subr.mxu0 0.0
    %4821 = vmatpush1.msra.mxu0 0.0
    %4822 = vmatprep.subr.mxu0 0.0
    %4823 = vmatpush1.msra.mxu0 0.0
    %4824 = vmatprep.subr.mxu0 0.0
    %4825 = vmatpush1.msra.mxu0 0.0
    %4826 = vmatprep.subr.mxu0 0.0
    %4827 = vmatpush1.msra.mxu0 0.0
    %4828 = vmatprep.mubr.f32.mxu0 0.0
    %4829 = vmatmul.mubr.f32.gmra.mrb[0].mxu0 %v4717
    %v4830 = vpop.f32.mrb[0].mxu0
    %v4831 = vadd.f32 %v4713, %v4830
    %v4832 = vpop.f32.mrb[0].mxu0
    %4833 = vmatprep.mubr.f32.mxu0 0.0
    %4834 = vmatmul.mubr.f32.gmra.mrb[0].mxu0 %v4720
    %v4835 = vpop.f32.mrb[0].mxu0
    %v4836 = vadd.f32 %v4713, %v4835
    %v4837 = vpop.f32.mrb[0].mxu0
    %4838 = vmatprep.mubr.f32.mxu0 0.0
    %4839 = vmatmul.mubr.f32.gmra.mrb[0].mxu0 %v4723
    %v4840 = vpop.f32.mrb[0].mxu0
    %v4841 = vadd.f32 %v4713, %v4840
    %v4842 = vpop.f32.mrb[0].mxu0
    %4843 = vmatprep.mubr.f32.mxu0 0.0
    %4844 = vmatmul.mubr.f32.gmra.mrb[0].mxu0 %v4726
    %v4845 = vpop.f32.mrb[0].mxu0
    %v4846 = vadd.f32 %v4713, %v4845
    %v4847 = vpop.f32.mrb[0].mxu0
    %4848 = vmatprep.mubr.f32.mxu0 0.0
    %4849 = vmatmul.mubr.f32.gmra.mrb[0].mxu0 %v4729
    %v4850 = vpop.f32.mrb[0].mxu0
    %v4851 = vadd.f32 %v4713, %v4850
    %v4852 = vpop.f32.mrb[0].mxu0
    %4853 = vmatprep.mubr.f32.mxu0 0.0
    %4854 = vmatmul.mubr.f32.gmra.mrb[0].mxu0 %v4732
    %v4855 = vpop.f32.mrb[0].mxu0
    %v4856 = vadd.f32 %v4713, %v4855
    %v4857 = vpop.f32.mrb[0].mxu0
    %4858 = vmatprep.mubr.f32.mxu0 0.0
    %4859 = vmatmul.mubr.f32.gmra.mrb[0].mxu0 %v4735
    %v4860 = vpop.f32.mrb[0].mxu0
    %v4861 = vadd.f32 %v4713, %v4860
    %v4862 = vpop.f32.mrb[0].mxu0
    %4863 = vmatprep.mubr.f32.mxu0 0.0
    %4864 = vmatmul.mubr.f32.gmra.mrb[0].mxu0 %v4738
    %v4865 = vpop.f32.mrb[0].mxu0
    %v4866 = vadd.f32 %v4713, %v4865
    %v4867 = vpop.f32.mrb[0].mxu0
    %4868 = vmatprep.mubr.f32.mxu0 0.0
    %4869 = vmatmul.mubr.f32.gmra.mrb[0].mxu0 %v4741
    %v4870 = vpop.f32.mrb[0].mxu0
    %v4871 = vadd.f32 %v4713, %v4870
    %v4872 = vpop.f32.mrb[0].mxu0
    %4873 = vmatprep.mubr.f32.mxu0 0.0
    %4874 = vmatmul.mubr.f32.gmra.mrb[0].mxu0 %v4744
    %v4875 = vpop.f32.mrb[0].mxu0
    %v4876 = vadd.f32 %v4713, %v4875
    %v4877 = vpop.f32.mrb[0].mxu0
    %4878 = vmatprep.mubr.f32.mxu0 0.0
    %4879 = vmatmul.mubr.f32.gmra.mrb[0].mxu0 %v4747
    %v4880 = vpop.f32.mrb[0].mxu0
    %v4881 = vadd.f32 %v4713, %v4880
    %v4882 = vpop.f32.mrb[0].mxu0
    %4883 = vmatprep.mubr.f32.mxu0 0.0
    %4884 = vmatmul.mubr.f32.gmra.mrb[0].mxu0 %v4750
    %v4885 = vpop.f32.mrb[0].mxu0
    %v4886 = vadd.f32 %v4713, %v4885
    %v4887 = vpop.f32.mrb[0].mxu0
    %4888 = vmatprep.mubr.f32.mxu0 0.0
    %4889 = vmatmul.mubr.f32.gmra.mrb[0].mxu0 %v4753
    %v4890 = vpop.f32.mrb[0].mxu0
    %v4891 = vadd.f32 %v4713, %v4890
    %v4892 = vpop.f32.mrb[0].mxu0
    %4893 = vmatprep.mubr.f32.mxu0 0.0
    %4894 = vmatmul.mubr.f32.gmra.mrb[0].mxu0 %v4756
    %v4895 = vpop.f32.mrb[0].mxu0
    %v4896 = vadd.f32 %v4713, %v4895
    %v4897 = vpop.f32.mrb[0].mxu0
    %4898 = vmatprep.mubr.f32.mxu0 0.0
    %4899 = vmatmul.mubr.f32.gmra.mrb[0].mxu0 %v4759
    %v4900 = vpop.f32.mrb[0].mxu0
    %v4901 = vadd.f32 %v4713, %v4900
    %v4902 = vpop.f32.mrb[0].mxu0
    %4903 = vmatprep.mubr.f32.mxu0 0.0
    %4904 = vmatmul.mubr.f32.gmra.mrb[0].mxu0 %v4762
    %v4905 = vpop.f32.mrb[0].mxu0
    %v4906 = vadd.f32 %v4713, %v4905
    %v4907 = vpop.f32.mrb[0].mxu0
    %4908 = vdwg.mxu0
    %v4909 = vmax.f32 %v4831, 0.0
    %v4910 = vmax.f32 %v4836, 0.0
    %v4911 = vmax.f32 %v4841, 0.0
    %v4912 = vmax.f32 %v4846, 0.0
    %v4913 = vmax.f32 %v4851, 0.0
    %v4914 = vmax.f32 %v4856, 0.0
    %v4915 = vmax.f32 %v4861, 0.0
    %v4916 = vmax.f32 %v4866, 0.0
    %v4917 = vmax.f32 %v4871, 0.0
    %v4918 = vmax.f32 %v4876, 0.0
    %v4919 = vmax.f32 %v4881, 0.0
    %v4920 = vmax.f32 %v4886, 0.0
    %v4921 = vmax.f32 %v4891, 0.0
    %v4922 = vmax.f32 %v4896, 0.0
    %v4923 = vmax.f32 %v4901, 0.0
    %v4924 = vmax.f32 %v4906, 0.0
    %v4925 = vmax.f32 %v4909, %v4910
    %v4926 = vmax.f32 %v4911, %v4912
    %v4927 = vmax.f32 %v4913, %v4914
    %v4928 = vmax.f32 %v4915, %v4916
    %v4929 = vmax.f32 %v4917, %v4918
    %v4930 = vmax.f32 %v4919, %v4920
    %v4931 = vmax.f32 %v4921, %v4922
    %v4932 = vmax.f32 %v4923, %v4924
    %v4941 = vrot.slane %v4925, 1
    %v4942 = vrot.slane %v4926, 1
    %v4943 = vrot.slane %v4927, 1
    %v4944 = vrot.slane %v4928, 1
    %v4945 = vrot.slane %v4929, 1
    %v4946 = vrot.slane %v4930, 1
    %v4947 = vrot.slane %v4931, 1
    %v4948 = vrot.slane %v4932, 1
    %v4957 = vmax.f32 %v4925, %v4941
    %v4958 = vmax.f32 %v4926, %v4942
    %v4959 = vmax.f32 %v4927, %v4943
    %v4960 = vmax.f32 %v4928, %v4944
    %v4961 = vmax.f32 %v4929, %v4945
    %v4962 = vmax.f32 %v4930, %v4946
    %v4963 = vmax.f32 %v4931, %v4947
    %v4964 = vmax.f32 %v4932, %v4948
    %vm4965 = vcmask 122880
    %4966 = vst.msk [vmem:[#allocation5] sm:$0x1] %vm4965, %v4957
    %4967 = vst.msk [vmem:[#allocation5 + $0x4] sm:$0x1] %vm4965, %v4958
    %4968 = vst.msk [vmem:[#allocation5 + $0x8] sm:$0x1] %vm4965, %v4959
    %4969 = vst.msk [vmem:[#allocation5 + $0xc] sm:$0x1] %vm4965, %v4960
    %4970 = vst.msk [vmem:[#allocation5 + $0x10] sm:$0x1] %vm4965, %v4961
    %4971 = vst.msk [vmem:[#allocation5 + $0x14] sm:$0x1] %vm4965, %v4962
    %4972 = vst.msk [vmem:[#allocation5 + $0x18] sm:$0x1] %vm4965, %v4963
    %4973 = vst.msk [vmem:[#allocation5 + $0x1c] sm:$0x1] %vm4965, %v4964
    %vm4974 = vcmask 124930
    %4975 = vst.msk [vmem:[#allocation5 - $0x1] sm:$0x4] %vm4974, %v4957
    %4976 = vst.msk [vmem:[#allocation5 + $0x3] sm:$0x4] %vm4974, %v4958
    %4977 = vst.msk [vmem:[#allocation5 + $0x7] sm:$0x4] %vm4974, %v4959
    %4978 = vst.msk [vmem:[#allocation5 + $0xb] sm:$0x4] %vm4974, %v4960
    %4979 = vst.msk [vmem:[#allocation5 + $0xf] sm:$0x4] %vm4974, %v4961
    %4980 = vst.msk [vmem:[#allocation5 + $0x13] sm:$0x4] %vm4974, %v4962
    %4981 = vst.msk [vmem:[#allocation5 + $0x17] sm:$0x4] %vm4974, %v4963
    %4982 = vst.msk [vmem:[#allocation5 + $0x1b] sm:$0x4] %vm4974, %v4964
    %vm4983 = vcmask 126980
    %4984 = vst.msk [vmem:[#allocation5 - $0x2] sm:$0x10] %vm4983, %v4957
    %4985 = vst.msk [vmem:[#allocation5 + $0x2] sm:$0x10] %vm4983, %v4958
    %4986 = vst.msk [vmem:[#allocation5 + $0x6] sm:$0x10] %vm4983, %v4959
    %4987 = vst.msk [vmem:[#allocation5 + $0xa] sm:$0x10] %vm4983, %v4960
    %4988 = vst.msk [vmem:[#allocation5 + $0xe] sm:$0x10] %vm4983, %v4961
    %4989 = vst.msk [vmem:[#allocation5 + $0x12] sm:$0x10] %vm4983, %v4962
    %4990 = vst.msk [vmem:[#allocation5 + $0x16] sm:$0x10] %vm4983, %v4963
    %4991 = vst.msk [vmem:[#allocation5 + $0x1a] sm:$0x10] %vm4983, %v4964
    %vm4992 = vcmask 129030
    %4993 = vst.msk [vmem:[#allocation5 - $0x3] sm:$0x40] %vm4992, %v4957
    %4994 = vst.msk [vmem:[#allocation5 + $0x1] sm:$0x40] %vm4992, %v4958
    %4995 = vst.msk [vmem:[#allocation5 + $0x5] sm:$0x40] %vm4992, %v4959
    %4996 = vst.msk [vmem:[#allocation5 + $0x9] sm:$0x40] %vm4992, %v4960
    %4997 = vst.msk [vmem:[#allocation5 + $0xd] sm:$0x40] %vm4992, %v4961
    %4998 = vst.msk [vmem:[#allocation5 + $0x11] sm:$0x40] %vm4992, %v4962
    %4999 = vst.msk [vmem:[#allocation5 + $0x15] sm:$0x40] %vm4992, %v4963
    %5000 = vst.msk [vmem:[#allocation5 + $0x19] sm:$0x40] %vm4992, %v4964
    // Predicated region
    $region22: #{_forward_impl.1} parent=1 // pred_check
      _
    $region23: #{_forward_impl.1} parent=1 // pred_check_branch
      %5002 = sbr.rel (0) target = $region25
    $region24: #{_forward_impl.1} parent=1 // pred_region
      _
    $region25: #{_forward_impl.1} parent=1 // pred_fallthru
      _
    // Predicated region
    $region26: #{_forward_impl.1} parent=1 // pred_check
      _
    $region27: #{_forward_impl.1} parent=1 // pred_check_branch
      %5004 = sbr.rel (0) target = $region29
    $region28: #{_forward_impl.1} parent=1 // pred_region
      %s5006 = ssub.s32 512, 512
      %5007 = vsyncadd [#allocation6], %s5006
      %s5008 = sshll.u32 [#allocation5], 4
      %s5009 = int_to_ptr.vmem [resolvable:$true] %s5008
      %5014 = dma.vmem_to_hbm [thread:$0]  %s5009, 512, %s6, [#allocation6], 64, 64, 4
    $region29: #{_forward_impl.1} parent=1 // pred_fallthru
      _
    // Predicated region
    $region30: #{_forward_impl.1} parent=1 // pred_check
      _
    $region31: #{_forward_impl.1} parent=1 // pred_check_branch
      %5016 = sbr.rel (0) target = $region33
    $region32: #{_forward_impl.1} parent=1 // pred_region
      _
    $region33: #{_forward_impl.1} parent=1 // pred_fallthru
      _
    // Predicated region
    $region34: #{_forward_impl.1} parent=1 // pred_check
      _
    $region35: #{_forward_impl.1} parent=1 // pred_check_branch
      %5018 = sbr.rel (0) target = $region37
    $region36: #{_forward_impl.1} parent=1 // pred_region
      %5019 = dma.done [#allocation6], 512
    $region37: #{_forward_impl.1} parent=1 // pred_fallthru
      _
    %5020 = vsyncpa [#allocation6], 1

</llo_original>
